<compile_context>
chip_gen: v6e
topology: v6e:2x2x1
jax: 0.10.0
libtpu: 0.0.40
codegen_flags: <defaults>
</compile_context>

<pallas_src>
import jax
import jax.numpy as jnp
from jax import lax
from jax.experimental import pallas as pl
from jax.experimental.pallas import tpu as pltpu


# ----------------------------- Pallas kernel --------------------------------

def _cga_kernel(x_ref, w1_ref, b1_ref, w2_ref, b2_ref, t_ref, cb_ref, o_ref):
    """One batch element per grid step, NCHW layout (W on the 128-lane axis).

    x_ref:  (1, C, H, W)  VMEM  input features
    w1_ref: (C, Cr)       VMEM  fc1 weight (stored (in, out))
    b1_ref: (1, Cr)       VMEM  fc1 bias
    w2_ref: (Cr, C)       VMEM  fc2 weight
    b2_ref: (1, C)        VMEM  fc2 bias
    t_ref:  (2, 7, W, W)  VMEM  banded-Toeplitz 7x7 conv taps (avg / max maps)
    cb_ref: (1, 1)        SMEM  conv bias
    o_ref:  (1, C, H, W)  VMEM  output
    """
    C = x_ref.shape[1]
    H = x_ref.shape[2]
    W = x_ref.shape[3]
    f32 = jnp.float32

    # ---- channel attention: global average pool + 2-layer MLP (in-kernel) ---
    # Per-channel pooled scalars built from 2D single-axis reductions only
    # (lane reduce then sublane reduce), assembled into a (1, C) row for the
    # tiny MXU matmuls.  Static unroll over C (C is a compile-time constant).
    pooled_parts = []
    for c in range(C):
        xc = x_ref[0, c].astype(f32)                             # (H, W)
        p_c = jnp.sum(jnp.sum(xc, axis=1, keepdims=True), axis=0, keepdims=True)
        pooled_parts.append(p_c)                                 # (1, 1)
    pooled = jnp.concatenate(pooled_parts, axis=1) * (1.0 / (H * W))   # (1, C)

    h1 = jnp.dot(pooled, w1_ref[...], preferred_element_type=f32) + b1_ref[...]
    h1 = jnp.maximum(h1, 0.0)                                    # (1, Cr)
    gate = jax.nn.sigmoid(
        jnp.dot(h1, w2_ref[...], preferred_element_type=f32) + b2_ref[...])  # (1, C)

    # ---- fused channel mean / max of the gated features (no xc temporary) ---
    ssum = jnp.zeros((H, W), f32)
    smax = jnp.full((H, W), -jnp.inf, f32)
    for c in range(C):
        g_c = gate[:, c:c + 1]                                   # (1, 1) scalar gate
        xg_c = x_ref[0, c].astype(f32) * g_c                     # (H, W)
        ssum = ssum + xg_c
        smax = jnp.maximum(smax, xg_c)
    avg = ssum * (1.0 / C)                                       # (H, W)

    # ---- 7x7 spatial-attention conv as banded-Toeplitz MXU matmuls ----------
    # Rows: explicit 3-row zero pad (sublane-only concat).  Columns: handled by
    # the zero band of T.  acc += pa[ky:ky+H, :] @ T[map, ky]  (14 matmuls).
    zrow = jnp.zeros((3, W), f32)
    pa = jnp.concatenate([zrow, avg, zrow], axis=0)              # (H + 6, W)
    pm = jnp.concatenate([zrow, smax, zrow], axis=0)             # (H + 6, W)

    acc_a = jnp.zeros((H, W), f32)
    acc_m = jnp.zeros((H, W), f32)
    for ky in range(7):
        acc_a = acc_a + jnp.dot(pa[ky:ky + H, :], t_ref[0, ky],
                                preferred_element_type=f32)
        acc_m = acc_m + jnp.dot(pm[ky:ky + H, :], t_ref[1, ky],
                                preferred_element_type=f32)
    s = jax.nn.sigmoid(acc_a + acc_m + cb_ref[0, 0])             # (H, W) spatial gate

    # ---- output: x * channel_gate * spatial_gate, recomputed at store time --
    for c in range(C):
        g_c = gate[:, c:c + 1]                                   # (1, 1)
        o_ref[0, c] = (x_ref[0, c].astype(f32) * (g_c * s)).astype(o_ref.dtype)


# ------------------------------- wrapper -------------------------------------

def _build_toeplitz(cw, W):
    """T[m, ky, j, w] = conv_weight[m, ky, (j - w) + 3] if |j - w| <= 3 else 0.

    Then  (map_padded[ky:ky+H, :] @ T[m, ky])[h, w]
        = sum_dx map[h + ky - 3, w + dx] * weight[m, ky, dx + 3]
    with zero padding in W handled by the zero band.
    """
    cw3 = cw.reshape(2, 7, 7).astype(jnp.float32)
    j = jnp.arange(W)[:, None]
    w = jnp.arange(W)[None, :]
    d = j - w
    band = (d >= -3) & (d <= 3)
    kx = jnp.clip(d + 3, 0, 6)
    return jnp.where(band[None, None], cw3[:, :, kx], 0.0)       # (2, 7, W, W)


def cga_forward(x, params):
    """CGAModule forward.  x: (B, C, H, W) float32 (NCHW, same as PyTorch)."""
    w1, b1, w2, b2, cw, cb = params
    B, C, H, W = x.shape
    Cr = w1.shape[1]

    t_mat = _build_toeplitz(cw, W)                               # (2, 7, W, W)

    # Generation-aware VMEM limit: ~75% of physical per-core VMEM.
    try:
        vmem_cap = int(pltpu.get_tpu_info().vmem_capacity_bytes)
    except Exception:
        vmem_cap = 64 * 1024 * 1024
    itemsize = x.dtype.itemsize
    blk = C * H * W * itemsize
    t_bytes = int(t_mat.size) * 4
    pad_tmp = 8 * (H + 6) * W * 4                                # pa/pm/accs/s temporaries
    need = 4 * blk + 2 * t_bytes + pad_tmp + (4 << 20)           # 2x-buffered in+out, T, slack
    vmem_limit = int(min(max(need, 32 * 1024 * 1024), (vmem_cap * 3) // 4))

    return pl.pallas_call(
        _cga_kernel,
        out_shape=jax.ShapeDtypeStruct((B, C, H, W), x.dtype),
        grid_spec=pltpu.PrefetchScalarGridSpec(
            num_scalar_prefetch=0,
            grid=(B,),
            in_specs=[
                pl.BlockSpec((1, C, H, W), lambda b: (b, 0, 0, 0)),    # x (NCHW, W on lanes)
                pl.BlockSpec((C, Cr), lambda b: (0, 0)),               # fc1 weight
                pl.BlockSpec((1, Cr), lambda b: (0, 0)),               # fc1 bias
                pl.BlockSpec((Cr, C), lambda b: (0, 0)),               # fc2 weight
                pl.BlockSpec((1, C), lambda b: (0, 0)),                # fc2 bias
                pl.BlockSpec((2, 7, W, W), lambda b: (0, 0, 0, 0)),    # Toeplitz conv taps
                pl.BlockSpec(memory_space=pltpu.MemorySpace.SMEM),     # conv bias (1, 1)
            ],
            out_specs=pl.BlockSpec((1, C, H, W), lambda b: (b, 0, 0, 0)),
        ),
        compiler_params=pltpu.CompilerParams(
            dimension_semantics=("parallel",),
            vmem_limit_bytes=vmem_limit,
        ),
    )(x, w1, b1, w2, b2, t_mat, cb)


# ------------------------- pure-JAX reference ---------------------------------

def cga_reference(x, params):
    w1, b1, w2, b2, cw, cb = params
    # channel attention
    pooled = jnp.mean(x, axis=(2, 3))                               # (B, C)
    h1 = jnp.maximum(pooled @ w1 + b1, 0.0)
    y = jax.nn.sigmoid(h1 @ w2 + b2)                                # (B, C)
    xc = x * y[:, :, None, None]
    # spatial attention
    avg = jnp.mean(xc, axis=1, keepdims=True)
    mx = jnp.max(xc, axis=1, keepdims=True)
    inp = jnp.concatenate([avg, mx], axis=1)                        # (B, 2, H, W)
    kernel = cw.reshape(1, 2, 7, 7)
    conv = lax.conv_general_dilated(
        inp, kernel, window_strides=(1, 1), padding=((3, 3), (3, 3)),
        dimension_numbers=("NCHW", "OIHW", "NCHW")) + cb[0, 0]
    return xc * jax.nn.sigmoid(conv)


# --------------------------------- main ----------------------------------------

if __name__ == "__main__":
    # in_channels must be >= 16 (hidden = C // 16); W chosen as a multiple of
    # 128 so the NCHW blocks and the Toeplitz matmuls are lane-dense.
    B, C, H, W = 2, 32, 16, 128
    Cr = C // 16

    key = jax.random.PRNGKey(0)
    kx_, k1, k2, k3, k4, k5, k6 = jax.random.split(key, 7)

    x = jax.random.normal(kx_, (B, C, H, W), jnp.float32)

    # Deterministic parameter init (shapes mirror the PyTorch module).
    w1 = jax.random.normal(k1, (C, Cr), jnp.float32) * 0.2   # Linear(C, C//16), stored (in, out)
    b1 = jax.random.normal(k2, (1, Cr), jnp.float32) * 0.1
    w2 = jax.random.normal(k3, (Cr, C), jnp.float32) * 0.2   # Linear(C//16, C)
    b2 = jax.random.normal(k4, (1, C), jnp.float32) * 0.1
    cw = jax.random.normal(k5, (2, 49), jnp.float32) * 0.1   # Conv2d(2, 1, 7, padding=3) taps
    cb = jax.random.normal(k6, (1, 1), jnp.float32) * 0.1    # conv bias

    params = (w1, b1, w2, b2, cw, cb)

    out = jax.block_until_ready(cga_forward(x, params))
    ref = cga_reference(x, params)

    assert out.shape == (B, C, H, W)
    # Tolerance allows for MXU f32 matmul rounding vs the lax.conv reference.
    assert jnp.allclose(out, ref, rtol=1e-3, atol=2e-3), "mismatch vs reference"

    print("KERNEL_OK")
</pallas_src>

<mosaic_0001>
module attributes {stable_mosaic.version = 11 : i64} {
  func.func @_cga_kernel(%arg0: i32, %arg1: memref<1x32x16x128xf32, #tpu.memory_space<vmem>>, %arg2: memref<32x2xf32, #tpu.memory_space<vmem>>, %arg3: memref<1x2xf32, #tpu.memory_space<vmem>>, %arg4: memref<2x32xf32, #tpu.memory_space<vmem>>, %arg5: memref<1x32xf32, #tpu.memory_space<vmem>>, %arg6: memref<2x7x128x128xf32, #tpu.memory_space<vmem>>, %arg7: memref<1x1xf32, #tpu.memory_space<smem>>, %arg8: memref<1x32x16x128xf32, #tpu.memory_space<vmem>>) attributes {dimension_semantics = [#tpu.dimension_semantics<parallel>], iteration_bounds = array<i64: 2>, scalar_prefetch = 0 : i64, scratch_operands = 0 : i64, tpu.core_type = #tpu.core_type<tc>, window_params = [{transform_indices = @transform_0, window_bounds = array<i64: 1, 32, 16, 128>}, {pipeline_mode = #tpu.pipeline_mode<synchronous>, transform_indices = @transform_1, window_bounds = array<i64: 32, 2>}, {pipeline_mode = #tpu.pipeline_mode<synchronous>, transform_indices = @transform_2, window_bounds = array<i64: 1, 2>}, {pipeline_mode = #tpu.pipeline_mode<synchronous>, transform_indices = @transform_3, window_bounds = array<i64: 2, 32>}, {pipeline_mode = #tpu.pipeline_mode<synchronous>, transform_indices = @transform_4, window_bounds = array<i64: 1, 32>}, {pipeline_mode = #tpu.pipeline_mode<synchronous>, transform_indices = @transform_5, window_bounds = array<i64: 2, 7, 128, 128>}, {transform_indices = @transform_6, window_bounds = array<i64: 1, 1>}, {transform_indices = @transform_7, window_bounds = array<i64: 1, 32, 16, 128>}]} {
    %c0 = arith.constant 0 : index
    %c0_0 = arith.constant 0 : index
    %c0_1 = arith.constant 0 : index
    %c0_2 = arith.constant 0 : index
    %0 = vector.load %arg1[%c0, %c0_0, %c0_1, %c0_2] : memref<1x32x16x128xf32, #tpu.memory_space<vmem>>, vector<1x1x16x128xf32>
    %1 = vector.shape_cast %0 : vector<1x1x16x128xf32> to vector<16x128xf32>
    %cst = arith.constant dense<0.000000e+00> : vector<16xf32>
    %2 = vector.multi_reduction <add>, %1, %cst [1] : vector<16x128xf32> to vector<16xf32>
    %3 = vector.shape_cast %2 : vector<16xf32> to vector<16x1xf32>
    %cst_3 = arith.constant dense<0.000000e+00> : vector<1xf32>
    %4 = vector.multi_reduction <add>, %3, %cst_3 [0] : vector<16x1xf32> to vector<1xf32>
    %5 = vector.shape_cast %4 : vector<1xf32> to vector<1x1xf32>
    %c0_4 = arith.constant 0 : index
    %c1 = arith.constant 1 : index
    %c0_5 = arith.constant 0 : index
    %c0_6 = arith.constant 0 : index
    %6 = vector.load %arg1[%c0_4, %c1, %c0_5, %c0_6] : memref<1x32x16x128xf32, #tpu.memory_space<vmem>>, vector<1x1x16x128xf32>
    %7 = vector.shape_cast %6 : vector<1x1x16x128xf32> to vector<16x128xf32>
    %cst_7 = arith.constant dense<0.000000e+00> : vector<16xf32>
    %8 = vector.multi_reduction <add>, %7, %cst_7 [1] : vector<16x128xf32> to vector<16xf32>
    %9 = vector.shape_cast %8 : vector<16xf32> to vector<16x1xf32>
    %cst_8 = arith.constant dense<0.000000e+00> : vector<1xf32>
    %10 = vector.multi_reduction <add>, %9, %cst_8 [0] : vector<16x1xf32> to vector<1xf32>
    %11 = vector.shape_cast %10 : vector<1xf32> to vector<1x1xf32>
    %c0_9 = arith.constant 0 : index
    %c2 = arith.constant 2 : index
    %c0_10 = arith.constant 0 : index
    %c0_11 = arith.constant 0 : index
    %12 = vector.load %arg1[%c0_9, %c2, %c0_10, %c0_11] : memref<1x32x16x128xf32, #tpu.memory_space<vmem>>, vector<1x1x16x128xf32>
    %13 = vector.shape_cast %12 : vector<1x1x16x128xf32> to vector<16x128xf32>
    %cst_12 = arith.constant dense<0.000000e+00> : vector<16xf32>
    %14 = vector.multi_reduction <add>, %13, %cst_12 [1] : vector<16x128xf32> to vector<16xf32>
    %15 = vector.shape_cast %14 : vector<16xf32> to vector<16x1xf32>
    %cst_13 = arith.constant dense<0.000000e+00> : vector<1xf32>
    %16 = vector.multi_reduction <add>, %15, %cst_13 [0] : vector<16x1xf32> to vector<1xf32>
    %17 = vector.shape_cast %16 : vector<1xf32> to vector<1x1xf32>
    %c0_14 = arith.constant 0 : index
    %c3 = arith.constant 3 : index
    %c0_15 = arith.constant 0 : index
    %c0_16 = arith.constant 0 : index
    %18 = vector.load %arg1[%c0_14, %c3, %c0_15, %c0_16] : memref<1x32x16x128xf32, #tpu.memory_space<vmem>>, vector<1x1x16x128xf32>
    %19 = vector.shape_cast %18 : vector<1x1x16x128xf32> to vector<16x128xf32>
    %cst_17 = arith.constant dense<0.000000e+00> : vector<16xf32>
    %20 = vector.multi_reduction <add>, %19, %cst_17 [1] : vector<16x128xf32> to vector<16xf32>
    %21 = vector.shape_cast %20 : vector<16xf32> to vector<16x1xf32>
    %cst_18 = arith.constant dense<0.000000e+00> : vector<1xf32>
    %22 = vector.multi_reduction <add>, %21, %cst_18 [0] : vector<16x1xf32> to vector<1xf32>
    %23 = vector.shape_cast %22 : vector<1xf32> to vector<1x1xf32>
    %c0_19 = arith.constant 0 : index
    %c4 = arith.constant 4 : index
    %c0_20 = arith.constant 0 : index
    %c0_21 = arith.constant 0 : index
    %24 = vector.load %arg1[%c0_19, %c4, %c0_20, %c0_21] : memref<1x32x16x128xf32, #tpu.memory_space<vmem>>, vector<1x1x16x128xf32>
    %25 = vector.shape_cast %24 : vector<1x1x16x128xf32> to vector<16x128xf32>
    %cst_22 = arith.constant dense<0.000000e+00> : vector<16xf32>
    %26 = vector.multi_reduction <add>, %25, %cst_22 [1] : vector<16x128xf32> to vector<16xf32>
    %27 = vector.shape_cast %26 : vector<16xf32> to vector<16x1xf32>
    %cst_23 = arith.constant dense<0.000000e+00> : vector<1xf32>
    %28 = vector.multi_reduction <add>, %27, %cst_23 [0] : vector<16x1xf32> to vector<1xf32>
    %29 = vector.shape_cast %28 : vector<1xf32> to vector<1x1xf32>
    %c0_24 = arith.constant 0 : index
    %c5 = arith.constant 5 : index
    %c0_25 = arith.constant 0 : index
    %c0_26 = arith.constant 0 : index
    %30 = vector.load %arg1[%c0_24, %c5, %c0_25, %c0_26] : memref<1x32x16x128xf32, #tpu.memory_space<vmem>>, vector<1x1x16x128xf32>
    %31 = vector.shape_cast %30 : vector<1x1x16x128xf32> to vector<16x128xf32>
    %cst_27 = arith.constant dense<0.000000e+00> : vector<16xf32>
    %32 = vector.multi_reduction <add>, %31, %cst_27 [1] : vector<16x128xf32> to vector<16xf32>
    %33 = vector.shape_cast %32 : vector<16xf32> to vector<16x1xf32>
    %cst_28 = arith.constant dense<0.000000e+00> : vector<1xf32>
    %34 = vector.multi_reduction <add>, %33, %cst_28 [0] : vector<16x1xf32> to vector<1xf32>
    %35 = vector.shape_cast %34 : vector<1xf32> to vector<1x1xf32>
    %c0_29 = arith.constant 0 : index
    %c6 = arith.constant 6 : index
    %c0_30 = arith.constant 0 : index
    %c0_31 = arith.constant 0 : index
    %36 = vector.load %arg1[%c0_29, %c6, %c0_30, %c0_31] : memref<1x32x16x128xf32, #tpu.memory_space<vmem>>, vector<1x1x16x128xf32>
    %37 = vector.shape_cast %36 : vector<1x1x16x128xf32> to vector<16x128xf32>
    %cst_32 = arith.constant dense<0.000000e+00> : vector<16xf32>
    %38 = vector.multi_reduction <add>, %37, %cst_32 [1] : vector<16x128xf32> to vector<16xf32>
    %39 = vector.shape_cast %38 : vector<16xf32> to vector<16x1xf32>
    %cst_33 = arith.constant dense<0.000000e+00> : vector<1xf32>
    %40 = vector.multi_reduction <add>, %39, %cst_33 [0] : vector<16x1xf32> to vector<1xf32>
    %41 = vector.shape_cast %40 : vector<1xf32> to vector<1x1xf32>
    %c0_34 = arith.constant 0 : index
    %c7 = arith.constant 7 : index
    %c0_35 = arith.constant 0 : index
    %c0_36 = arith.constant 0 : index
    %42 = vector.load %arg1[%c0_34, %c7, %c0_35, %c0_36] : memref<1x32x16x128xf32, #tpu.memory_space<vmem>>, vector<1x1x16x128xf32>
    %43 = vector.shape_cast %42 : vector<1x1x16x128xf32> to vector<16x128xf32>
    %cst_37 = arith.constant dense<0.000000e+00> : vector<16xf32>
    %44 = vector.multi_reduction <add>, %43, %cst_37 [1] : vector<16x128xf32> to vector<16xf32>
    %45 = vector.shape_cast %44 : vector<16xf32> to vector<16x1xf32>
    %cst_38 = arith.constant dense<0.000000e+00> : vector<1xf32>
    %46 = vector.multi_reduction <add>, %45, %cst_38 [0] : vector<16x1xf32> to vector<1xf32>
    %47 = vector.shape_cast %46 : vector<1xf32> to vector<1x1xf32>
    %c0_39 = arith.constant 0 : index
    %c8 = arith.constant 8 : index
    %c0_40 = arith.constant 0 : index
    %c0_41 = arith.constant 0 : index
    %48 = vector.load %arg1[%c0_39, %c8, %c0_40, %c0_41] : memref<1x32x16x128xf32, #tpu.memory_space<vmem>>, vector<1x1x16x128xf32>
    %49 = vector.shape_cast %48 : vector<1x1x16x128xf32> to vector<16x128xf32>
    %cst_42 = arith.constant dense<0.000000e+00> : vector<16xf32>
    %50 = vector.multi_reduction <add>, %49, %cst_42 [1] : vector<16x128xf32> to vector<16xf32>
    %51 = vector.shape_cast %50 : vector<16xf32> to vector<16x1xf32>
    %cst_43 = arith.constant dense<0.000000e+00> : vector<1xf32>
    %52 = vector.multi_reduction <add>, %51, %cst_43 [0] : vector<16x1xf32> to vector<1xf32>
    %53 = vector.shape_cast %52 : vector<1xf32> to vector<1x1xf32>
    %c0_44 = arith.constant 0 : index
    %c9 = arith.constant 9 : index
    %c0_45 = arith.constant 0 : index
    %c0_46 = arith.constant 0 : index
    %54 = vector.load %arg1[%c0_44, %c9, %c0_45, %c0_46] : memref<1x32x16x128xf32, #tpu.memory_space<vmem>>, vector<1x1x16x128xf32>
    %55 = vector.shape_cast %54 : vector<1x1x16x128xf32> to vector<16x128xf32>
    %cst_47 = arith.constant dense<0.000000e+00> : vector<16xf32>
    %56 = vector.multi_reduction <add>, %55, %cst_47 [1] : vector<16x128xf32> to vector<16xf32>
    %57 = vector.shape_cast %56 : vector<16xf32> to vector<16x1xf32>
    %cst_48 = arith.constant dense<0.000000e+00> : vector<1xf32>
    %58 = vector.multi_reduction <add>, %57, %cst_48 [0] : vector<16x1xf32> to vector<1xf32>
    %59 = vector.shape_cast %58 : vector<1xf32> to vector<1x1xf32>
    %c0_49 = arith.constant 0 : index
    %c10 = arith.constant 10 : index
    %c0_50 = arith.constant 0 : index
    %c0_51 = arith.constant 0 : index
    %60 = vector.load %arg1[%c0_49, %c10, %c0_50, %c0_51] : memref<1x32x16x128xf32, #tpu.memory_space<vmem>>, vector<1x1x16x128xf32>
    %61 = vector.shape_cast %60 : vector<1x1x16x128xf32> to vector<16x128xf32>
    %cst_52 = arith.constant dense<0.000000e+00> : vector<16xf32>
    %62 = vector.multi_reduction <add>, %61, %cst_52 [1] : vector<16x128xf32> to vector<16xf32>
    %63 = vector.shape_cast %62 : vector<16xf32> to vector<16x1xf32>
    %cst_53 = arith.constant dense<0.000000e+00> : vector<1xf32>
    %64 = vector.multi_reduction <add>, %63, %cst_53 [0] : vector<16x1xf32> to vector<1xf32>
    %65 = vector.shape_cast %64 : vector<1xf32> to vector<1x1xf32>
    %c0_54 = arith.constant 0 : index
    %c11 = arith.constant 11 : index
    %c0_55 = arith.constant 0 : index
    %c0_56 = arith.constant 0 : index
    %66 = vector.load %arg1[%c0_54, %c11, %c0_55, %c0_56] : memref<1x32x16x128xf32, #tpu.memory_space<vmem>>, vector<1x1x16x128xf32>
    %67 = vector.shape_cast %66 : vector<1x1x16x128xf32> to vector<16x128xf32>
    %cst_57 = arith.constant dense<0.000000e+00> : vector<16xf32>
    %68 = vector.multi_reduction <add>, %67, %cst_57 [1] : vector<16x128xf32> to vector<16xf32>
    %69 = vector.shape_cast %68 : vector<16xf32> to vector<16x1xf32>
    %cst_58 = arith.constant dense<0.000000e+00> : vector<1xf32>
    %70 = vector.multi_reduction <add>, %69, %cst_58 [0] : vector<16x1xf32> to vector<1xf32>
    %71 = vector.shape_cast %70 : vector<1xf32> to vector<1x1xf32>
    %c0_59 = arith.constant 0 : index
    %c12 = arith.constant 12 : index
    %c0_60 = arith.constant 0 : index
    %c0_61 = arith.constant 0 : index
    %72 = vector.load %arg1[%c0_59, %c12, %c0_60, %c0_61] : memref<1x32x16x128xf32, #tpu.memory_space<vmem>>, vector<1x1x16x128xf32>
    %73 = vector.shape_cast %72 : vector<1x1x16x128xf32> to vector<16x128xf32>
    %cst_62 = arith.constant dense<0.000000e+00> : vector<16xf32>
    %74 = vector.multi_reduction <add>, %73, %cst_62 [1] : vector<16x128xf32> to vector<16xf32>
    %75 = vector.shape_cast %74 : vector<16xf32> to vector<16x1xf32>
    %cst_63 = arith.constant dense<0.000000e+00> : vector<1xf32>
    %76 = vector.multi_reduction <add>, %75, %cst_63 [0] : vector<16x1xf32> to vector<1xf32>
    %77 = vector.shape_cast %76 : vector<1xf32> to vector<1x1xf32>
    %c0_64 = arith.constant 0 : index
    %c13 = arith.constant 13 : index
    %c0_65 = arith.constant 0 : index
    %c0_66 = arith.constant 0 : index
    %78 = vector.load %arg1[%c0_64, %c13, %c0_65, %c0_66] : memref<1x32x16x128xf32, #tpu.memory_space<vmem>>, vector<1x1x16x128xf32>
    %79 = vector.shape_cast %78 : vector<1x1x16x128xf32> to vector<16x128xf32>
    %cst_67 = arith.constant dense<0.000000e+00> : vector<16xf32>
    %80 = vector.multi_reduction <add>, %79, %cst_67 [1] : vector<16x128xf32> to vector<16xf32>
    %81 = vector.shape_cast %80 : vector<16xf32> to vector<16x1xf32>
    %cst_68 = arith.constant dense<0.000000e+00> : vector<1xf32>
    %82 = vector.multi_reduction <add>, %81, %cst_68 [0] : vector<16x1xf32> to vector<1xf32>
    %83 = vector.shape_cast %82 : vector<1xf32> to vector<1x1xf32>
    %c0_69 = arith.constant 0 : index
    %c14 = arith.constant 14 : index
    %c0_70 = arith.constant 0 : index
    %c0_71 = arith.constant 0 : index
    %84 = vector.load %arg1[%c0_69, %c14, %c0_70, %c0_71] : memref<1x32x16x128xf32, #tpu.memory_space<vmem>>, vector<1x1x16x128xf32>
    %85 = vector.shape_cast %84 : vector<1x1x16x128xf32> to vector<16x128xf32>
    %cst_72 = arith.constant dense<0.000000e+00> : vector<16xf32>
    %86 = vector.multi_reduction <add>, %85, %cst_72 [1] : vector<16x128xf32> to vector<16xf32>
    %87 = vector.shape_cast %86 : vector<16xf32> to vector<16x1xf32>
    %cst_73 = arith.constant dense<0.000000e+00> : vector<1xf32>
    %88 = vector.multi_reduction <add>, %87, %cst_73 [0] : vector<16x1xf32> to vector<1xf32>
    %89 = vector.shape_cast %88 : vector<1xf32> to vector<1x1xf32>
    %c0_74 = arith.constant 0 : index
    %c15 = arith.constant 15 : index
    %c0_75 = arith.constant 0 : index
    %c0_76 = arith.constant 0 : index
    %90 = vector.load %arg1[%c0_74, %c15, %c0_75, %c0_76] : memref<1x32x16x128xf32, #tpu.memory_space<vmem>>, vector<1x1x16x128xf32>
    %91 = vector.shape_cast %90 : vector<1x1x16x128xf32> to vector<16x128xf32>
    %cst_77 = arith.constant dense<0.000000e+00> : vector<16xf32>
    %92 = vector.multi_reduction <add>, %91, %cst_77 [1] : vector<16x128xf32> to vector<16xf32>
    %93 = vector.shape_cast %92 : vector<16xf32> to vector<16x1xf32>
    %cst_78 = arith.constant dense<0.000000e+00> : vector<1xf32>
    %94 = vector.multi_reduction <add>, %93, %cst_78 [0] : vector<16x1xf32> to vector<1xf32>
    %95 = vector.shape_cast %94 : vector<1xf32> to vector<1x1xf32>
    %c0_79 = arith.constant 0 : index
    %c16 = arith.constant 16 : index
    %c0_80 = arith.constant 0 : index
    %c0_81 = arith.constant 0 : index
    %96 = vector.load %arg1[%c0_79, %c16, %c0_80, %c0_81] : memref<1x32x16x128xf32, #tpu.memory_space<vmem>>, vector<1x1x16x128xf32>
    %97 = vector.shape_cast %96 : vector<1x1x16x128xf32> to vector<16x128xf32>
    %cst_82 = arith.constant dense<0.000000e+00> : vector<16xf32>
    %98 = vector.multi_reduction <add>, %97, %cst_82 [1] : vector<16x128xf32> to vector<16xf32>
    %99 = vector.shape_cast %98 : vector<16xf32> to vector<16x1xf32>
    %cst_83 = arith.constant dense<0.000000e+00> : vector<1xf32>
    %100 = vector.multi_reduction <add>, %99, %cst_83 [0] : vector<16x1xf32> to vector<1xf32>
    %101 = vector.shape_cast %100 : vector<1xf32> to vector<1x1xf32>
    %c0_84 = arith.constant 0 : index
    %c17 = arith.constant 17 : index
    %c0_85 = arith.constant 0 : index
    %c0_86 = arith.constant 0 : index
    %102 = vector.load %arg1[%c0_84, %c17, %c0_85, %c0_86] : memref<1x32x16x128xf32, #tpu.memory_space<vmem>>, vector<1x1x16x128xf32>
    %103 = vector.shape_cast %102 : vector<1x1x16x128xf32> to vector<16x128xf32>
    %cst_87 = arith.constant dense<0.000000e+00> : vector<16xf32>
    %104 = vector.multi_reduction <add>, %103, %cst_87 [1] : vector<16x128xf32> to vector<16xf32>
    %105 = vector.shape_cast %104 : vector<16xf32> to vector<16x1xf32>
    %cst_88 = arith.constant dense<0.000000e+00> : vector<1xf32>
    %106 = vector.multi_reduction <add>, %105, %cst_88 [0] : vector<16x1xf32> to vector<1xf32>
    %107 = vector.shape_cast %106 : vector<1xf32> to vector<1x1xf32>
    %c0_89 = arith.constant 0 : index
    %c18 = arith.constant 18 : index
    %c0_90 = arith.constant 0 : index
    %c0_91 = arith.constant 0 : index
    %108 = vector.load %arg1[%c0_89, %c18, %c0_90, %c0_91] : memref<1x32x16x128xf32, #tpu.memory_space<vmem>>, vector<1x1x16x128xf32>
    %109 = vector.shape_cast %108 : vector<1x1x16x128xf32> to vector<16x128xf32>
    %cst_92 = arith.constant dense<0.000000e+00> : vector<16xf32>
    %110 = vector.multi_reduction <add>, %109, %cst_92 [1] : vector<16x128xf32> to vector<16xf32>
    %111 = vector.shape_cast %110 : vector<16xf32> to vector<16x1xf32>
    %cst_93 = arith.constant dense<0.000000e+00> : vector<1xf32>
    %112 = vector.multi_reduction <add>, %111, %cst_93 [0] : vector<16x1xf32> to vector<1xf32>
    %113 = vector.shape_cast %112 : vector<1xf32> to vector<1x1xf32>
    %c0_94 = arith.constant 0 : index
    %c19 = arith.constant 19 : index
    %c0_95 = arith.constant 0 : index
    %c0_96 = arith.constant 0 : index
    %114 = vector.load %arg1[%c0_94, %c19, %c0_95, %c0_96] : memref<1x32x16x128xf32, #tpu.memory_space<vmem>>, vector<1x1x16x128xf32>
    %115 = vector.shape_cast %114 : vector<1x1x16x128xf32> to vector<16x128xf32>
    %cst_97 = arith.constant dense<0.000000e+00> : vector<16xf32>
    %116 = vector.multi_reduction <add>, %115, %cst_97 [1] : vector<16x128xf32> to vector<16xf32>
    %117 = vector.shape_cast %116 : vector<16xf32> to vector<16x1xf32>
    %cst_98 = arith.constant dense<0.000000e+00> : vector<1xf32>
    %118 = vector.multi_reduction <add>, %117, %cst_98 [0] : vector<16x1xf32> to vector<1xf32>
    %119 = vector.shape_cast %118 : vector<1xf32> to vector<1x1xf32>
    %c0_99 = arith.constant 0 : index
    %c20 = arith.constant 20 : index
    %c0_100 = arith.constant 0 : index
    %c0_101 = arith.constant 0 : index
    %120 = vector.load %arg1[%c0_99, %c20, %c0_100, %c0_101] : memref<1x32x16x128xf32, #tpu.memory_space<vmem>>, vector<1x1x16x128xf32>
    %121 = vector.shape_cast %120 : vector<1x1x16x128xf32> to vector<16x128xf32>
    %cst_102 = arith.constant dense<0.000000e+00> : vector<16xf32>
    %122 = vector.multi_reduction <add>, %121, %cst_102 [1] : vector<16x128xf32> to vector<16xf32>
    %123 = vector.shape_cast %122 : vector<16xf32> to vector<16x1xf32>
    %cst_103 = arith.constant dense<0.000000e+00> : vector<1xf32>
    %124 = vector.multi_reduction <add>, %123, %cst_103 [0] : vector<16x1xf32> to vector<1xf32>
    %125 = vector.shape_cast %124 : vector<1xf32> to vector<1x1xf32>
    %c0_104 = arith.constant 0 : index
    %c21 = arith.constant 21 : index
    %c0_105 = arith.constant 0 : index
    %c0_106 = arith.constant 0 : index
    %126 = vector.load %arg1[%c0_104, %c21, %c0_105, %c0_106] : memref<1x32x16x128xf32, #tpu.memory_space<vmem>>, vector<1x1x16x128xf32>
    %127 = vector.shape_cast %126 : vector<1x1x16x128xf32> to vector<16x128xf32>
    %cst_107 = arith.constant dense<0.000000e+00> : vector<16xf32>
    %128 = vector.multi_reduction <add>, %127, %cst_107 [1] : vector<16x128xf32> to vector<16xf32>
    %129 = vector.shape_cast %128 : vector<16xf32> to vector<16x1xf32>
    %cst_108 = arith.constant dense<0.000000e+00> : vector<1xf32>
    %130 = vector.multi_reduction <add>, %129, %cst_108 [0] : vector<16x1xf32> to vector<1xf32>
    %131 = vector.shape_cast %130 : vector<1xf32> to vector<1x1xf32>
    %c0_109 = arith.constant 0 : index
    %c22 = arith.constant 22 : index
    %c0_110 = arith.constant 0 : index
    %c0_111 = arith.constant 0 : index
    %132 = vector.load %arg1[%c0_109, %c22, %c0_110, %c0_111] : memref<1x32x16x128xf32, #tpu.memory_space<vmem>>, vector<1x1x16x128xf32>
    %133 = vector.shape_cast %132 : vector<1x1x16x128xf32> to vector<16x128xf32>
    %cst_112 = arith.constant dense<0.000000e+00> : vector<16xf32>
    %134 = vector.multi_reduction <add>, %133, %cst_112 [1] : vector<16x128xf32> to vector<16xf32>
    %135 = vector.shape_cast %134 : vector<16xf32> to vector<16x1xf32>
    %cst_113 = arith.constant dense<0.000000e+00> : vector<1xf32>
    %136 = vector.multi_reduction <add>, %135, %cst_113 [0] : vector<16x1xf32> to vector<1xf32>
    %137 = vector.shape_cast %136 : vector<1xf32> to vector<1x1xf32>
    %c0_114 = arith.constant 0 : index
    %c23 = arith.constant 23 : index
    %c0_115 = arith.constant 0 : index
    %c0_116 = arith.constant 0 : index
    %138 = vector.load %arg1[%c0_114, %c23, %c0_115, %c0_116] : memref<1x32x16x128xf32, #tpu.memory_space<vmem>>, vector<1x1x16x128xf32>
    %139 = vector.shape_cast %138 : vector<1x1x16x128xf32> to vector<16x128xf32>
    %cst_117 = arith.constant dense<0.000000e+00> : vector<16xf32>
    %140 = vector.multi_reduction <add>, %139, %cst_117 [1] : vector<16x128xf32> to vector<16xf32>
    %141 = vector.shape_cast %140 : vector<16xf32> to vector<16x1xf32>
    %cst_118 = arith.constant dense<0.000000e+00> : vector<1xf32>
    %142 = vector.multi_reduction <add>, %141, %cst_118 [0] : vector<16x1xf32> to vector<1xf32>
    %143 = vector.shape_cast %142 : vector<1xf32> to vector<1x1xf32>
    %c0_119 = arith.constant 0 : index
    %c24 = arith.constant 24 : index
    %c0_120 = arith.constant 0 : index
    %c0_121 = arith.constant 0 : index
    %144 = vector.load %arg1[%c0_119, %c24, %c0_120, %c0_121] : memref<1x32x16x128xf32, #tpu.memory_space<vmem>>, vector<1x1x16x128xf32>
    %145 = vector.shape_cast %144 : vector<1x1x16x128xf32> to vector<16x128xf32>
    %cst_122 = arith.constant dense<0.000000e+00> : vector<16xf32>
    %146 = vector.multi_reduction <add>, %145, %cst_122 [1] : vector<16x128xf32> to vector<16xf32>
    %147 = vector.shape_cast %146 : vector<16xf32> to vector<16x1xf32>
    %cst_123 = arith.constant dense<0.000000e+00> : vector<1xf32>
    %148 = vector.multi_reduction <add>, %147, %cst_123 [0] : vector<16x1xf32> to vector<1xf32>
    %149 = vector.shape_cast %148 : vector<1xf32> to vector<1x1xf32>
    %c0_124 = arith.constant 0 : index
    %c25 = arith.constant 25 : index
    %c0_125 = arith.constant 0 : index
    %c0_126 = arith.constant 0 : index
    %150 = vector.load %arg1[%c0_124, %c25, %c0_125, %c0_126] : memref<1x32x16x128xf32, #tpu.memory_space<vmem>>, vector<1x1x16x128xf32>
    %151 = vector.shape_cast %150 : vector<1x1x16x128xf32> to vector<16x128xf32>
    %cst_127 = arith.constant dense<0.000000e+00> : vector<16xf32>
    %152 = vector.multi_reduction <add>, %151, %cst_127 [1] : vector<16x128xf32> to vector<16xf32>
    %153 = vector.shape_cast %152 : vector<16xf32> to vector<16x1xf32>
    %cst_128 = arith.constant dense<0.000000e+00> : vector<1xf32>
    %154 = vector.multi_reduction <add>, %153, %cst_128 [0] : vector<16x1xf32> to vector<1xf32>
    %155 = vector.shape_cast %154 : vector<1xf32> to vector<1x1xf32>
    %c0_129 = arith.constant 0 : index
    %c26 = arith.constant 26 : index
    %c0_130 = arith.constant 0 : index
    %c0_131 = arith.constant 0 : index
    %156 = vector.load %arg1[%c0_129, %c26, %c0_130, %c0_131] : memref<1x32x16x128xf32, #tpu.memory_space<vmem>>, vector<1x1x16x128xf32>
    %157 = vector.shape_cast %156 : vector<1x1x16x128xf32> to vector<16x128xf32>
    %cst_132 = arith.constant dense<0.000000e+00> : vector<16xf32>
    %158 = vector.multi_reduction <add>, %157, %cst_132 [1] : vector<16x128xf32> to vector<16xf32>
    %159 = vector.shape_cast %158 : vector<16xf32> to vector<16x1xf32>
    %cst_133 = arith.constant dense<0.000000e+00> : vector<1xf32>
    %160 = vector.multi_reduction <add>, %159, %cst_133 [0] : vector<16x1xf32> to vector<1xf32>
    %161 = vector.shape_cast %160 : vector<1xf32> to vector<1x1xf32>
    %c0_134 = arith.constant 0 : index
    %c27 = arith.constant 27 : index
    %c0_135 = arith.constant 0 : index
    %c0_136 = arith.constant 0 : index
    %162 = vector.load %arg1[%c0_134, %c27, %c0_135, %c0_136] : memref<1x32x16x128xf32, #tpu.memory_space<vmem>>, vector<1x1x16x128xf32>
    %163 = vector.shape_cast %162 : vector<1x1x16x128xf32> to vector<16x128xf32>
    %cst_137 = arith.constant dense<0.000000e+00> : vector<16xf32>
    %164 = vector.multi_reduction <add>, %163, %cst_137 [1] : vector<16x128xf32> to vector<16xf32>
    %165 = vector.shape_cast %164 : vector<16xf32> to vector<16x1xf32>
    %cst_138 = arith.constant dense<0.000000e+00> : vector<1xf32>
    %166 = vector.multi_reduction <add>, %165, %cst_138 [0] : vector<16x1xf32> to vector<1xf32>
    %167 = vector.shape_cast %166 : vector<1xf32> to vector<1x1xf32>
    %c0_139 = arith.constant 0 : index
    %c28 = arith.constant 28 : index
    %c0_140 = arith.constant 0 : index
    %c0_141 = arith.constant 0 : index
    %168 = vector.load %arg1[%c0_139, %c28, %c0_140, %c0_141] : memref<1x32x16x128xf32, #tpu.memory_space<vmem>>, vector<1x1x16x128xf32>
    %169 = vector.shape_cast %168 : vector<1x1x16x128xf32> to vector<16x128xf32>
    %cst_142 = arith.constant dense<0.000000e+00> : vector<16xf32>
    %170 = vector.multi_reduction <add>, %169, %cst_142 [1] : vector<16x128xf32> to vector<16xf32>
    %171 = vector.shape_cast %170 : vector<16xf32> to vector<16x1xf32>
    %cst_143 = arith.constant dense<0.000000e+00> : vector<1xf32>
    %172 = vector.multi_reduction <add>, %171, %cst_143 [0] : vector<16x1xf32> to vector<1xf32>
    %173 = vector.shape_cast %172 : vector<1xf32> to vector<1x1xf32>
    %c0_144 = arith.constant 0 : index
    %c29 = arith.constant 29 : index
    %c0_145 = arith.constant 0 : index
    %c0_146 = arith.constant 0 : index
    %174 = vector.load %arg1[%c0_144, %c29, %c0_145, %c0_146] : memref<1x32x16x128xf32, #tpu.memory_space<vmem>>, vector<1x1x16x128xf32>
    %175 = vector.shape_cast %174 : vector<1x1x16x128xf32> to vector<16x128xf32>
    %cst_147 = arith.constant dense<0.000000e+00> : vector<16xf32>
    %176 = vector.multi_reduction <add>, %175, %cst_147 [1] : vector<16x128xf32> to vector<16xf32>
    %177 = vector.shape_cast %176 : vector<16xf32> to vector<16x1xf32>
    %cst_148 = arith.constant dense<0.000000e+00> : vector<1xf32>
    %178 = vector.multi_reduction <add>, %177, %cst_148 [0] : vector<16x1xf32> to vector<1xf32>
    %179 = vector.shape_cast %178 : vector<1xf32> to vector<1x1xf32>
    %c0_149 = arith.constant 0 : index
    %c30 = arith.constant 30 : index
    %c0_150 = arith.constant 0 : index
    %c0_151 = arith.constant 0 : index
    %180 = vector.load %arg1[%c0_149, %c30, %c0_150, %c0_151] : memref<1x32x16x128xf32, #tpu.memory_space<vmem>>, vector<1x1x16x128xf32>
    %181 = vector.shape_cast %180 : vector<1x1x16x128xf32> to vector<16x128xf32>
    %cst_152 = arith.constant dense<0.000000e+00> : vector<16xf32>
    %182 = vector.multi_reduction <add>, %181, %cst_152 [1] : vector<16x128xf32> to vector<16xf32>
    %183 = vector.shape_cast %182 : vector<16xf32> to vector<16x1xf32>
    %cst_153 = arith.constant dense<0.000000e+00> : vector<1xf32>
    %184 = vector.multi_reduction <add>, %183, %cst_153 [0] : vector<16x1xf32> to vector<1xf32>
    %185 = vector.shape_cast %184 : vector<1xf32> to vector<1x1xf32>
    %c0_154 = arith.constant 0 : index
    %c31 = arith.constant 31 : index
    %c0_155 = arith.constant 0 : index
    %c0_156 = arith.constant 0 : index
    %186 = vector.load %arg1[%c0_154, %c31, %c0_155, %c0_156] : memref<1x32x16x128xf32, #tpu.memory_space<vmem>>, vector<1x1x16x128xf32>
    %187 = vector.shape_cast %186 : vector<1x1x16x128xf32> to vector<16x128xf32>
    %cst_157 = arith.constant dense<0.000000e+00> : vector<16xf32>
    %188 = vector.multi_reduction <add>, %187, %cst_157 [1] : vector<16x128xf32> to vector<16xf32>
    %189 = vector.shape_cast %188 : vector<16xf32> to vector<16x1xf32>
    %cst_158 = arith.constant dense<0.000000e+00> : vector<1xf32>
    %190 = vector.multi_reduction <add>, %189, %cst_158 [0] : vector<16x1xf32> to vector<1xf32>
    %191 = vector.shape_cast %190 : vector<1xf32> to vector<1x1xf32>
    %192 = tpu.concatenate %5, %11, %17, %23, %29, %35, %41, %47, %53, %59, %65, %71, %77, %83, %89, %95 in 1 : vector<1x1xf32>, vector<1x1xf32>, vector<1x1xf32>, vector<1x1xf32>, vector<1x1xf32>, vector<1x1xf32>, vector<1x1xf32>, vector<1x1xf32>, vector<1x1xf32>, vector<1x1xf32>, vector<1x1xf32>, vector<1x1xf32>, vector<1x1xf32>, vector<1x1xf32>, vector<1x1xf32>, vector<1x1xf32> -> vector<1x16xf32>
    %193 = tpu.concatenate %101, %107, %113, %119, %125, %131, %137, %143, %149, %155, %161, %167, %173, %179, %185, %191 in 1 : vector<1x1xf32>, vector<1x1xf32>, vector<1x1xf32>, vector<1x1xf32>, vector<1x1xf32>, vector<1x1xf32>, vector<1x1xf32>, vector<1x1xf32>, vector<1x1xf32>, vector<1x1xf32>, vector<1x1xf32>, vector<1x1xf32>, vector<1x1xf32>, vector<1x1xf32>, vector<1x1xf32>, vector<1x1xf32> -> vector<1x16xf32>
    %194 = tpu.concatenate %192, %193 in 1 : vector<1x16xf32>, vector<1x16xf32> -> vector<1x32xf32>
    %cst_159 = arith.constant 4.8828125E-4 : f32
    %195 = vector.broadcast %cst_159 : f32 to vector<1x32xf32>
    %196 = arith.mulf %194, %195 : vector<1x32xf32>
    %c0_160 = arith.constant 0 : index
    %c0_161 = arith.constant 0 : index
    %197 = vector.load %arg2[%c0_160, %c0_161] : memref<32x2xf32, #tpu.memory_space<vmem>>, vector<32x2xf32>
    %cst_162 = arith.constant dense<0.000000e+00> : vector<1x2xf32>
    %198 = tpu.matmul %196, %197, %cst_162 {dimension_numbers = #tpu.dot_dimension_numbers<[1], [0], [0], [1], [0, 0, 1, 1], [], []>} : vector<1x32xf32>, vector<32x2xf32>, vector<1x2xf32> -> vector<1x2xf32>
    %c0_163 = arith.constant 0 : index
    %c0_164 = arith.constant 0 : index
    %199 = vector.load %arg3[%c0_163, %c0_164] : memref<1x2xf32, #tpu.memory_space<vmem>>, vector<1x2xf32>
    %200 = arith.addf %198, %199 : vector<1x2xf32>
    %cst_165 = arith.constant 0.000000e+00 : f32
    %201 = vector.broadcast %cst_165 : f32 to vector<1x2xf32>
    %202 = arith.maximumf %200, %201 : vector<1x2xf32>
    %c0_166 = arith.constant 0 : index
    %c0_167 = arith.constant 0 : index
    %203 = vector.load %arg4[%c0_166, %c0_167] : memref<2x32xf32, #tpu.memory_space<vmem>>, vector<2x32xf32>
    %cst_168 = arith.constant dense<0.000000e+00> : vector<1x32xf32>
    %204 = tpu.matmul %202, %203, %cst_168 {dimension_numbers = #tpu.dot_dimension_numbers<[1], [0], [0], [1], [0, 0, 1, 1], [], []>} : vector<1x2xf32>, vector<2x32xf32>, vector<1x32xf32> -> vector<1x32xf32>
    %c0_169 = arith.constant 0 : index
    %c0_170 = arith.constant 0 : index
    %205 = vector.load %arg5[%c0_169, %c0_170] : memref<1x32xf32, #tpu.memory_space<vmem>>, vector<1x32xf32>
    %206 = arith.addf %204, %205 : vector<1x32xf32>
    %207 = arith.negf %206 : vector<1x32xf32>
    %208 = math.exp %207 : vector<1x32xf32>
    %cst_171 = arith.constant 1.000000e+00 : f32
    %209 = vector.broadcast %cst_171 : f32 to vector<1x32xf32>
    %210 = arith.addf %209, %208 : vector<1x32xf32>
    %211 = arith.divf %209, %210 : vector<1x32xf32>
    %cst_172 = arith.constant 0.000000e+00 : f32
    %212 = vector.broadcast %cst_172 : f32 to vector<16x128xf32>
    %cst_173 = arith.constant 0xFF800000 : f32
    %213 = vector.broadcast %cst_173 : f32 to vector<16x128xf32>
    %214 = vector.extract_strided_slice %211 {offsets = [0, 0], sizes = [1, 1], strides = [1, 1]} : vector<1x32xf32> to vector<1x1xf32>
    %c0_174 = arith.constant 0 : index
    %c0_175 = arith.constant 0 : index
    %c0_176 = arith.constant 0 : index
    %c0_177 = arith.constant 0 : index
    %215 = vector.load %arg1[%c0_174, %c0_175, %c0_176, %c0_177] : memref<1x32x16x128xf32, #tpu.memory_space<vmem>>, vector<1x1x16x128xf32>
    %216 = vector.shape_cast %215 : vector<1x1x16x128xf32> to vector<16x128xf32>
    %217 = vector.broadcast %214 : vector<1x1xf32> to vector<16x128xf32>
    %218 = arith.mulf %216, %217 : vector<16x128xf32>
    %219 = arith.addf %212, %218 : vector<16x128xf32>
    %220 = arith.maximumf %213, %218 : vector<16x128xf32>
    %221 = vector.extract_strided_slice %211 {offsets = [0, 1], sizes = [1, 1], strides = [1, 1]} : vector<1x32xf32> to vector<1x1xf32>
    %c0_178 = arith.constant 0 : index
    %c1_179 = arith.constant 1 : index
    %c0_180 = arith.constant 0 : index
    %c0_181 = arith.constant 0 : index
    %222 = vector.load %arg1[%c0_178, %c1_179, %c0_180, %c0_181] : memref<1x32x16x128xf32, #tpu.memory_space<vmem>>, vector<1x1x16x128xf32>
    %223 = vector.shape_cast %222 : vector<1x1x16x128xf32> to vector<16x128xf32>
    %224 = vector.broadcast %221 : vector<1x1xf32> to vector<16x128xf32>
    %225 = arith.mulf %223, %224 : vector<16x128xf32>
    %226 = arith.addf %219, %225 : vector<16x128xf32>
    %227 = arith.maximumf %220, %225 : vector<16x128xf32>
    %228 = vector.extract_strided_slice %211 {offsets = [0, 2], sizes = [1, 1], strides = [1, 1]} : vector<1x32xf32> to vector<1x1xf32>
    %c0_182 = arith.constant 0 : index
    %c2_183 = arith.constant 2 : index
    %c0_184 = arith.constant 0 : index
    %c0_185 = arith.constant 0 : index
    %229 = vector.load %arg1[%c0_182, %c2_183, %c0_184, %c0_185] : memref<1x32x16x128xf32, #tpu.memory_space<vmem>>, vector<1x1x16x128xf32>
    %230 = vector.shape_cast %229 : vector<1x1x16x128xf32> to vector<16x128xf32>
    %231 = vector.broadcast %228 : vector<1x1xf32> to vector<16x128xf32>
    %232 = arith.mulf %230, %231 : vector<16x128xf32>
    %233 = arith.addf %226, %232 : vector<16x128xf32>
    %234 = arith.maximumf %227, %232 : vector<16x128xf32>
    %235 = vector.extract_strided_slice %211 {offsets = [0, 3], sizes = [1, 1], strides = [1, 1]} : vector<1x32xf32> to vector<1x1xf32>
    %c0_186 = arith.constant 0 : index
    %c3_187 = arith.constant 3 : index
    %c0_188 = arith.constant 0 : index
    %c0_189 = arith.constant 0 : index
    %236 = vector.load %arg1[%c0_186, %c3_187, %c0_188, %c0_189] : memref<1x32x16x128xf32, #tpu.memory_space<vmem>>, vector<1x1x16x128xf32>
    %237 = vector.shape_cast %236 : vector<1x1x16x128xf32> to vector<16x128xf32>
    %238 = vector.broadcast %235 : vector<1x1xf32> to vector<16x128xf32>
    %239 = arith.mulf %237, %238 : vector<16x128xf32>
    %240 = arith.addf %233, %239 : vector<16x128xf32>
    %241 = arith.maximumf %234, %239 : vector<16x128xf32>
    %242 = vector.extract_strided_slice %211 {offsets = [0, 4], sizes = [1, 1], strides = [1, 1]} : vector<1x32xf32> to vector<1x1xf32>
    %c0_190 = arith.constant 0 : index
    %c4_191 = arith.constant 4 : index
    %c0_192 = arith.constant 0 : index
    %c0_193 = arith.constant 0 : index
    %243 = vector.load %arg1[%c0_190, %c4_191, %c0_192, %c0_193] : memref<1x32x16x128xf32, #tpu.memory_space<vmem>>, vector<1x1x16x128xf32>
    %244 = vector.shape_cast %243 : vector<1x1x16x128xf32> to vector<16x128xf32>
    %245 = vector.broadcast %242 : vector<1x1xf32> to vector<16x128xf32>
    %246 = arith.mulf %244, %245 : vector<16x128xf32>
    %247 = arith.addf %240, %246 : vector<16x128xf32>
    %248 = arith.maximumf %241, %246 : vector<16x128xf32>
    %249 = vector.extract_strided_slice %211 {offsets = [0, 5], sizes = [1, 1], strides = [1, 1]} : vector<1x32xf32> to vector<1x1xf32>
    %c0_194 = arith.constant 0 : index
    %c5_195 = arith.constant 5 : index
    %c0_196 = arith.constant 0 : index
    %c0_197 = arith.constant 0 : index
    %250 = vector.load %arg1[%c0_194, %c5_195, %c0_196, %c0_197] : memref<1x32x16x128xf32, #tpu.memory_space<vmem>>, vector<1x1x16x128xf32>
    %251 = vector.shape_cast %250 : vector<1x1x16x128xf32> to vector<16x128xf32>
    %252 = vector.broadcast %249 : vector<1x1xf32> to vector<16x128xf32>
    %253 = arith.mulf %251, %252 : vector<16x128xf32>
    %254 = arith.addf %247, %253 : vector<16x128xf32>
    %255 = arith.maximumf %248, %253 : vector<16x128xf32>
    %256 = vector.extract_strided_slice %211 {offsets = [0, 6], sizes = [1, 1], strides = [1, 1]} : vector<1x32xf32> to vector<1x1xf32>
    %c0_198 = arith.constant 0 : index
    %c6_199 = arith.constant 6 : index
    %c0_200 = arith.constant 0 : index
    %c0_201 = arith.constant 0 : index
    %257 = vector.load %arg1[%c0_198, %c6_199, %c0_200, %c0_201] : memref<1x32x16x128xf32, #tpu.memory_space<vmem>>, vector<1x1x16x128xf32>
    %258 = vector.shape_cast %257 : vector<1x1x16x128xf32> to vector<16x128xf32>
    %259 = vector.broadcast %256 : vector<1x1xf32> to vector<16x128xf32>
    %260 = arith.mulf %258, %259 : vector<16x128xf32>
    %261 = arith.addf %254, %260 : vector<16x128xf32>
    %262 = arith.maximumf %255, %260 : vector<16x128xf32>
    %263 = vector.extract_strided_slice %211 {offsets = [0, 7], sizes = [1, 1], strides = [1, 1]} : vector<1x32xf32> to vector<1x1xf32>
    %c0_202 = arith.constant 0 : index
    %c7_203 = arith.constant 7 : index
    %c0_204 = arith.constant 0 : index
    %c0_205 = arith.constant 0 : index
    %264 = vector.load %arg1[%c0_202, %c7_203, %c0_204, %c0_205] : memref<1x32x16x128xf32, #tpu.memory_space<vmem>>, vector<1x1x16x128xf32>
    %265 = vector.shape_cast %264 : vector<1x1x16x128xf32> to vector<16x128xf32>
    %266 = vector.broadcast %263 : vector<1x1xf32> to vector<16x128xf32>
    %267 = arith.mulf %265, %266 : vector<16x128xf32>
    %268 = arith.addf %261, %267 : vector<16x128xf32>
    %269 = arith.maximumf %262, %267 : vector<16x128xf32>
    %270 = vector.extract_strided_slice %211 {offsets = [0, 8], sizes = [1, 1], strides = [1, 1]} : vector<1x32xf32> to vector<1x1xf32>
    %c0_206 = arith.constant 0 : index
    %c8_207 = arith.constant 8 : index
    %c0_208 = arith.constant 0 : index
    %c0_209 = arith.constant 0 : index
    %271 = vector.load %arg1[%c0_206, %c8_207, %c0_208, %c0_209] : memref<1x32x16x128xf32, #tpu.memory_space<vmem>>, vector<1x1x16x128xf32>
    %272 = vector.shape_cast %271 : vector<1x1x16x128xf32> to vector<16x128xf32>
    %273 = vector.broadcast %270 : vector<1x1xf32> to vector<16x128xf32>
    %274 = arith.mulf %272, %273 : vector<16x128xf32>
    %275 = arith.addf %268, %274 : vector<16x128xf32>
    %276 = arith.maximumf %269, %274 : vector<16x128xf32>
    %277 = vector.extract_strided_slice %211 {offsets = [0, 9], sizes = [1, 1], strides = [1, 1]} : vector<1x32xf32> to vector<1x1xf32>
    %c0_210 = arith.constant 0 : index
    %c9_211 = arith.constant 9 : index
    %c0_212 = arith.constant 0 : index
    %c0_213 = arith.constant 0 : index
    %278 = vector.load %arg1[%c0_210, %c9_211, %c0_212, %c0_213] : memref<1x32x16x128xf32, #tpu.memory_space<vmem>>, vector<1x1x16x128xf32>
    %279 = vector.shape_cast %278 : vector<1x1x16x128xf32> to vector<16x128xf32>
    %280 = vector.broadcast %277 : vector<1x1xf32> to vector<16x128xf32>
    %281 = arith.mulf %279, %280 : vector<16x128xf32>
    %282 = arith.addf %275, %281 : vector<16x128xf32>
    %283 = arith.maximumf %276, %281 : vector<16x128xf32>
    %284 = vector.extract_strided_slice %211 {offsets = [0, 10], sizes = [1, 1], strides = [1, 1]} : vector<1x32xf32> to vector<1x1xf32>
    %c0_214 = arith.constant 0 : index
    %c10_215 = arith.constant 10 : index
    %c0_216 = arith.constant 0 : index
    %c0_217 = arith.constant 0 : index
    %285 = vector.load %arg1[%c0_214, %c10_215, %c0_216, %c0_217] : memref<1x32x16x128xf32, #tpu.memory_space<vmem>>, vector<1x1x16x128xf32>
    %286 = vector.shape_cast %285 : vector<1x1x16x128xf32> to vector<16x128xf32>
    %287 = vector.broadcast %284 : vector<1x1xf32> to vector<16x128xf32>
    %288 = arith.mulf %286, %287 : vector<16x128xf32>
    %289 = arith.addf %282, %288 : vector<16x128xf32>
    %290 = arith.maximumf %283, %288 : vector<16x128xf32>
    %291 = vector.extract_strided_slice %211 {offsets = [0, 11], sizes = [1, 1], strides = [1, 1]} : vector<1x32xf32> to vector<1x1xf32>
    %c0_218 = arith.constant 0 : index
    %c11_219 = arith.constant 11 : index
    %c0_220 = arith.constant 0 : index
    %c0_221 = arith.constant 0 : index
    %292 = vector.load %arg1[%c0_218, %c11_219, %c0_220, %c0_221] : memref<1x32x16x128xf32, #tpu.memory_space<vmem>>, vector<1x1x16x128xf32>
    %293 = vector.shape_cast %292 : vector<1x1x16x128xf32> to vector<16x128xf32>
    %294 = vector.broadcast %291 : vector<1x1xf32> to vector<16x128xf32>
    %295 = arith.mulf %293, %294 : vector<16x128xf32>
    %296 = arith.addf %289, %295 : vector<16x128xf32>
    %297 = arith.maximumf %290, %295 : vector<16x128xf32>
    %298 = vector.extract_strided_slice %211 {offsets = [0, 12], sizes = [1, 1], strides = [1, 1]} : vector<1x32xf32> to vector<1x1xf32>
    %c0_222 = arith.constant 0 : index
    %c12_223 = arith.constant 12 : index
    %c0_224 = arith.constant 0 : index
    %c0_225 = arith.constant 0 : index
    %299 = vector.load %arg1[%c0_222, %c12_223, %c0_224, %c0_225] : memref<1x32x16x128xf32, #tpu.memory_space<vmem>>, vector<1x1x16x128xf32>
    %300 = vector.shape_cast %299 : vector<1x1x16x128xf32> to vector<16x128xf32>
    %301 = vector.broadcast %298 : vector<1x1xf32> to vector<16x128xf32>
    %302 = arith.mulf %300, %301 : vector<16x128xf32>
    %303 = arith.addf %296, %302 : vector<16x128xf32>
    %304 = arith.maximumf %297, %302 : vector<16x128xf32>
    %305 = vector.extract_strided_slice %211 {offsets = [0, 13], sizes = [1, 1], strides = [1, 1]} : vector<1x32xf32> to vector<1x1xf32>
    %c0_226 = arith.constant 0 : index
    %c13_227 = arith.constant 13 : index
    %c0_228 = arith.constant 0 : index
    %c0_229 = arith.constant 0 : index
    %306 = vector.load %arg1[%c0_226, %c13_227, %c0_228, %c0_229] : memref<1x32x16x128xf32, #tpu.memory_space<vmem>>, vector<1x1x16x128xf32>
    %307 = vector.shape_cast %306 : vector<1x1x16x128xf32> to vector<16x128xf32>
    %308 = vector.broadcast %305 : vector<1x1xf32> to vector<16x128xf32>
    %309 = arith.mulf %307, %308 : vector<16x128xf32>
    %310 = arith.addf %303, %309 : vector<16x128xf32>
    %311 = arith.maximumf %304, %309 : vector<16x128xf32>
    %312 = vector.extract_strided_slice %211 {offsets = [0, 14], sizes = [1, 1], strides = [1, 1]} : vector<1x32xf32> to vector<1x1xf32>
    %c0_230 = arith.constant 0 : index
    %c14_231 = arith.constant 14 : index
    %c0_232 = arith.constant 0 : index
    %c0_233 = arith.constant 0 : index
    %313 = vector.load %arg1[%c0_230, %c14_231, %c0_232, %c0_233] : memref<1x32x16x128xf32, #tpu.memory_space<vmem>>, vector<1x1x16x128xf32>
    %314 = vector.shape_cast %313 : vector<1x1x16x128xf32> to vector<16x128xf32>
    %315 = vector.broadcast %312 : vector<1x1xf32> to vector<16x128xf32>
    %316 = arith.mulf %314, %315 : vector<16x128xf32>
    %317 = arith.addf %310, %316 : vector<16x128xf32>
    %318 = arith.maximumf %311, %316 : vector<16x128xf32>
    %319 = vector.extract_strided_slice %211 {offsets = [0, 15], sizes = [1, 1], strides = [1, 1]} : vector<1x32xf32> to vector<1x1xf32>
    %c0_234 = arith.constant 0 : index
    %c15_235 = arith.constant 15 : index
    %c0_236 = arith.constant 0 : index
    %c0_237 = arith.constant 0 : index
    %320 = vector.load %arg1[%c0_234, %c15_235, %c0_236, %c0_237] : memref<1x32x16x128xf32, #tpu.memory_space<vmem>>, vector<1x1x16x128xf32>
    %321 = vector.shape_cast %320 : vector<1x1x16x128xf32> to vector<16x128xf32>
    %322 = vector.broadcast %319 : vector<1x1xf32> to vector<16x128xf32>
    %323 = arith.mulf %321, %322 : vector<16x128xf32>
    %324 = arith.addf %317, %323 : vector<16x128xf32>
    %325 = arith.maximumf %318, %323 : vector<16x128xf32>
    %326 = vector.extract_strided_slice %211 {offsets = [0, 16], sizes = [1, 1], strides = [1, 1]} : vector<1x32xf32> to vector<1x1xf32>
    %c0_238 = arith.constant 0 : index
    %c16_239 = arith.constant 16 : index
    %c0_240 = arith.constant 0 : index
    %c0_241 = arith.constant 0 : index
    %327 = vector.load %arg1[%c0_238, %c16_239, %c0_240, %c0_241] : memref<1x32x16x128xf32, #tpu.memory_space<vmem>>, vector<1x1x16x128xf32>
    %328 = vector.shape_cast %327 : vector<1x1x16x128xf32> to vector<16x128xf32>
    %329 = vector.broadcast %326 : vector<1x1xf32> to vector<16x128xf32>
    %330 = arith.mulf %328, %329 : vector<16x128xf32>
    %331 = arith.addf %324, %330 : vector<16x128xf32>
    %332 = arith.maximumf %325, %330 : vector<16x128xf32>
    %333 = vector.extract_strided_slice %211 {offsets = [0, 17], sizes = [1, 1], strides = [1, 1]} : vector<1x32xf32> to vector<1x1xf32>
    %c0_242 = arith.constant 0 : index
    %c17_243 = arith.constant 17 : index
    %c0_244 = arith.constant 0 : index
    %c0_245 = arith.constant 0 : index
    %334 = vector.load %arg1[%c0_242, %c17_243, %c0_244, %c0_245] : memref<1x32x16x128xf32, #tpu.memory_space<vmem>>, vector<1x1x16x128xf32>
    %335 = vector.shape_cast %334 : vector<1x1x16x128xf32> to vector<16x128xf32>
    %336 = vector.broadcast %333 : vector<1x1xf32> to vector<16x128xf32>
    %337 = arith.mulf %335, %336 : vector<16x128xf32>
    %338 = arith.addf %331, %337 : vector<16x128xf32>
    %339 = arith.maximumf %332, %337 : vector<16x128xf32>
    %340 = vector.extract_strided_slice %211 {offsets = [0, 18], sizes = [1, 1], strides = [1, 1]} : vector<1x32xf32> to vector<1x1xf32>
    %c0_246 = arith.constant 0 : index
    %c18_247 = arith.constant 18 : index
    %c0_248 = arith.constant 0 : index
    %c0_249 = arith.constant 0 : index
    %341 = vector.load %arg1[%c0_246, %c18_247, %c0_248, %c0_249] : memref<1x32x16x128xf32, #tpu.memory_space<vmem>>, vector<1x1x16x128xf32>
    %342 = vector.shape_cast %341 : vector<1x1x16x128xf32> to vector<16x128xf32>
    %343 = vector.broadcast %340 : vector<1x1xf32> to vector<16x128xf32>
    %344 = arith.mulf %342, %343 : vector<16x128xf32>
    %345 = arith.addf %338, %344 : vector<16x128xf32>
    %346 = arith.maximumf %339, %344 : vector<16x128xf32>
    %347 = vector.extract_strided_slice %211 {offsets = [0, 19], sizes = [1, 1], strides = [1, 1]} : vector<1x32xf32> to vector<1x1xf32>
    %c0_250 = arith.constant 0 : index
    %c19_251 = arith.constant 19 : index
    %c0_252 = arith.constant 0 : index
    %c0_253 = arith.constant 0 : index
    %348 = vector.load %arg1[%c0_250, %c19_251, %c0_252, %c0_253] : memref<1x32x16x128xf32, #tpu.memory_space<vmem>>, vector<1x1x16x128xf32>
    %349 = vector.shape_cast %348 : vector<1x1x16x128xf32> to vector<16x128xf32>
    %350 = vector.broadcast %347 : vector<1x1xf32> to vector<16x128xf32>
    %351 = arith.mulf %349, %350 : vector<16x128xf32>
    %352 = arith.addf %345, %351 : vector<16x128xf32>
    %353 = arith.maximumf %346, %351 : vector<16x128xf32>
    %354 = vector.extract_strided_slice %211 {offsets = [0, 20], sizes = [1, 1], strides = [1, 1]} : vector<1x32xf32> to vector<1x1xf32>
    %c0_254 = arith.constant 0 : index
    %c20_255 = arith.constant 20 : index
    %c0_256 = arith.constant 0 : index
    %c0_257 = arith.constant 0 : index
    %355 = vector.load %arg1[%c0_254, %c20_255, %c0_256, %c0_257] : memref<1x32x16x128xf32, #tpu.memory_space<vmem>>, vector<1x1x16x128xf32>
    %356 = vector.shape_cast %355 : vector<1x1x16x128xf32> to vector<16x128xf32>
    %357 = vector.broadcast %354 : vector<1x1xf32> to vector<16x128xf32>
    %358 = arith.mulf %356, %357 : vector<16x128xf32>
    %359 = arith.addf %352, %358 : vector<16x128xf32>
    %360 = arith.maximumf %353, %358 : vector<16x128xf32>
    %361 = vector.extract_strided_slice %211 {offsets = [0, 21], sizes = [1, 1], strides = [1, 1]} : vector<1x32xf32> to vector<1x1xf32>
    %c0_258 = arith.constant 0 : index
    %c21_259 = arith.constant 21 : index
    %c0_260 = arith.constant 0 : index
    %c0_261 = arith.constant 0 : index
    %362 = vector.load %arg1[%c0_258, %c21_259, %c0_260, %c0_261] : memref<1x32x16x128xf32, #tpu.memory_space<vmem>>, vector<1x1x16x128xf32>
    %363 = vector.shape_cast %362 : vector<1x1x16x128xf32> to vector<16x128xf32>
    %364 = vector.broadcast %361 : vector<1x1xf32> to vector<16x128xf32>
    %365 = arith.mulf %363, %364 : vector<16x128xf32>
    %366 = arith.addf %359, %365 : vector<16x128xf32>
    %367 = arith.maximumf %360, %365 : vector<16x128xf32>
    %368 = vector.extract_strided_slice %211 {offsets = [0, 22], sizes = [1, 1], strides = [1, 1]} : vector<1x32xf32> to vector<1x1xf32>
    %c0_262 = arith.constant 0 : index
    %c22_263 = arith.constant 22 : index
    %c0_264 = arith.constant 0 : index
    %c0_265 = arith.constant 0 : index
    %369 = vector.load %arg1[%c0_262, %c22_263, %c0_264, %c0_265] : memref<1x32x16x128xf32, #tpu.memory_space<vmem>>, vector<1x1x16x128xf32>
    %370 = vector.shape_cast %369 : vector<1x1x16x128xf32> to vector<16x128xf32>
    %371 = vector.broadcast %368 : vector<1x1xf32> to vector<16x128xf32>
    %372 = arith.mulf %370, %371 : vector<16x128xf32>
    %373 = arith.addf %366, %372 : vector<16x128xf32>
    %374 = arith.maximumf %367, %372 : vector<16x128xf32>
    %375 = vector.extract_strided_slice %211 {offsets = [0, 23], sizes = [1, 1], strides = [1, 1]} : vector<1x32xf32> to vector<1x1xf32>
    %c0_266 = arith.constant 0 : index
    %c23_267 = arith.constant 23 : index
    %c0_268 = arith.constant 0 : index
    %c0_269 = arith.constant 0 : index
    %376 = vector.load %arg1[%c0_266, %c23_267, %c0_268, %c0_269] : memref<1x32x16x128xf32, #tpu.memory_space<vmem>>, vector<1x1x16x128xf32>
    %377 = vector.shape_cast %376 : vector<1x1x16x128xf32> to vector<16x128xf32>
    %378 = vector.broadcast %375 : vector<1x1xf32> to vector<16x128xf32>
    %379 = arith.mulf %377, %378 : vector<16x128xf32>
    %380 = arith.addf %373, %379 : vector<16x128xf32>
    %381 = arith.maximumf %374, %379 : vector<16x128xf32>
    %382 = vector.extract_strided_slice %211 {offsets = [0, 24], sizes = [1, 1], strides = [1, 1]} : vector<1x32xf32> to vector<1x1xf32>
    %c0_270 = arith.constant 0 : index
    %c24_271 = arith.constant 24 : index
    %c0_272 = arith.constant 0 : index
    %c0_273 = arith.constant 0 : index
    %383 = vector.load %arg1[%c0_270, %c24_271, %c0_272, %c0_273] : memref<1x32x16x128xf32, #tpu.memory_space<vmem>>, vector<1x1x16x128xf32>
    %384 = vector.shape_cast %383 : vector<1x1x16x128xf32> to vector<16x128xf32>
    %385 = vector.broadcast %382 : vector<1x1xf32> to vector<16x128xf32>
    %386 = arith.mulf %384, %385 : vector<16x128xf32>
    %387 = arith.addf %380, %386 : vector<16x128xf32>
    %388 = arith.maximumf %381, %386 : vector<16x128xf32>
    %389 = vector.extract_strided_slice %211 {offsets = [0, 25], sizes = [1, 1], strides = [1, 1]} : vector<1x32xf32> to vector<1x1xf32>
    %c0_274 = arith.constant 0 : index
    %c25_275 = arith.constant 25 : index
    %c0_276 = arith.constant 0 : index
    %c0_277 = arith.constant 0 : index
    %390 = vector.load %arg1[%c0_274, %c25_275, %c0_276, %c0_277] : memref<1x32x16x128xf32, #tpu.memory_space<vmem>>, vector<1x1x16x128xf32>
    %391 = vector.shape_cast %390 : vector<1x1x16x128xf32> to vector<16x128xf32>
    %392 = vector.broadcast %389 : vector<1x1xf32> to vector<16x128xf32>
    %393 = arith.mulf %391, %392 : vector<16x128xf32>
    %394 = arith.addf %387, %393 : vector<16x128xf32>
    %395 = arith.maximumf %388, %393 : vector<16x128xf32>
    %396 = vector.extract_strided_slice %211 {offsets = [0, 26], sizes = [1, 1], strides = [1, 1]} : vector<1x32xf32> to vector<1x1xf32>
    %c0_278 = arith.constant 0 : index
    %c26_279 = arith.constant 26 : index
    %c0_280 = arith.constant 0 : index
    %c0_281 = arith.constant 0 : index
    %397 = vector.load %arg1[%c0_278, %c26_279, %c0_280, %c0_281] : memref<1x32x16x128xf32, #tpu.memory_space<vmem>>, vector<1x1x16x128xf32>
    %398 = vector.shape_cast %397 : vector<1x1x16x128xf32> to vector<16x128xf32>
    %399 = vector.broadcast %396 : vector<1x1xf32> to vector<16x128xf32>
    %400 = arith.mulf %398, %399 : vector<16x128xf32>
    %401 = arith.addf %394, %400 : vector<16x128xf32>
    %402 = arith.maximumf %395, %400 : vector<16x128xf32>
    %403 = vector.extract_strided_slice %211 {offsets = [0, 27], sizes = [1, 1], strides = [1, 1]} : vector<1x32xf32> to vector<1x1xf32>
    %c0_282 = arith.constant 0 : index
    %c27_283 = arith.constant 27 : index
    %c0_284 = arith.constant 0 : index
    %c0_285 = arith.constant 0 : index
    %404 = vector.load %arg1[%c0_282, %c27_283, %c0_284, %c0_285] : memref<1x32x16x128xf32, #tpu.memory_space<vmem>>, vector<1x1x16x128xf32>
    %405 = vector.shape_cast %404 : vector<1x1x16x128xf32> to vector<16x128xf32>
    %406 = vector.broadcast %403 : vector<1x1xf32> to vector<16x128xf32>
    %407 = arith.mulf %405, %406 : vector<16x128xf32>
    %408 = arith.addf %401, %407 : vector<16x128xf32>
    %409 = arith.maximumf %402, %407 : vector<16x128xf32>
    %410 = vector.extract_strided_slice %211 {offsets = [0, 28], sizes = [1, 1], strides = [1, 1]} : vector<1x32xf32> to vector<1x1xf32>
    %c0_286 = arith.constant 0 : index
    %c28_287 = arith.constant 28 : index
    %c0_288 = arith.constant 0 : index
    %c0_289 = arith.constant 0 : index
    %411 = vector.load %arg1[%c0_286, %c28_287, %c0_288, %c0_289] : memref<1x32x16x128xf32, #tpu.memory_space<vmem>>, vector<1x1x16x128xf32>
    %412 = vector.shape_cast %411 : vector<1x1x16x128xf32> to vector<16x128xf32>
    %413 = vector.broadcast %410 : vector<1x1xf32> to vector<16x128xf32>
    %414 = arith.mulf %412, %413 : vector<16x128xf32>
    %415 = arith.addf %408, %414 : vector<16x128xf32>
    %416 = arith.maximumf %409, %414 : vector<16x128xf32>
    %417 = vector.extract_strided_slice %211 {offsets = [0, 29], sizes = [1, 1], strides = [1, 1]} : vector<1x32xf32> to vector<1x1xf32>
    %c0_290 = arith.constant 0 : index
    %c29_291 = arith.constant 29 : index
    %c0_292 = arith.constant 0 : index
    %c0_293 = arith.constant 0 : index
    %418 = vector.load %arg1[%c0_290, %c29_291, %c0_292, %c0_293] : memref<1x32x16x128xf32, #tpu.memory_space<vmem>>, vector<1x1x16x128xf32>
    %419 = vector.shape_cast %418 : vector<1x1x16x128xf32> to vector<16x128xf32>
    %420 = vector.broadcast %417 : vector<1x1xf32> to vector<16x128xf32>
    %421 = arith.mulf %419, %420 : vector<16x128xf32>
    %422 = arith.addf %415, %421 : vector<16x128xf32>
    %423 = arith.maximumf %416, %421 : vector<16x128xf32>
    %424 = vector.extract_strided_slice %211 {offsets = [0, 30], sizes = [1, 1], strides = [1, 1]} : vector<1x32xf32> to vector<1x1xf32>
    %c0_294 = arith.constant 0 : index
    %c30_295 = arith.constant 30 : index
    %c0_296 = arith.constant 0 : index
    %c0_297 = arith.constant 0 : index
    %425 = vector.load %arg1[%c0_294, %c30_295, %c0_296, %c0_297] : memref<1x32x16x128xf32, #tpu.memory_space<vmem>>, vector<1x1x16x128xf32>
    %426 = vector.shape_cast %425 : vector<1x1x16x128xf32> to vector<16x128xf32>
    %427 = vector.broadcast %424 : vector<1x1xf32> to vector<16x128xf32>
    %428 = arith.mulf %426, %427 : vector<16x128xf32>
    %429 = arith.addf %422, %428 : vector<16x128xf32>
    %430 = arith.maximumf %423, %428 : vector<16x128xf32>
    %431 = vector.extract_strided_slice %211 {offsets = [0, 31], sizes = [1, 1], strides = [1, 1]} : vector<1x32xf32> to vector<1x1xf32>
    %c0_298 = arith.constant 0 : index
    %c31_299 = arith.constant 31 : index
    %c0_300 = arith.constant 0 : index
    %c0_301 = arith.constant 0 : index
    %432 = vector.load %arg1[%c0_298, %c31_299, %c0_300, %c0_301] : memref<1x32x16x128xf32, #tpu.memory_space<vmem>>, vector<1x1x16x128xf32>
    %433 = vector.shape_cast %432 : vector<1x1x16x128xf32> to vector<16x128xf32>
    %434 = vector.broadcast %431 : vector<1x1xf32> to vector<16x128xf32>
    %435 = arith.mulf %433, %434 : vector<16x128xf32>
    %436 = arith.addf %429, %435 : vector<16x128xf32>
    %437 = arith.maximumf %430, %435 : vector<16x128xf32>
    %cst_302 = arith.constant 3.125000e-02 : f32
    %438 = vector.broadcast %cst_302 : f32 to vector<16x128xf32>
    %439 = arith.mulf %436, %438 : vector<16x128xf32>
    %cst_303 = arith.constant 0.000000e+00 : f32
    %440 = vector.broadcast %cst_303 : f32 to vector<3x128xf32>
    %441 = tpu.concatenate %440, %439, %440 in 0 : vector<3x128xf32>, vector<16x128xf32>, vector<3x128xf32> -> vector<22x128xf32>
    %442 = tpu.concatenate %440, %437, %440 in 0 : vector<3x128xf32>, vector<16x128xf32>, vector<3x128xf32> -> vector<22x128xf32>
    %cst_304 = arith.constant 0.000000e+00 : f32
    %443 = vector.broadcast %cst_304 : f32 to vector<16x128xf32>
    %cst_305 = arith.constant 0.000000e+00 : f32
    %444 = vector.broadcast %cst_305 : f32 to vector<16x128xf32>
    %445 = vector.extract_strided_slice %441 {offsets = [0, 0], sizes = [16, 128], strides = [1, 1]} : vector<22x128xf32> to vector<16x128xf32>
    %c0_306 = arith.constant 0 : index
    %c0_307 = arith.constant 0 : index
    %c0_308 = arith.constant 0 : index
    %c0_309 = arith.constant 0 : index
    %446 = vector.load %arg6[%c0_306, %c0_307, %c0_308, %c0_309] : memref<2x7x128x128xf32, #tpu.memory_space<vmem>>, vector<1x1x128x128xf32>
    %447 = vector.shape_cast %446 : vector<1x1x128x128xf32> to vector<128x128xf32>
    %cst_310 = arith.constant dense<0.000000e+00> : vector<16x128xf32>
    %448 = tpu.matmul %445, %447, %cst_310 {dimension_numbers = #tpu.dot_dimension_numbers<[1], [0], [0], [1], [0, 0, 1, 1], [], []>} : vector<16x128xf32>, vector<128x128xf32>, vector<16x128xf32> -> vector<16x128xf32>
    %449 = arith.addf %443, %448 : vector<16x128xf32>
    %450 = vector.extract_strided_slice %442 {offsets = [0, 0], sizes = [16, 128], strides = [1, 1]} : vector<22x128xf32> to vector<16x128xf32>
    %c1_311 = arith.constant 1 : index
    %c0_312 = arith.constant 0 : index
    %c0_313 = arith.constant 0 : index
    %c0_314 = arith.constant 0 : index
    %451 = vector.load %arg6[%c1_311, %c0_312, %c0_313, %c0_314] : memref<2x7x128x128xf32, #tpu.memory_space<vmem>>, vector<1x1x128x128xf32>
    %452 = vector.shape_cast %451 : vector<1x1x128x128xf32> to vector<128x128xf32>
    %cst_315 = arith.constant dense<0.000000e+00> : vector<16x128xf32>
    %453 = tpu.matmul %450, %452, %cst_315 {dimension_numbers = #tpu.dot_dimension_numbers<[1], [0], [0], [1], [0, 0, 1, 1], [], []>} : vector<16x128xf32>, vector<128x128xf32>, vector<16x128xf32> -> vector<16x128xf32>
    %454 = arith.addf %444, %453 : vector<16x128xf32>
    %455 = vector.extract_strided_slice %441 {offsets = [1, 0], sizes = [16, 128], strides = [1, 1]} : vector<22x128xf32> to vector<16x128xf32>
    %c0_316 = arith.constant 0 : index
    %c1_317 = arith.constant 1 : index
    %c0_318 = arith.constant 0 : index
    %c0_319 = arith.constant 0 : index
    %456 = vector.load %arg6[%c0_316, %c1_317, %c0_318, %c0_319] : memref<2x7x128x128xf32, #tpu.memory_space<vmem>>, vector<1x1x128x128xf32>
    %457 = vector.shape_cast %456 : vector<1x1x128x128xf32> to vector<128x128xf32>
    %cst_320 = arith.constant dense<0.000000e+00> : vector<16x128xf32>
    %458 = tpu.matmul %455, %457, %cst_320 {dimension_numbers = #tpu.dot_dimension_numbers<[1], [0], [0], [1], [0, 0, 1, 1], [], []>} : vector<16x128xf32>, vector<128x128xf32>, vector<16x128xf32> -> vector<16x128xf32>
    %459 = arith.addf %449, %458 : vector<16x128xf32>
    %460 = vector.extract_strided_slice %442 {offsets = [1, 0], sizes = [16, 128], strides = [1, 1]} : vector<22x128xf32> to vector<16x128xf32>
    %c1_321 = arith.constant 1 : index
    %c1_322 = arith.constant 1 : index
    %c0_323 = arith.constant 0 : index
    %c0_324 = arith.constant 0 : index
    %461 = vector.load %arg6[%c1_321, %c1_322, %c0_323, %c0_324] : memref<2x7x128x128xf32, #tpu.memory_space<vmem>>, vector<1x1x128x128xf32>
    %462 = vector.shape_cast %461 : vector<1x1x128x128xf32> to vector<128x128xf32>
    %cst_325 = arith.constant dense<0.000000e+00> : vector<16x128xf32>
    %463 = tpu.matmul %460, %462, %cst_325 {dimension_numbers = #tpu.dot_dimension_numbers<[1], [0], [0], [1], [0, 0, 1, 1], [], []>} : vector<16x128xf32>, vector<128x128xf32>, vector<16x128xf32> -> vector<16x128xf32>
    %464 = arith.addf %454, %463 : vector<16x128xf32>
    %465 = vector.extract_strided_slice %441 {offsets = [2, 0], sizes = [16, 128], strides = [1, 1]} : vector<22x128xf32> to vector<16x128xf32>
    %c0_326 = arith.constant 0 : index
    %c2_327 = arith.constant 2 : index
    %c0_328 = arith.constant 0 : index
    %c0_329 = arith.constant 0 : index
    %466 = vector.load %arg6[%c0_326, %c2_327, %c0_328, %c0_329] : memref<2x7x128x128xf32, #tpu.memory_space<vmem>>, vector<1x1x128x128xf32>
    %467 = vector.shape_cast %466 : vector<1x1x128x128xf32> to vector<128x128xf32>
    %cst_330 = arith.constant dense<0.000000e+00> : vector<16x128xf32>
    %468 = tpu.matmul %465, %467, %cst_330 {dimension_numbers = #tpu.dot_dimension_numbers<[1], [0], [0], [1], [0, 0, 1, 1], [], []>} : vector<16x128xf32>, vector<128x128xf32>, vector<16x128xf32> -> vector<16x128xf32>
    %469 = arith.addf %459, %468 : vector<16x128xf32>
    %470 = vector.extract_strided_slice %442 {offsets = [2, 0], sizes = [16, 128], strides = [1, 1]} : vector<22x128xf32> to vector<16x128xf32>
    %c1_331 = arith.constant 1 : index
    %c2_332 = arith.constant 2 : index
    %c0_333 = arith.constant 0 : index
    %c0_334 = arith.constant 0 : index
    %471 = vector.load %arg6[%c1_331, %c2_332, %c0_333, %c0_334] : memref<2x7x128x128xf32, #tpu.memory_space<vmem>>, vector<1x1x128x128xf32>
    %472 = vector.shape_cast %471 : vector<1x1x128x128xf32> to vector<128x128xf32>
    %cst_335 = arith.constant dense<0.000000e+00> : vector<16x128xf32>
    %473 = tpu.matmul %470, %472, %cst_335 {dimension_numbers = #tpu.dot_dimension_numbers<[1], [0], [0], [1], [0, 0, 1, 1], [], []>} : vector<16x128xf32>, vector<128x128xf32>, vector<16x128xf32> -> vector<16x128xf32>
    %474 = arith.addf %464, %473 : vector<16x128xf32>
    %475 = vector.extract_strided_slice %441 {offsets = [3, 0], sizes = [16, 128], strides = [1, 1]} : vector<22x128xf32> to vector<16x128xf32>
    %c0_336 = arith.constant 0 : index
    %c3_337 = arith.constant 3 : index
    %c0_338 = arith.constant 0 : index
    %c0_339 = arith.constant 0 : index
    %476 = vector.load %arg6[%c0_336, %c3_337, %c0_338, %c0_339] : memref<2x7x128x128xf32, #tpu.memory_space<vmem>>, vector<1x1x128x128xf32>
    %477 = vector.shape_cast %476 : vector<1x1x128x128xf32> to vector<128x128xf32>
    %cst_340 = arith.constant dense<0.000000e+00> : vector<16x128xf32>
    %478 = tpu.matmul %475, %477, %cst_340 {dimension_numbers = #tpu.dot_dimension_numbers<[1], [0], [0], [1], [0, 0, 1, 1], [], []>} : vector<16x128xf32>, vector<128x128xf32>, vector<16x128xf32> -> vector<16x128xf32>
    %479 = arith.addf %469, %478 : vector<16x128xf32>
    %480 = vector.extract_strided_slice %442 {offsets = [3, 0], sizes = [16, 128], strides = [1, 1]} : vector<22x128xf32> to vector<16x128xf32>
    %c1_341 = arith.constant 1 : index
    %c3_342 = arith.constant 3 : index
    %c0_343 = arith.constant 0 : index
    %c0_344 = arith.constant 0 : index
    %481 = vector.load %arg6[%c1_341, %c3_342, %c0_343, %c0_344] : memref<2x7x128x128xf32, #tpu.memory_space<vmem>>, vector<1x1x128x128xf32>
    %482 = vector.shape_cast %481 : vector<1x1x128x128xf32> to vector<128x128xf32>
    %cst_345 = arith.constant dense<0.000000e+00> : vector<16x128xf32>
    %483 = tpu.matmul %480, %482, %cst_345 {dimension_numbers = #tpu.dot_dimension_numbers<[1], [0], [0], [1], [0, 0, 1, 1], [], []>} : vector<16x128xf32>, vector<128x128xf32>, vector<16x128xf32> -> vector<16x128xf32>
    %484 = arith.addf %474, %483 : vector<16x128xf32>
    %485 = vector.extract_strided_slice %441 {offsets = [4, 0], sizes = [16, 128], strides = [1, 1]} : vector<22x128xf32> to vector<16x128xf32>
    %c0_346 = arith.constant 0 : index
    %c4_347 = arith.constant 4 : index
    %c0_348 = arith.constant 0 : index
    %c0_349 = arith.constant 0 : index
    %486 = vector.load %arg6[%c0_346, %c4_347, %c0_348, %c0_349] : memref<2x7x128x128xf32, #tpu.memory_space<vmem>>, vector<1x1x128x128xf32>
    %487 = vector.shape_cast %486 : vector<1x1x128x128xf32> to vector<128x128xf32>
    %cst_350 = arith.constant dense<0.000000e+00> : vector<16x128xf32>
    %488 = tpu.matmul %485, %487, %cst_350 {dimension_numbers = #tpu.dot_dimension_numbers<[1], [0], [0], [1], [0, 0, 1, 1], [], []>} : vector<16x128xf32>, vector<128x128xf32>, vector<16x128xf32> -> vector<16x128xf32>
    %489 = arith.addf %479, %488 : vector<16x128xf32>
    %490 = vector.extract_strided_slice %442 {offsets = [4, 0], sizes = [16, 128], strides = [1, 1]} : vector<22x128xf32> to vector<16x128xf32>
    %c1_351 = arith.constant 1 : index
    %c4_352 = arith.constant 4 : index
    %c0_353 = arith.constant 0 : index
    %c0_354 = arith.constant 0 : index
    %491 = vector.load %arg6[%c1_351, %c4_352, %c0_353, %c0_354] : memref<2x7x128x128xf32, #tpu.memory_space<vmem>>, vector<1x1x128x128xf32>
    %492 = vector.shape_cast %491 : vector<1x1x128x128xf32> to vector<128x128xf32>
    %cst_355 = arith.constant dense<0.000000e+00> : vector<16x128xf32>
    %493 = tpu.matmul %490, %492, %cst_355 {dimension_numbers = #tpu.dot_dimension_numbers<[1], [0], [0], [1], [0, 0, 1, 1], [], []>} : vector<16x128xf32>, vector<128x128xf32>, vector<16x128xf32> -> vector<16x128xf32>
    %494 = arith.addf %484, %493 : vector<16x128xf32>
    %495 = vector.extract_strided_slice %441 {offsets = [5, 0], sizes = [16, 128], strides = [1, 1]} : vector<22x128xf32> to vector<16x128xf32>
    %c0_356 = arith.constant 0 : index
    %c5_357 = arith.constant 5 : index
    %c0_358 = arith.constant 0 : index
    %c0_359 = arith.constant 0 : index
    %496 = vector.load %arg6[%c0_356, %c5_357, %c0_358, %c0_359] : memref<2x7x128x128xf32, #tpu.memory_space<vmem>>, vector<1x1x128x128xf32>
    %497 = vector.shape_cast %496 : vector<1x1x128x128xf32> to vector<128x128xf32>
    %cst_360 = arith.constant dense<0.000000e+00> : vector<16x128xf32>
    %498 = tpu.matmul %495, %497, %cst_360 {dimension_numbers = #tpu.dot_dimension_numbers<[1], [0], [0], [1], [0, 0, 1, 1], [], []>} : vector<16x128xf32>, vector<128x128xf32>, vector<16x128xf32> -> vector<16x128xf32>
    %499 = arith.addf %489, %498 : vector<16x128xf32>
    %500 = vector.extract_strided_slice %442 {offsets = [5, 0], sizes = [16, 128], strides = [1, 1]} : vector<22x128xf32> to vector<16x128xf32>
    %c1_361 = arith.constant 1 : index
    %c5_362 = arith.constant 5 : index
    %c0_363 = arith.constant 0 : index
    %c0_364 = arith.constant 0 : index
    %501 = vector.load %arg6[%c1_361, %c5_362, %c0_363, %c0_364] : memref<2x7x128x128xf32, #tpu.memory_space<vmem>>, vector<1x1x128x128xf32>
    %502 = vector.shape_cast %501 : vector<1x1x128x128xf32> to vector<128x128xf32>
    %cst_365 = arith.constant dense<0.000000e+00> : vector<16x128xf32>
    %503 = tpu.matmul %500, %502, %cst_365 {dimension_numbers = #tpu.dot_dimension_numbers<[1], [0], [0], [1], [0, 0, 1, 1], [], []>} : vector<16x128xf32>, vector<128x128xf32>, vector<16x128xf32> -> vector<16x128xf32>
    %504 = arith.addf %494, %503 : vector<16x128xf32>
    %505 = vector.extract_strided_slice %441 {offsets = [6, 0], sizes = [16, 128], strides = [1, 1]} : vector<22x128xf32> to vector<16x128xf32>
    %c0_366 = arith.constant 0 : index
    %c6_367 = arith.constant 6 : index
    %c0_368 = arith.constant 0 : index
    %c0_369 = arith.constant 0 : index
    %506 = vector.load %arg6[%c0_366, %c6_367, %c0_368, %c0_369] : memref<2x7x128x128xf32, #tpu.memory_space<vmem>>, vector<1x1x128x128xf32>
    %507 = vector.shape_cast %506 : vector<1x1x128x128xf32> to vector<128x128xf32>
    %cst_370 = arith.constant dense<0.000000e+00> : vector<16x128xf32>
    %508 = tpu.matmul %505, %507, %cst_370 {dimension_numbers = #tpu.dot_dimension_numbers<[1], [0], [0], [1], [0, 0, 1, 1], [], []>} : vector<16x128xf32>, vector<128x128xf32>, vector<16x128xf32> -> vector<16x128xf32>
    %509 = arith.addf %499, %508 : vector<16x128xf32>
    %510 = vector.extract_strided_slice %442 {offsets = [6, 0], sizes = [16, 128], strides = [1, 1]} : vector<22x128xf32> to vector<16x128xf32>
    %c1_371 = arith.constant 1 : index
    %c6_372 = arith.constant 6 : index
    %c0_373 = arith.constant 0 : index
    %c0_374 = arith.constant 0 : index
    %511 = vector.load %arg6[%c1_371, %c6_372, %c0_373, %c0_374] : memref<2x7x128x128xf32, #tpu.memory_space<vmem>>, vector<1x1x128x128xf32>
    %512 = vector.shape_cast %511 : vector<1x1x128x128xf32> to vector<128x128xf32>
    %cst_375 = arith.constant dense<0.000000e+00> : vector<16x128xf32>
    %513 = tpu.matmul %510, %512, %cst_375 {dimension_numbers = #tpu.dot_dimension_numbers<[1], [0], [0], [1], [0, 0, 1, 1], [], []>} : vector<16x128xf32>, vector<128x128xf32>, vector<16x128xf32> -> vector<16x128xf32>
    %514 = arith.addf %504, %513 : vector<16x128xf32>
    %515 = arith.addf %509, %514 : vector<16x128xf32>
    %c0_376 = arith.constant 0 : index
    %c0_377 = arith.constant 0 : index
    %516 = memref.load %arg7[%c0_376, %c0_377] : memref<1x1xf32, #tpu.memory_space<smem>>
    %517 = vector.broadcast %516 : f32 to vector<16x128xf32>
    %518 = arith.addf %515, %517 : vector<16x128xf32>
    %519 = arith.negf %518 : vector<16x128xf32>
    %520 = math.exp %519 : vector<16x128xf32>
    %cst_378 = arith.constant 1.000000e+00 : f32
    %521 = vector.broadcast %cst_378 : f32 to vector<16x128xf32>
    %522 = arith.addf %521, %520 : vector<16x128xf32>
    %523 = arith.divf %521, %522 : vector<16x128xf32>
    %524 = vector.extract_strided_slice %211 {offsets = [0, 0], sizes = [1, 1], strides = [1, 1]} : vector<1x32xf32> to vector<1x1xf32>
    %c0_379 = arith.constant 0 : index
    %c0_380 = arith.constant 0 : index
    %c0_381 = arith.constant 0 : index
    %c0_382 = arith.constant 0 : index
    %525 = vector.load %arg1[%c0_379, %c0_380, %c0_381, %c0_382] : memref<1x32x16x128xf32, #tpu.memory_space<vmem>>, vector<1x1x16x128xf32>
    %526 = vector.shape_cast %525 : vector<1x1x16x128xf32> to vector<16x128xf32>
    %527 = vector.broadcast %524 : vector<1x1xf32> to vector<16x128xf32>
    %528 = arith.mulf %527, %523 : vector<16x128xf32>
    %529 = arith.mulf %526, %528 : vector<16x128xf32>
    %c0_383 = arith.constant 0 : index
    %c0_384 = arith.constant 0 : index
    %c0_385 = arith.constant 0 : index
    %c0_386 = arith.constant 0 : index
    %530 = vector.load %arg8[%c0_383, %c0_384, %c0_385, %c0_386] : memref<1x32x16x128xf32, #tpu.memory_space<vmem>>, vector<1x1x16x128xf32>
    %531 = vector.shape_cast %530 : vector<1x1x16x128xf32> to vector<16x128xf32>
    %532 = vector.shape_cast %529 : vector<16x128xf32> to vector<1x1x16x128xf32>
    tpu.vector_store %arg8[%c0_383, %c0_384, %c0_385, %c0_386], %532 {strides = array<i32>} : memref<1x32x16x128xf32, #tpu.memory_space<vmem>>, vector<1x1x16x128xf32>,
    %533 = vector.extract_strided_slice %211 {offsets = [0, 1], sizes = [1, 1], strides = [1, 1]} : vector<1x32xf32> to vector<1x1xf32>
    %c0_387 = arith.constant 0 : index
    %c1_388 = arith.constant 1 : index
    %c0_389 = arith.constant 0 : index
    %c0_390 = arith.constant 0 : index
    %534 = vector.load %arg1[%c0_387, %c1_388, %c0_389, %c0_390] : memref<1x32x16x128xf32, #tpu.memory_space<vmem>>, vector<1x1x16x128xf32>
    %535 = vector.shape_cast %534 : vector<1x1x16x128xf32> to vector<16x128xf32>
    %536 = vector.broadcast %533 : vector<1x1xf32> to vector<16x128xf32>
    %537 = arith.mulf %536, %523 : vector<16x128xf32>
    %538 = arith.mulf %535, %537 : vector<16x128xf32>
    %c0_391 = arith.constant 0 : index
    %c1_392 = arith.constant 1 : index
    %c0_393 = arith.constant 0 : index
    %c0_394 = arith.constant 0 : index
    %539 = vector.load %arg8[%c0_391, %c1_392, %c0_393, %c0_394] : memref<1x32x16x128xf32, #tpu.memory_space<vmem>>, vector<1x1x16x128xf32>
    %540 = vector.shape_cast %539 : vector<1x1x16x128xf32> to vector<16x128xf32>
    %541 = vector.shape_cast %538 : vector<16x128xf32> to vector<1x1x16x128xf32>
    tpu.vector_store %arg8[%c0_391, %c1_392, %c0_393, %c0_394], %541 {strides = array<i32>} : memref<1x32x16x128xf32, #tpu.memory_space<vmem>>, vector<1x1x16x128xf32>,
    %542 = vector.extract_strided_slice %211 {offsets = [0, 2], sizes = [1, 1], strides = [1, 1]} : vector<1x32xf32> to vector<1x1xf32>
    %c0_395 = arith.constant 0 : index
    %c2_396 = arith.constant 2 : index
    %c0_397 = arith.constant 0 : index
    %c0_398 = arith.constant 0 : index
    %543 = vector.load %arg1[%c0_395, %c2_396, %c0_397, %c0_398] : memref<1x32x16x128xf32, #tpu.memory_space<vmem>>, vector<1x1x16x128xf32>
    %544 = vector.shape_cast %543 : vector<1x1x16x128xf32> to vector<16x128xf32>
    %545 = vector.broadcast %542 : vector<1x1xf32> to vector<16x128xf32>
    %546 = arith.mulf %545, %523 : vector<16x128xf32>
    %547 = arith.mulf %544, %546 : vector<16x128xf32>
    %c0_399 = arith.constant 0 : index
    %c2_400 = arith.constant 2 : index
    %c0_401 = arith.constant 0 : index
    %c0_402 = arith.constant 0 : index
    %548 = vector.load %arg8[%c0_399, %c2_400, %c0_401, %c0_402] : memref<1x32x16x128xf32, #tpu.memory_space<vmem>>, vector<1x1x16x128xf32>
    %549 = vector.shape_cast %548 : vector<1x1x16x128xf32> to vector<16x128xf32>
    %550 = vector.shape_cast %547 : vector<16x128xf32> to vector<1x1x16x128xf32>
    tpu.vector_store %arg8[%c0_399, %c2_400, %c0_401, %c0_402], %550 {strides = array<i32>} : memref<1x32x16x128xf32, #tpu.memory_space<vmem>>, vector<1x1x16x128xf32>,
    %551 = vector.extract_strided_slice %211 {offsets = [0, 3], sizes = [1, 1], strides = [1, 1]} : vector<1x32xf32> to vector<1x1xf32>
    %c0_403 = arith.constant 0 : index
    %c3_404 = arith.constant 3 : index
    %c0_405 = arith.constant 0 : index
    %c0_406 = arith.constant 0 : index
    %552 = vector.load %arg1[%c0_403, %c3_404, %c0_405, %c0_406] : memref<1x32x16x128xf32, #tpu.memory_space<vmem>>, vector<1x1x16x128xf32>
    %553 = vector.shape_cast %552 : vector<1x1x16x128xf32> to vector<16x128xf32>
    %554 = vector.broadcast %551 : vector<1x1xf32> to vector<16x128xf32>
    %555 = arith.mulf %554, %523 : vector<16x128xf32>
    %556 = arith.mulf %553, %555 : vector<16x128xf32>
    %c0_407 = arith.constant 0 : index
    %c3_408 = arith.constant 3 : index
    %c0_409 = arith.constant 0 : index
    %c0_410 = arith.constant 0 : index
    %557 = vector.load %arg8[%c0_407, %c3_408, %c0_409, %c0_410] : memref<1x32x16x128xf32, #tpu.memory_space<vmem>>, vector<1x1x16x128xf32>
    %558 = vector.shape_cast %557 : vector<1x1x16x128xf32> to vector<16x128xf32>
    %559 = vector.shape_cast %556 : vector<16x128xf32> to vector<1x1x16x128xf32>
    tpu.vector_store %arg8[%c0_407, %c3_408, %c0_409, %c0_410], %559 {strides = array<i32>} : memref<1x32x16x128xf32, #tpu.memory_space<vmem>>, vector<1x1x16x128xf32>,
    %560 = vector.extract_strided_slice %211 {offsets = [0, 4], sizes = [1, 1], strides = [1, 1]} : vector<1x32xf32> to vector<1x1xf32>
    %c0_411 = arith.constant 0 : index
    %c4_412 = arith.constant 4 : index
    %c0_413 = arith.constant 0 : index
    %c0_414 = arith.constant 0 : index
    %561 = vector.load %arg1[%c0_411, %c4_412, %c0_413, %c0_414] : memref<1x32x16x128xf32, #tpu.memory_space<vmem>>, vector<1x1x16x128xf32>
    %562 = vector.shape_cast %561 : vector<1x1x16x128xf32> to vector<16x128xf32>
    %563 = vector.broadcast %560 : vector<1x1xf32> to vector<16x128xf32>
    %564 = arith.mulf %563, %523 : vector<16x128xf32>
    %565 = arith.mulf %562, %564 : vector<16x128xf32>
    %c0_415 = arith.constant 0 : index
    %c4_416 = arith.constant 4 : index
    %c0_417 = arith.constant 0 : index
    %c0_418 = arith.constant 0 : index
    %566 = vector.load %arg8[%c0_415, %c4_416, %c0_417, %c0_418] : memref<1x32x16x128xf32, #tpu.memory_space<vmem>>, vector<1x1x16x128xf32>
    %567 = vector.shape_cast %566 : vector<1x1x16x128xf32> to vector<16x128xf32>
    %568 = vector.shape_cast %565 : vector<16x128xf32> to vector<1x1x16x128xf32>
    tpu.vector_store %arg8[%c0_415, %c4_416, %c0_417, %c0_418], %568 {strides = array<i32>} : memref<1x32x16x128xf32, #tpu.memory_space<vmem>>, vector<1x1x16x128xf32>,
    %569 = vector.extract_strided_slice %211 {offsets = [0, 5], sizes = [1, 1], strides = [1, 1]} : vector<1x32xf32> to vector<1x1xf32>
    %c0_419 = arith.constant 0 : index
    %c5_420 = arith.constant 5 : index
    %c0_421 = arith.constant 0 : index
    %c0_422 = arith.constant 0 : index
    %570 = vector.load %arg1[%c0_419, %c5_420, %c0_421, %c0_422] : memref<1x32x16x128xf32, #tpu.memory_space<vmem>>, vector<1x1x16x128xf32>
    %571 = vector.shape_cast %570 : vector<1x1x16x128xf32> to vector<16x128xf32>
    %572 = vector.broadcast %569 : vector<1x1xf32> to vector<16x128xf32>
    %573 = arith.mulf %572, %523 : vector<16x128xf32>
    %574 = arith.mulf %571, %573 : vector<16x128xf32>
    %c0_423 = arith.constant 0 : index
    %c5_424 = arith.constant 5 : index
    %c0_425 = arith.constant 0 : index
    %c0_426 = arith.constant 0 : index
    %575 = vector.load %arg8[%c0_423, %c5_424, %c0_425, %c0_426] : memref<1x32x16x128xf32, #tpu.memory_space<vmem>>, vector<1x1x16x128xf32>
    %576 = vector.shape_cast %575 : vector<1x1x16x128xf32> to vector<16x128xf32>
    %577 = vector.shape_cast %574 : vector<16x128xf32> to vector<1x1x16x128xf32>
    tpu.vector_store %arg8[%c0_423, %c5_424, %c0_425, %c0_426], %577 {strides = array<i32>} : memref<1x32x16x128xf32, #tpu.memory_space<vmem>>, vector<1x1x16x128xf32>,
    %578 = vector.extract_strided_slice %211 {offsets = [0, 6], sizes = [1, 1], strides = [1, 1]} : vector<1x32xf32> to vector<1x1xf32>
    %c0_427 = arith.constant 0 : index
    %c6_428 = arith.constant 6 : index
    %c0_429 = arith.constant 0 : index
    %c0_430 = arith.constant 0 : index
    %579 = vector.load %arg1[%c0_427, %c6_428, %c0_429, %c0_430] : memref<1x32x16x128xf32, #tpu.memory_space<vmem>>, vector<1x1x16x128xf32>
    %580 = vector.shape_cast %579 : vector<1x1x16x128xf32> to vector<16x128xf32>
    %581 = vector.broadcast %578 : vector<1x1xf32> to vector<16x128xf32>
    %582 = arith.mulf %581, %523 : vector<16x128xf32>
    %583 = arith.mulf %580, %582 : vector<16x128xf32>
    %c0_431 = arith.constant 0 : index
    %c6_432 = arith.constant 6 : index
    %c0_433 = arith.constant 0 : index
    %c0_434 = arith.constant 0 : index
    %584 = vector.load %arg8[%c0_431, %c6_432, %c0_433, %c0_434] : memref<1x32x16x128xf32, #tpu.memory_space<vmem>>, vector<1x1x16x128xf32>
    %585 = vector.shape_cast %584 : vector<1x1x16x128xf32> to vector<16x128xf32>
    %586 = vector.shape_cast %583 : vector<16x128xf32> to vector<1x1x16x128xf32>
    tpu.vector_store %arg8[%c0_431, %c6_432, %c0_433, %c0_434], %586 {strides = array<i32>} : memref<1x32x16x128xf32, #tpu.memory_space<vmem>>, vector<1x1x16x128xf32>,
    %587 = vector.extract_strided_slice %211 {offsets = [0, 7], sizes = [1, 1], strides = [1, 1]} : vector<1x32xf32> to vector<1x1xf32>
    %c0_435 = arith.constant 0 : index
    %c7_436 = arith.constant 7 : index
    %c0_437 = arith.constant 0 : index
    %c0_438 = arith.constant 0 : index
    %588 = vector.load %arg1[%c0_435, %c7_436, %c0_437, %c0_438] : memref<1x32x16x128xf32, #tpu.memory_space<vmem>>, vector<1x1x16x128xf32>
    %589 = vector.shape_cast %588 : vector<1x1x16x128xf32> to vector<16x128xf32>
    %590 = vector.broadcast %587 : vector<1x1xf32> to vector<16x128xf32>
    %591 = arith.mulf %590, %523 : vector<16x128xf32>
    %592 = arith.mulf %589, %591 : vector<16x128xf32>
    %c0_439 = arith.constant 0 : index
    %c7_440 = arith.constant 7 : index
    %c0_441 = arith.constant 0 : index
    %c0_442 = arith.constant 0 : index
    %593 = vector.load %arg8[%c0_439, %c7_440, %c0_441, %c0_442] : memref<1x32x16x128xf32, #tpu.memory_space<vmem>>, vector<1x1x16x128xf32>
    %594 = vector.shape_cast %593 : vector<1x1x16x128xf32> to vector<16x128xf32>
    %595 = vector.shape_cast %592 : vector<16x128xf32> to vector<1x1x16x128xf32>
    tpu.vector_store %arg8[%c0_439, %c7_440, %c0_441, %c0_442], %595 {strides = array<i32>} : memref<1x32x16x128xf32, #tpu.memory_space<vmem>>, vector<1x1x16x128xf32>,
    %596 = vector.extract_strided_slice %211 {offsets = [0, 8], sizes = [1, 1], strides = [1, 1]} : vector<1x32xf32> to vector<1x1xf32>
    %c0_443 = arith.constant 0 : index
    %c8_444 = arith.constant 8 : index
    %c0_445 = arith.constant 0 : index
    %c0_446 = arith.constant 0 : index
    %597 = vector.load %arg1[%c0_443, %c8_444, %c0_445, %c0_446] : memref<1x32x16x128xf32, #tpu.memory_space<vmem>>, vector<1x1x16x128xf32>
    %598 = vector.shape_cast %597 : vector<1x1x16x128xf32> to vector<16x128xf32>
    %599 = vector.broadcast %596 : vector<1x1xf32> to vector<16x128xf32>
    %600 = arith.mulf %599, %523 : vector<16x128xf32>
    %601 = arith.mulf %598, %600 : vector<16x128xf32>
    %c0_447 = arith.constant 0 : index
    %c8_448 = arith.constant 8 : index
    %c0_449 = arith.constant 0 : index
    %c0_450 = arith.constant 0 : index
    %602 = vector.load %arg8[%c0_447, %c8_448, %c0_449, %c0_450] : memref<1x32x16x128xf32, #tpu.memory_space<vmem>>, vector<1x1x16x128xf32>
    %603 = vector.shape_cast %602 : vector<1x1x16x128xf32> to vector<16x128xf32>
    %604 = vector.shape_cast %601 : vector<16x128xf32> to vector<1x1x16x128xf32>
    tpu.vector_store %arg8[%c0_447, %c8_448, %c0_449, %c0_450], %604 {strides = array<i32>} : memref<1x32x16x128xf32, #tpu.memory_space<vmem>>, vector<1x1x16x128xf32>,
    %605 = vector.extract_strided_slice %211 {offsets = [0, 9], sizes = [1, 1], strides = [1, 1]} : vector<1x32xf32> to vector<1x1xf32>
    %c0_451 = arith.constant 0 : index
    %c9_452 = arith.constant 9 : index
    %c0_453 = arith.constant 0 : index
    %c0_454 = arith.constant 0 : index
    %606 = vector.load %arg1[%c0_451, %c9_452, %c0_453, %c0_454] : memref<1x32x16x128xf32, #tpu.memory_space<vmem>>, vector<1x1x16x128xf32>
    %607 = vector.shape_cast %606 : vector<1x1x16x128xf32> to vector<16x128xf32>
    %608 = vector.broadcast %605 : vector<1x1xf32> to vector<16x128xf32>
    %609 = arith.mulf %608, %523 : vector<16x128xf32>
    %610 = arith.mulf %607, %609 : vector<16x128xf32>
    %c0_455 = arith.constant 0 : index
    %c9_456 = arith.constant 9 : index
    %c0_457 = arith.constant 0 : index
    %c0_458 = arith.constant 0 : index
    %611 = vector.load %arg8[%c0_455, %c9_456, %c0_457, %c0_458] : memref<1x32x16x128xf32, #tpu.memory_space<vmem>>, vector<1x1x16x128xf32>
    %612 = vector.shape_cast %611 : vector<1x1x16x128xf32> to vector<16x128xf32>
    %613 = vector.shape_cast %610 : vector<16x128xf32> to vector<1x1x16x128xf32>
    tpu.vector_store %arg8[%c0_455, %c9_456, %c0_457, %c0_458], %613 {strides = array<i32>} : memref<1x32x16x128xf32, #tpu.memory_space<vmem>>, vector<1x1x16x128xf32>,
    %614 = vector.extract_strided_slice %211 {offsets = [0, 10], sizes = [1, 1], strides = [1, 1]} : vector<1x32xf32> to vector<1x1xf32>
    %c0_459 = arith.constant 0 : index
    %c10_460 = arith.constant 10 : index
    %c0_461 = arith.constant 0 : index
    %c0_462 = arith.constant 0 : index
    %615 = vector.load %arg1[%c0_459, %c10_460, %c0_461, %c0_462] : memref<1x32x16x128xf32, #tpu.memory_space<vmem>>, vector<1x1x16x128xf32>
    %616 = vector.shape_cast %615 : vector<1x1x16x128xf32> to vector<16x128xf32>
    %617 = vector.broadcast %614 : vector<1x1xf32> to vector<16x128xf32>
    %618 = arith.mulf %617, %523 : vector<16x128xf32>
    %619 = arith.mulf %616, %618 : vector<16x128xf32>
    %c0_463 = arith.constant 0 : index
    %c10_464 = arith.constant 10 : index
    %c0_465 = arith.constant 0 : index
    %c0_466 = arith.constant 0 : index
    %620 = vector.load %arg8[%c0_463, %c10_464, %c0_465, %c0_466] : memref<1x32x16x128xf32, #tpu.memory_space<vmem>>, vector<1x1x16x128xf32>
    %621 = vector.shape_cast %620 : vector<1x1x16x128xf32> to vector<16x128xf32>
    %622 = vector.shape_cast %619 : vector<16x128xf32> to vector<1x1x16x128xf32>
    tpu.vector_store %arg8[%c0_463, %c10_464, %c0_465, %c0_466], %622 {strides = array<i32>} : memref<1x32x16x128xf32, #tpu.memory_space<vmem>>, vector<1x1x16x128xf32>,
    %623 = vector.extract_strided_slice %211 {offsets = [0, 11], sizes = [1, 1], strides = [1, 1]} : vector<1x32xf32> to vector<1x1xf32>
    %c0_467 = arith.constant 0 : index
    %c11_468 = arith.constant 11 : index
    %c0_469 = arith.constant 0 : index
    %c0_470 = arith.constant 0 : index
    %624 = vector.load %arg1[%c0_467, %c11_468, %c0_469, %c0_470] : memref<1x32x16x128xf32, #tpu.memory_space<vmem>>, vector<1x1x16x128xf32>
    %625 = vector.shape_cast %624 : vector<1x1x16x128xf32> to vector<16x128xf32>
    %626 = vector.broadcast %623 : vector<1x1xf32> to vector<16x128xf32>
    %627 = arith.mulf %626, %523 : vector<16x128xf32>
    %628 = arith.mulf %625, %627 : vector<16x128xf32>
    %c0_471 = arith.constant 0 : index
    %c11_472 = arith.constant 11 : index
    %c0_473 = arith.constant 0 : index
    %c0_474 = arith.constant 0 : index
    %629 = vector.load %arg8[%c0_471, %c11_472, %c0_473, %c0_474] : memref<1x32x16x128xf32, #tpu.memory_space<vmem>>, vector<1x1x16x128xf32>
    %630 = vector.shape_cast %629 : vector<1x1x16x128xf32> to vector<16x128xf32>
    %631 = vector.shape_cast %628 : vector<16x128xf32> to vector<1x1x16x128xf32>
    tpu.vector_store %arg8[%c0_471, %c11_472, %c0_473, %c0_474], %631 {strides = array<i32>} : memref<1x32x16x128xf32, #tpu.memory_space<vmem>>, vector<1x1x16x128xf32>,
    %632 = vector.extract_strided_slice %211 {offsets = [0, 12], sizes = [1, 1], strides = [1, 1]} : vector<1x32xf32> to vector<1x1xf32>
    %c0_475 = arith.constant 0 : index
    %c12_476 = arith.constant 12 : index
    %c0_477 = arith.constant 0 : index
    %c0_478 = arith.constant 0 : index
    %633 = vector.load %arg1[%c0_475, %c12_476, %c0_477, %c0_478] : memref<1x32x16x128xf32, #tpu.memory_space<vmem>>, vector<1x1x16x128xf32>
    %634 = vector.shape_cast %633 : vector<1x1x16x128xf32> to vector<16x128xf32>
    %635 = vector.broadcast %632 : vector<1x1xf32> to vector<16x128xf32>
    %636 = arith.mulf %635, %523 : vector<16x128xf32>
    %637 = arith.mulf %634, %636 : vector<16x128xf32>
    %c0_479 = arith.constant 0 : index
    %c12_480 = arith.constant 12 : index
    %c0_481 = arith.constant 0 : index
    %c0_482 = arith.constant 0 : index
    %638 = vector.load %arg8[%c0_479, %c12_480, %c0_481, %c0_482] : memref<1x32x16x128xf32, #tpu.memory_space<vmem>>, vector<1x1x16x128xf32>
    %639 = vector.shape_cast %638 : vector<1x1x16x128xf32> to vector<16x128xf32>
    %640 = vector.shape_cast %637 : vector<16x128xf32> to vector<1x1x16x128xf32>
    tpu.vector_store %arg8[%c0_479, %c12_480, %c0_481, %c0_482], %640 {strides = array<i32>} : memref<1x32x16x128xf32, #tpu.memory_space<vmem>>, vector<1x1x16x128xf32>,
    %641 = vector.extract_strided_slice %211 {offsets = [0, 13], sizes = [1, 1], strides = [1, 1]} : vector<1x32xf32> to vector<1x1xf32>
    %c0_483 = arith.constant 0 : index
    %c13_484 = arith.constant 13 : index
    %c0_485 = arith.constant 0 : index
    %c0_486 = arith.constant 0 : index
    %642 = vector.load %arg1[%c0_483, %c13_484, %c0_485, %c0_486] : memref<1x32x16x128xf32, #tpu.memory_space<vmem>>, vector<1x1x16x128xf32>
    %643 = vector.shape_cast %642 : vector<1x1x16x128xf32> to vector<16x128xf32>
    %644 = vector.broadcast %641 : vector<1x1xf32> to vector<16x128xf32>
    %645 = arith.mulf %644, %523 : vector<16x128xf32>
    %646 = arith.mulf %643, %645 : vector<16x128xf32>
    %c0_487 = arith.constant 0 : index
    %c13_488 = arith.constant 13 : index
    %c0_489 = arith.constant 0 : index
    %c0_490 = arith.constant 0 : index
    %647 = vector.load %arg8[%c0_487, %c13_488, %c0_489, %c0_490] : memref<1x32x16x128xf32, #tpu.memory_space<vmem>>, vector<1x1x16x128xf32>
    %648 = vector.shape_cast %647 : vector<1x1x16x128xf32> to vector<16x128xf32>
    %649 = vector.shape_cast %646 : vector<16x128xf32> to vector<1x1x16x128xf32>
    tpu.vector_store %arg8[%c0_487, %c13_488, %c0_489, %c0_490], %649 {strides = array<i32>} : memref<1x32x16x128xf32, #tpu.memory_space<vmem>>, vector<1x1x16x128xf32>,
    %650 = vector.extract_strided_slice %211 {offsets = [0, 14], sizes = [1, 1], strides = [1, 1]} : vector<1x32xf32> to vector<1x1xf32>
    %c0_491 = arith.constant 0 : index
    %c14_492 = arith.constant 14 : index
    %c0_493 = arith.constant 0 : index
    %c0_494 = arith.constant 0 : index
    %651 = vector.load %arg1[%c0_491, %c14_492, %c0_493, %c0_494] : memref<1x32x16x128xf32, #tpu.memory_space<vmem>>, vector<1x1x16x128xf32>
    %652 = vector.shape_cast %651 : vector<1x1x16x128xf32> to vector<16x128xf32>
    %653 = vector.broadcast %650 : vector<1x1xf32> to vector<16x128xf32>
    %654 = arith.mulf %653, %523 : vector<16x128xf32>
    %655 = arith.mulf %652, %654 : vector<16x128xf32>
    %c0_495 = arith.constant 0 : index
    %c14_496 = arith.constant 14 : index
    %c0_497 = arith.constant 0 : index
    %c0_498 = arith.constant 0 : index
    %656 = vector.load %arg8[%c0_495, %c14_496, %c0_497, %c0_498] : memref<1x32x16x128xf32, #tpu.memory_space<vmem>>, vector<1x1x16x128xf32>
    %657 = vector.shape_cast %656 : vector<1x1x16x128xf32> to vector<16x128xf32>
    %658 = vector.shape_cast %655 : vector<16x128xf32> to vector<1x1x16x128xf32>
    tpu.vector_store %arg8[%c0_495, %c14_496, %c0_497, %c0_498], %658 {strides = array<i32>} : memref<1x32x16x128xf32, #tpu.memory_space<vmem>>, vector<1x1x16x128xf32>,
    %659 = vector.extract_strided_slice %211 {offsets = [0, 15], sizes = [1, 1], strides = [1, 1]} : vector<1x32xf32> to vector<1x1xf32>
    %c0_499 = arith.constant 0 : index
    %c15_500 = arith.constant 15 : index
    %c0_501 = arith.constant 0 : index
    %c0_502 = arith.constant 0 : index
    %660 = vector.load %arg1[%c0_499, %c15_500, %c0_501, %c0_502] : memref<1x32x16x128xf32, #tpu.memory_space<vmem>>, vector<1x1x16x128xf32>
    %661 = vector.shape_cast %660 : vector<1x1x16x128xf32> to vector<16x128xf32>
    %662 = vector.broadcast %659 : vector<1x1xf32> to vector<16x128xf32>
    %663 = arith.mulf %662, %523 : vector<16x128xf32>
    %664 = arith.mulf %661, %663 : vector<16x128xf32>
    %c0_503 = arith.constant 0 : index
    %c15_504 = arith.constant 15 : index
    %c0_505 = arith.constant 0 : index
    %c0_506 = arith.constant 0 : index
    %665 = vector.load %arg8[%c0_503, %c15_504, %c0_505, %c0_506] : memref<1x32x16x128xf32, #tpu.memory_space<vmem>>, vector<1x1x16x128xf32>
    %666 = vector.shape_cast %665 : vector<1x1x16x128xf32> to vector<16x128xf32>
    %667 = vector.shape_cast %664 : vector<16x128xf32> to vector<1x1x16x128xf32>
    tpu.vector_store %arg8[%c0_503, %c15_504, %c0_505, %c0_506], %667 {strides = array<i32>} : memref<1x32x16x128xf32, #tpu.memory_space<vmem>>, vector<1x1x16x128xf32>,
    %668 = vector.extract_strided_slice %211 {offsets = [0, 16], sizes = [1, 1], strides = [1, 1]} : vector<1x32xf32> to vector<1x1xf32>
    %c0_507 = arith.constant 0 : index
    %c16_508 = arith.constant 16 : index
    %c0_509 = arith.constant 0 : index
    %c0_510 = arith.constant 0 : index
    %669 = vector.load %arg1[%c0_507, %c16_508, %c0_509, %c0_510] : memref<1x32x16x128xf32, #tpu.memory_space<vmem>>, vector<1x1x16x128xf32>
    %670 = vector.shape_cast %669 : vector<1x1x16x128xf32> to vector<16x128xf32>
    %671 = vector.broadcast %668 : vector<1x1xf32> to vector<16x128xf32>
    %672 = arith.mulf %671, %523 : vector<16x128xf32>
    %673 = arith.mulf %670, %672 : vector<16x128xf32>
    %c0_511 = arith.constant 0 : index
    %c16_512 = arith.constant 16 : index
    %c0_513 = arith.constant 0 : index
    %c0_514 = arith.constant 0 : index
    %674 = vector.load %arg8[%c0_511, %c16_512, %c0_513, %c0_514] : memref<1x32x16x128xf32, #tpu.memory_space<vmem>>, vector<1x1x16x128xf32>
    %675 = vector.shape_cast %674 : vector<1x1x16x128xf32> to vector<16x128xf32>
    %676 = vector.shape_cast %673 : vector<16x128xf32> to vector<1x1x16x128xf32>
    tpu.vector_store %arg8[%c0_511, %c16_512, %c0_513, %c0_514], %676 {strides = array<i32>} : memref<1x32x16x128xf32, #tpu.memory_space<vmem>>, vector<1x1x16x128xf32>,
    %677 = vector.extract_strided_slice %211 {offsets = [0, 17], sizes = [1, 1], strides = [1, 1]} : vector<1x32xf32> to vector<1x1xf32>
    %c0_515 = arith.constant 0 : index
    %c17_516 = arith.constant 17 : index
    %c0_517 = arith.constant 0 : index
    %c0_518 = arith.constant 0 : index
    %678 = vector.load %arg1[%c0_515, %c17_516, %c0_517, %c0_518] : memref<1x32x16x128xf32, #tpu.memory_space<vmem>>, vector<1x1x16x128xf32>
    %679 = vector.shape_cast %678 : vector<1x1x16x128xf32> to vector<16x128xf32>
    %680 = vector.broadcast %677 : vector<1x1xf32> to vector<16x128xf32>
    %681 = arith.mulf %680, %523 : vector<16x128xf32>
    %682 = arith.mulf %679, %681 : vector<16x128xf32>
    %c0_519 = arith.constant 0 : index
    %c17_520 = arith.constant 17 : index
    %c0_521 = arith.constant 0 : index
    %c0_522 = arith.constant 0 : index
    %683 = vector.load %arg8[%c0_519, %c17_520, %c0_521, %c0_522] : memref<1x32x16x128xf32, #tpu.memory_space<vmem>>, vector<1x1x16x128xf32>
    %684 = vector.shape_cast %683 : vector<1x1x16x128xf32> to vector<16x128xf32>
    %685 = vector.shape_cast %682 : vector<16x128xf32> to vector<1x1x16x128xf32>
    tpu.vector_store %arg8[%c0_519, %c17_520, %c0_521, %c0_522], %685 {strides = array<i32>} : memref<1x32x16x128xf32, #tpu.memory_space<vmem>>, vector<1x1x16x128xf32>,
    %686 = vector.extract_strided_slice %211 {offsets = [0, 18], sizes = [1, 1], strides = [1, 1]} : vector<1x32xf32> to vector<1x1xf32>
    %c0_523 = arith.constant 0 : index
    %c18_524 = arith.constant 18 : index
    %c0_525 = arith.constant 0 : index
    %c0_526 = arith.constant 0 : index
    %687 = vector.load %arg1[%c0_523, %c18_524, %c0_525, %c0_526] : memref<1x32x16x128xf32, #tpu.memory_space<vmem>>, vector<1x1x16x128xf32>
    %688 = vector.shape_cast %687 : vector<1x1x16x128xf32> to vector<16x128xf32>
    %689 = vector.broadcast %686 : vector<1x1xf32> to vector<16x128xf32>
    %690 = arith.mulf %689, %523 : vector<16x128xf32>
    %691 = arith.mulf %688, %690 : vector<16x128xf32>
    %c0_527 = arith.constant 0 : index
    %c18_528 = arith.constant 18 : index
    %c0_529 = arith.constant 0 : index
    %c0_530 = arith.constant 0 : index
    %692 = vector.load %arg8[%c0_527, %c18_528, %c0_529, %c0_530] : memref<1x32x16x128xf32, #tpu.memory_space<vmem>>, vector<1x1x16x128xf32>
    %693 = vector.shape_cast %692 : vector<1x1x16x128xf32> to vector<16x128xf32>
    %694 = vector.shape_cast %691 : vector<16x128xf32> to vector<1x1x16x128xf32>
    tpu.vector_store %arg8[%c0_527, %c18_528, %c0_529, %c0_530], %694 {strides = array<i32>} : memref<1x32x16x128xf32, #tpu.memory_space<vmem>>, vector<1x1x16x128xf32>,
    %695 = vector.extract_strided_slice %211 {offsets = [0, 19], sizes = [1, 1], strides = [1, 1]} : vector<1x32xf32> to vector<1x1xf32>
    %c0_531 = arith.constant 0 : index
    %c19_532 = arith.constant 19 : index
    %c0_533 = arith.constant 0 : index
    %c0_534 = arith.constant 0 : index
    %696 = vector.load %arg1[%c0_531, %c19_532, %c0_533, %c0_534] : memref<1x32x16x128xf32, #tpu.memory_space<vmem>>, vector<1x1x16x128xf32>
    %697 = vector.shape_cast %696 : vector<1x1x16x128xf32> to vector<16x128xf32>
    %698 = vector.broadcast %695 : vector<1x1xf32> to vector<16x128xf32>
    %699 = arith.mulf %698, %523 : vector<16x128xf32>
    %700 = arith.mulf %697, %699 : vector<16x128xf32>
    %c0_535 = arith.constant 0 : index
    %c19_536 = arith.constant 19 : index
    %c0_537 = arith.constant 0 : index
    %c0_538 = arith.constant 0 : index
    %701 = vector.load %arg8[%c0_535, %c19_536, %c0_537, %c0_538] : memref<1x32x16x128xf32, #tpu.memory_space<vmem>>, vector<1x1x16x128xf32>
    %702 = vector.shape_cast %701 : vector<1x1x16x128xf32> to vector<16x128xf32>
    %703 = vector.shape_cast %700 : vector<16x128xf32> to vector<1x1x16x128xf32>
    tpu.vector_store %arg8[%c0_535, %c19_536, %c0_537, %c0_538], %703 {strides = array<i32>} : memref<1x32x16x128xf32, #tpu.memory_space<vmem>>, vector<1x1x16x128xf32>,
    %704 = vector.extract_strided_slice %211 {offsets = [0, 20], sizes = [1, 1], strides = [1, 1]} : vector<1x32xf32> to vector<1x1xf32>
    %c0_539 = arith.constant 0 : index
    %c20_540 = arith.constant 20 : index
    %c0_541 = arith.constant 0 : index
    %c0_542 = arith.constant 0 : index
    %705 = vector.load %arg1[%c0_539, %c20_540, %c0_541, %c0_542] : memref<1x32x16x128xf32, #tpu.memory_space<vmem>>, vector<1x1x16x128xf32>
    %706 = vector.shape_cast %705 : vector<1x1x16x128xf32> to vector<16x128xf32>
    %707 = vector.broadcast %704 : vector<1x1xf32> to vector<16x128xf32>
    %708 = arith.mulf %707, %523 : vector<16x128xf32>
    %709 = arith.mulf %706, %708 : vector<16x128xf32>
    %c0_543 = arith.constant 0 : index
    %c20_544 = arith.constant 20 : index
    %c0_545 = arith.constant 0 : index
    %c0_546 = arith.constant 0 : index
    %710 = vector.load %arg8[%c0_543, %c20_544, %c0_545, %c0_546] : memref<1x32x16x128xf32, #tpu.memory_space<vmem>>, vector<1x1x16x128xf32>
    %711 = vector.shape_cast %710 : vector<1x1x16x128xf32> to vector<16x128xf32>
    %712 = vector.shape_cast %709 : vector<16x128xf32> to vector<1x1x16x128xf32>
    tpu.vector_store %arg8[%c0_543, %c20_544, %c0_545, %c0_546], %712 {strides = array<i32>} : memref<1x32x16x128xf32, #tpu.memory_space<vmem>>, vector<1x1x16x128xf32>,
    %713 = vector.extract_strided_slice %211 {offsets = [0, 21], sizes = [1, 1], strides = [1, 1]} : vector<1x32xf32> to vector<1x1xf32>
    %c0_547 = arith.constant 0 : index
    %c21_548 = arith.constant 21 : index
    %c0_549 = arith.constant 0 : index
    %c0_550 = arith.constant 0 : index
    %714 = vector.load %arg1[%c0_547, %c21_548, %c0_549, %c0_550] : memref<1x32x16x128xf32, #tpu.memory_space<vmem>>, vector<1x1x16x128xf32>
    %715 = vector.shape_cast %714 : vector<1x1x16x128xf32> to vector<16x128xf32>
    %716 = vector.broadcast %713 : vector<1x1xf32> to vector<16x128xf32>
    %717 = arith.mulf %716, %523 : vector<16x128xf32>
    %718 = arith.mulf %715, %717 : vector<16x128xf32>
    %c0_551 = arith.constant 0 : index
    %c21_552 = arith.constant 21 : index
    %c0_553 = arith.constant 0 : index
    %c0_554 = arith.constant 0 : index
    %719 = vector.load %arg8[%c0_551, %c21_552, %c0_553, %c0_554] : memref<1x32x16x128xf32, #tpu.memory_space<vmem>>, vector<1x1x16x128xf32>
    %720 = vector.shape_cast %719 : vector<1x1x16x128xf32> to vector<16x128xf32>
    %721 = vector.shape_cast %718 : vector<16x128xf32> to vector<1x1x16x128xf32>
    tpu.vector_store %arg8[%c0_551, %c21_552, %c0_553, %c0_554], %721 {strides = array<i32>} : memref<1x32x16x128xf32, #tpu.memory_space<vmem>>, vector<1x1x16x128xf32>,
    %722 = vector.extract_strided_slice %211 {offsets = [0, 22], sizes = [1, 1], strides = [1, 1]} : vector<1x32xf32> to vector<1x1xf32>
    %c0_555 = arith.constant 0 : index
    %c22_556 = arith.constant 22 : index
    %c0_557 = arith.constant 0 : index
    %c0_558 = arith.constant 0 : index
    %723 = vector.load %arg1[%c0_555, %c22_556, %c0_557, %c0_558] : memref<1x32x16x128xf32, #tpu.memory_space<vmem>>, vector<1x1x16x128xf32>
    %724 = vector.shape_cast %723 : vector<1x1x16x128xf32> to vector<16x128xf32>
    %725 = vector.broadcast %722 : vector<1x1xf32> to vector<16x128xf32>
    %726 = arith.mulf %725, %523 : vector<16x128xf32>
    %727 = arith.mulf %724, %726 : vector<16x128xf32>
    %c0_559 = arith.constant 0 : index
    %c22_560 = arith.constant 22 : index
    %c0_561 = arith.constant 0 : index
    %c0_562 = arith.constant 0 : index
    %728 = vector.load %arg8[%c0_559, %c22_560, %c0_561, %c0_562] : memref<1x32x16x128xf32, #tpu.memory_space<vmem>>, vector<1x1x16x128xf32>
    %729 = vector.shape_cast %728 : vector<1x1x16x128xf32> to vector<16x128xf32>
    %730 = vector.shape_cast %727 : vector<16x128xf32> to vector<1x1x16x128xf32>
    tpu.vector_store %arg8[%c0_559, %c22_560, %c0_561, %c0_562], %730 {strides = array<i32>} : memref<1x32x16x128xf32, #tpu.memory_space<vmem>>, vector<1x1x16x128xf32>,
    %731 = vector.extract_strided_slice %211 {offsets = [0, 23], sizes = [1, 1], strides = [1, 1]} : vector<1x32xf32> to vector<1x1xf32>
    %c0_563 = arith.constant 0 : index
    %c23_564 = arith.constant 23 : index
    %c0_565 = arith.constant 0 : index
    %c0_566 = arith.constant 0 : index
    %732 = vector.load %arg1[%c0_563, %c23_564, %c0_565, %c0_566] : memref<1x32x16x128xf32, #tpu.memory_space<vmem>>, vector<1x1x16x128xf32>
    %733 = vector.shape_cast %732 : vector<1x1x16x128xf32> to vector<16x128xf32>
    %734 = vector.broadcast %731 : vector<1x1xf32> to vector<16x128xf32>
    %735 = arith.mulf %734, %523 : vector<16x128xf32>
    %736 = arith.mulf %733, %735 : vector<16x128xf32>
    %c0_567 = arith.constant 0 : index
    %c23_568 = arith.constant 23 : index
    %c0_569 = arith.constant 0 : index
    %c0_570 = arith.constant 0 : index
    %737 = vector.load %arg8[%c0_567, %c23_568, %c0_569, %c0_570] : memref<1x32x16x128xf32, #tpu.memory_space<vmem>>, vector<1x1x16x128xf32>
    %738 = vector.shape_cast %737 : vector<1x1x16x128xf32> to vector<16x128xf32>
    %739 = vector.shape_cast %736 : vector<16x128xf32> to vector<1x1x16x128xf32>
    tpu.vector_store %arg8[%c0_567, %c23_568, %c0_569, %c0_570], %739 {strides = array<i32>} : memref<1x32x16x128xf32, #tpu.memory_space<vmem>>, vector<1x1x16x128xf32>,
    %740 = vector.extract_strided_slice %211 {offsets = [0, 24], sizes = [1, 1], strides = [1, 1]} : vector<1x32xf32> to vector<1x1xf32>
    %c0_571 = arith.constant 0 : index
    %c24_572 = arith.constant 24 : index
    %c0_573 = arith.constant 0 : index
    %c0_574 = arith.constant 0 : index
    %741 = vector.load %arg1[%c0_571, %c24_572, %c0_573, %c0_574] : memref<1x32x16x128xf32, #tpu.memory_space<vmem>>, vector<1x1x16x128xf32>
    %742 = vector.shape_cast %741 : vector<1x1x16x128xf32> to vector<16x128xf32>
    %743 = vector.broadcast %740 : vector<1x1xf32> to vector<16x128xf32>
    %744 = arith.mulf %743, %523 : vector<16x128xf32>
    %745 = arith.mulf %742, %744 : vector<16x128xf32>
    %c0_575 = arith.constant 0 : index
    %c24_576 = arith.constant 24 : index
    %c0_577 = arith.constant 0 : index
    %c0_578 = arith.constant 0 : index
    %746 = vector.load %arg8[%c0_575, %c24_576, %c0_577, %c0_578] : memref<1x32x16x128xf32, #tpu.memory_space<vmem>>, vector<1x1x16x128xf32>
    %747 = vector.shape_cast %746 : vector<1x1x16x128xf32> to vector<16x128xf32>
    %748 = vector.shape_cast %745 : vector<16x128xf32> to vector<1x1x16x128xf32>
    tpu.vector_store %arg8[%c0_575, %c24_576, %c0_577, %c0_578], %748 {strides = array<i32>} : memref<1x32x16x128xf32, #tpu.memory_space<vmem>>, vector<1x1x16x128xf32>,
    %749 = vector.extract_strided_slice %211 {offsets = [0, 25], sizes = [1, 1], strides = [1, 1]} : vector<1x32xf32> to vector<1x1xf32>
    %c0_579 = arith.constant 0 : index
    %c25_580 = arith.constant 25 : index
    %c0_581 = arith.constant 0 : index
    %c0_582 = arith.constant 0 : index
    %750 = vector.load %arg1[%c0_579, %c25_580, %c0_581, %c0_582] : memref<1x32x16x128xf32, #tpu.memory_space<vmem>>, vector<1x1x16x128xf32>
    %751 = vector.shape_cast %750 : vector<1x1x16x128xf32> to vector<16x128xf32>
    %752 = vector.broadcast %749 : vector<1x1xf32> to vector<16x128xf32>
    %753 = arith.mulf %752, %523 : vector<16x128xf32>
    %754 = arith.mulf %751, %753 : vector<16x128xf32>
    %c0_583 = arith.constant 0 : index
    %c25_584 = arith.constant 25 : index
    %c0_585 = arith.constant 0 : index
    %c0_586 = arith.constant 0 : index
    %755 = vector.load %arg8[%c0_583, %c25_584, %c0_585, %c0_586] : memref<1x32x16x128xf32, #tpu.memory_space<vmem>>, vector<1x1x16x128xf32>
    %756 = vector.shape_cast %755 : vector<1x1x16x128xf32> to vector<16x128xf32>
    %757 = vector.shape_cast %754 : vector<16x128xf32> to vector<1x1x16x128xf32>
    tpu.vector_store %arg8[%c0_583, %c25_584, %c0_585, %c0_586], %757 {strides = array<i32>} : memref<1x32x16x128xf32, #tpu.memory_space<vmem>>, vector<1x1x16x128xf32>,
    %758 = vector.extract_strided_slice %211 {offsets = [0, 26], sizes = [1, 1], strides = [1, 1]} : vector<1x32xf32> to vector<1x1xf32>
    %c0_587 = arith.constant 0 : index
    %c26_588 = arith.constant 26 : index
    %c0_589 = arith.constant 0 : index
    %c0_590 = arith.constant 0 : index
    %759 = vector.load %arg1[%c0_587, %c26_588, %c0_589, %c0_590] : memref<1x32x16x128xf32, #tpu.memory_space<vmem>>, vector<1x1x16x128xf32>
    %760 = vector.shape_cast %759 : vector<1x1x16x128xf32> to vector<16x128xf32>
    %761 = vector.broadcast %758 : vector<1x1xf32> to vector<16x128xf32>
    %762 = arith.mulf %761, %523 : vector<16x128xf32>
    %763 = arith.mulf %760, %762 : vector<16x128xf32>
    %c0_591 = arith.constant 0 : index
    %c26_592 = arith.constant 26 : index
    %c0_593 = arith.constant 0 : index
    %c0_594 = arith.constant 0 : index
    %764 = vector.load %arg8[%c0_591, %c26_592, %c0_593, %c0_594] : memref<1x32x16x128xf32, #tpu.memory_space<vmem>>, vector<1x1x16x128xf32>
    %765 = vector.shape_cast %764 : vector<1x1x16x128xf32> to vector<16x128xf32>
    %766 = vector.shape_cast %763 : vector<16x128xf32> to vector<1x1x16x128xf32>
    tpu.vector_store %arg8[%c0_591, %c26_592, %c0_593, %c0_594], %766 {strides = array<i32>} : memref<1x32x16x128xf32, #tpu.memory_space<vmem>>, vector<1x1x16x128xf32>,
    %767 = vector.extract_strided_slice %211 {offsets = [0, 27], sizes = [1, 1], strides = [1, 1]} : vector<1x32xf32> to vector<1x1xf32>
    %c0_595 = arith.constant 0 : index
    %c27_596 = arith.constant 27 : index
    %c0_597 = arith.constant 0 : index
    %c0_598 = arith.constant 0 : index
    %768 = vector.load %arg1[%c0_595, %c27_596, %c0_597, %c0_598] : memref<1x32x16x128xf32, #tpu.memory_space<vmem>>, vector<1x1x16x128xf32>
    %769 = vector.shape_cast %768 : vector<1x1x16x128xf32> to vector<16x128xf32>
    %770 = vector.broadcast %767 : vector<1x1xf32> to vector<16x128xf32>
    %771 = arith.mulf %770, %523 : vector<16x128xf32>
    %772 = arith.mulf %769, %771 : vector<16x128xf32>
    %c0_599 = arith.constant 0 : index
    %c27_600 = arith.constant 27 : index
    %c0_601 = arith.constant 0 : index
    %c0_602 = arith.constant 0 : index
    %773 = vector.load %arg8[%c0_599, %c27_600, %c0_601, %c0_602] : memref<1x32x16x128xf32, #tpu.memory_space<vmem>>, vector<1x1x16x128xf32>
    %774 = vector.shape_cast %773 : vector<1x1x16x128xf32> to vector<16x128xf32>
    %775 = vector.shape_cast %772 : vector<16x128xf32> to vector<1x1x16x128xf32>
    tpu.vector_store %arg8[%c0_599, %c27_600, %c0_601, %c0_602], %775 {strides = array<i32>} : memref<1x32x16x128xf32, #tpu.memory_space<vmem>>, vector<1x1x16x128xf32>,
    %776 = vector.extract_strided_slice %211 {offsets = [0, 28], sizes = [1, 1], strides = [1, 1]} : vector<1x32xf32> to vector<1x1xf32>
    %c0_603 = arith.constant 0 : index
    %c28_604 = arith.constant 28 : index
    %c0_605 = arith.constant 0 : index
    %c0_606 = arith.constant 0 : index
    %777 = vector.load %arg1[%c0_603, %c28_604, %c0_605, %c0_606] : memref<1x32x16x128xf32, #tpu.memory_space<vmem>>, vector<1x1x16x128xf32>
    %778 = vector.shape_cast %777 : vector<1x1x16x128xf32> to vector<16x128xf32>
    %779 = vector.broadcast %776 : vector<1x1xf32> to vector<16x128xf32>
    %780 = arith.mulf %779, %523 : vector<16x128xf32>
    %781 = arith.mulf %778, %780 : vector<16x128xf32>
    %c0_607 = arith.constant 0 : index
    %c28_608 = arith.constant 28 : index
    %c0_609 = arith.constant 0 : index
    %c0_610 = arith.constant 0 : index
    %782 = vector.load %arg8[%c0_607, %c28_608, %c0_609, %c0_610] : memref<1x32x16x128xf32, #tpu.memory_space<vmem>>, vector<1x1x16x128xf32>
    %783 = vector.shape_cast %782 : vector<1x1x16x128xf32> to vector<16x128xf32>
    %784 = vector.shape_cast %781 : vector<16x128xf32> to vector<1x1x16x128xf32>
    tpu.vector_store %arg8[%c0_607, %c28_608, %c0_609, %c0_610], %784 {strides = array<i32>} : memref<1x32x16x128xf32, #tpu.memory_space<vmem>>, vector<1x1x16x128xf32>,
    %785 = vector.extract_strided_slice %211 {offsets = [0, 29], sizes = [1, 1], strides = [1, 1]} : vector<1x32xf32> to vector<1x1xf32>
    %c0_611 = arith.constant 0 : index
    %c29_612 = arith.constant 29 : index
    %c0_613 = arith.constant 0 : index
    %c0_614 = arith.constant 0 : index
    %786 = vector.load %arg1[%c0_611, %c29_612, %c0_613, %c0_614] : memref<1x32x16x128xf32, #tpu.memory_space<vmem>>, vector<1x1x16x128xf32>
    %787 = vector.shape_cast %786 : vector<1x1x16x128xf32> to vector<16x128xf32>
    %788 = vector.broadcast %785 : vector<1x1xf32> to vector<16x128xf32>
    %789 = arith.mulf %788, %523 : vector<16x128xf32>
    %790 = arith.mulf %787, %789 : vector<16x128xf32>
    %c0_615 = arith.constant 0 : index
    %c29_616 = arith.constant 29 : index
    %c0_617 = arith.constant 0 : index
    %c0_618 = arith.constant 0 : index
    %791 = vector.load %arg8[%c0_615, %c29_616, %c0_617, %c0_618] : memref<1x32x16x128xf32, #tpu.memory_space<vmem>>, vector<1x1x16x128xf32>
    %792 = vector.shape_cast %791 : vector<1x1x16x128xf32> to vector<16x128xf32>
    %793 = vector.shape_cast %790 : vector<16x128xf32> to vector<1x1x16x128xf32>
    tpu.vector_store %arg8[%c0_615, %c29_616, %c0_617, %c0_618], %793 {strides = array<i32>} : memref<1x32x16x128xf32, #tpu.memory_space<vmem>>, vector<1x1x16x128xf32>,
    %794 = vector.extract_strided_slice %211 {offsets = [0, 30], sizes = [1, 1], strides = [1, 1]} : vector<1x32xf32> to vector<1x1xf32>
    %c0_619 = arith.constant 0 : index
    %c30_620 = arith.constant 30 : index
    %c0_621 = arith.constant 0 : index
    %c0_622 = arith.constant 0 : index
    %795 = vector.load %arg1[%c0_619, %c30_620, %c0_621, %c0_622] : memref<1x32x16x128xf32, #tpu.memory_space<vmem>>, vector<1x1x16x128xf32>
    %796 = vector.shape_cast %795 : vector<1x1x16x128xf32> to vector<16x128xf32>
    %797 = vector.broadcast %794 : vector<1x1xf32> to vector<16x128xf32>
    %798 = arith.mulf %797, %523 : vector<16x128xf32>
    %799 = arith.mulf %796, %798 : vector<16x128xf32>
    %c0_623 = arith.constant 0 : index
    %c30_624 = arith.constant 30 : index
    %c0_625 = arith.constant 0 : index
    %c0_626 = arith.constant 0 : index
    %800 = vector.load %arg8[%c0_623, %c30_624, %c0_625, %c0_626] : memref<1x32x16x128xf32, #tpu.memory_space<vmem>>, vector<1x1x16x128xf32>
    %801 = vector.shape_cast %800 : vector<1x1x16x128xf32> to vector<16x128xf32>
    %802 = vector.shape_cast %799 : vector<16x128xf32> to vector<1x1x16x128xf32>
    tpu.vector_store %arg8[%c0_623, %c30_624, %c0_625, %c0_626], %802 {strides = array<i32>} : memref<1x32x16x128xf32, #tpu.memory_space<vmem>>, vector<1x1x16x128xf32>,
    %803 = vector.extract_strided_slice %211 {offsets = [0, 31], sizes = [1, 1], strides = [1, 1]} : vector<1x32xf32> to vector<1x1xf32>
    %c0_627 = arith.constant 0 : index
    %c31_628 = arith.constant 31 : index
    %c0_629 = arith.constant 0 : index
    %c0_630 = arith.constant 0 : index
    %804 = vector.load %arg1[%c0_627, %c31_628, %c0_629, %c0_630] : memref<1x32x16x128xf32, #tpu.memory_space<vmem>>, vector<1x1x16x128xf32>
    %805 = vector.shape_cast %804 : vector<1x1x16x128xf32> to vector<16x128xf32>
    %806 = vector.broadcast %803 : vector<1x1xf32> to vector<16x128xf32>
    %807 = arith.mulf %806, %523 : vector<16x128xf32>
    %808 = arith.mulf %805, %807 : vector<16x128xf32>
    %c0_631 = arith.constant 0 : index
    %c31_632 = arith.constant 31 : index
    %c0_633 = arith.constant 0 : index
    %c0_634 = arith.constant 0 : index
    %809 = vector.load %arg8[%c0_631, %c31_632, %c0_633, %c0_634] : memref<1x32x16x128xf32, #tpu.memory_space<vmem>>, vector<1x1x16x128xf32>
    %810 = vector.shape_cast %809 : vector<1x1x16x128xf32> to vector<16x128xf32>
    %811 = vector.shape_cast %808 : vector<16x128xf32> to vector<1x1x16x128xf32>
    tpu.vector_store %arg8[%c0_631, %c31_632, %c0_633, %c0_634], %811 {strides = array<i32>} : memref<1x32x16x128xf32, #tpu.memory_space<vmem>>, vector<1x1x16x128xf32>,
    return
  }
  func.func @transform_0(%arg0: i32) -> (i32, i32, i32, i32) {
    %c0_i32 = arith.constant 0 : i32
    %c0_i32_0 = arith.constant 0 : i32
    %c0_i32_1 = arith.constant 0 : i32
    %c0_i32_2 = arith.constant 0 : i32
    return %arg0, %c0_i32, %c0_i32_0, %c0_i32_1 : i32, i32, i32, i32
  }
  func.func @transform_1(%arg0: i32) -> (i32, i32) {
    %c0_i32 = arith.constant 0 : i32
    %c0_i32_0 = arith.constant 0 : i32
    %c0_i32_1 = arith.constant 0 : i32
    return %c0_i32, %c0_i32_0 : i32, i32
  }
  func.func @transform_2(%arg0: i32) -> (i32, i32) {
    %c0_i32 = arith.constant 0 : i32
    %c0_i32_0 = arith.constant 0 : i32
    %c0_i32_1 = arith.constant 0 : i32
    return %c0_i32, %c0_i32_0 : i32, i32
  }
  func.func @transform_3(%arg0: i32) -> (i32, i32) {
    %c0_i32 = arith.constant 0 : i32
    %c0_i32_0 = arith.constant 0 : i32
    %c0_i32_1 = arith.constant 0 : i32
    return %c0_i32, %c0_i32_0 : i32, i32
  }
  func.func @transform_4(%arg0: i32) -> (i32, i32) {
    %c0_i32 = arith.constant 0 : i32
    %c0_i32_0 = arith.constant 0 : i32
    %c0_i32_1 = arith.constant 0 : i32
    return %c0_i32, %c0_i32_0 : i32, i32
  }
  func.func @transform_5(%arg0: i32) -> (i32, i32, i32, i32) {
    %c0_i32 = arith.constant 0 : i32
    %c0_i32_0 = arith.constant 0 : i32
    %c0_i32_1 = arith.constant 0 : i32
    %c0_i32_2 = arith.constant 0 : i32
    %c0_i32_3 = arith.constant 0 : i32
    return %c0_i32, %c0_i32_0, %c0_i32_1, %c0_i32_2 : i32, i32, i32, i32
  }
  func.func @transform_6(%arg0: i32) -> (i32, i32) {
    %c0_i32 = arith.constant 0 : i32
    %c0_i32_0 = arith.constant 0 : i32
    %c0_i32_1 = arith.constant 0 : i32
    return %c0_i32, %c0_i32_0 : i32, i32
  }
  func.func @transform_7(%arg0: i32) -> (i32, i32, i32, i32) {
    %c0_i32 = arith.constant 0 : i32
    %c0_i32_0 = arith.constant 0 : i32
    %c0_i32_1 = arith.constant 0 : i32
    %c0_i32_2 = arith.constant 0 : i32
    return %arg0, %c0_i32, %c0_i32_0, %c0_i32_1 : i32, i32, i32, i32
  }
}

</mosaic_0001>

<llo_original>
// kernel: tpu_custom_call.1
$region0: #{tpu_custom_call.1}
  #allocation0 [shape = 'u32[]', space=smem, size = 0x4, offset = 0x4, fixed_abs, tag = 'smem constant byte address 0x4 - core index']
  #allocation1 [shape = 'u32[144,128]{1,0:T(1,128)}', space=vmem, size = 0x12000, scoped, tag = 'internal scratch']
  #allocation2 [shape = 'f32[1,1]{1,0:T(1,128)S(6)}', space=smem, size = 0x200, scoped, tag = 'scoped memory for tpu_custom_call.1']
  %s0 = inlined_call_operand.hbm [shape: f32[2,32,16,128], index: 0, kind: input, shape index: {}]
  %s1 = inlined_call_operand.vmem [shape: f32[32,2], index: 1, kind: input, shape index: {}]
  %s2 = inlined_call_operand.vmem [shape: f32[1,2], index: 2, kind: input, shape index: {}]
  %s3 = inlined_call_operand.vmem [shape: f32[2,32], index: 3, kind: input, shape index: {}]
  %s4 = inlined_call_operand.vmem [shape: f32[1,32], index: 4, kind: input, shape index: {}]
  %s5 = inlined_call_operand.hbm [shape: f32[2,7,128,128], index: 5, kind: input, shape index: {}]
  %s6 = inlined_call_operand.<no memory space> [shape: f32[1,1], index: 6, kind: input, shape index: {}]
  %s7 = inlined_call_operand.hbm [shape: f32[2,32,16,128], index: 7, kind: output, shape index: {}]
  %s8 = sld [smem:[#allocation0]]
  $region69: #{tpu_custom_call.1} parent=0
    _
  %s10 = ssub.s32 1, %s8
  %s11 = scalar_select 0, %s10, %s8
  %12 = sst [smem:[#allocation2]] %s6
  $region1: #{tpu_custom_call.1} parent=0
    #allocation3 [shape = 'u8[524288]{0}', space=vmem, size = 0x80000, scoped, tag = 'input window, operand 0']
    #allocation4 [shape = 's32[2]{0}', space=sflag, size = 0x8, scoped, tag = 'scoped memory for tpu_custom_call.1']
    #allocation5 [shape = 's32[2]{0}', space=sflag, size = 0x8, scoped, tag = 'scoped memory for tpu_custom_call.1']
    #allocation6 [shape = 'u8[917504]{0}', space=vmem, size = 0xe0000, scoped, tag = 'input window, operand 5, single buffered']
    #allocation7 [shape = 's32[1]{0}', space=sflag, size = 0x4, scoped, tag = 'scoped memory for tpu_custom_call.1']
    #allocation8 [shape = 'u8[524288]{0}', space=vmem, size = 0x80000, scoped, tag = 'output window, operand 0']
    %13 = vsyncpa [#allocation4], 0
    %s14 = scalar_lea.sflag [#allocation4], 1
    %15 = vsyncpa %s14, 0
    %16 = vsyncpa [#allocation7], 0
    %17 = vsyncpa [#allocation5], 0
    %s18 = scalar_lea.sflag [#allocation5], 1
    %19 = vsyncpa %s18, 0
    loop: start=0, step=1, limit=4
    $region2: #{tpu_custom_call.1} parent=1 // loop_pre_header
      _
    $region3: #{tpu_custom_call.1} parent=1 // loop_header
      %s21 = sphi 0, %s25
      %p22 = scmp.ge.s32.totalorder %s21, 4
      %s31 = sphi 0, %s33
      %s34 = sphi 0, %s31
      %s35 = sphi 0, %s34
      %s51 = sphi 0, %s35
      %s55 = sphi 0, %s55
      %s57 = sphi 0, %s55
      %s58 = sphi 0, %s57
      %s72 = sphi 0, %s58
      %s76 = sphi 0, %s76
      %s78 = sphi 0, %s76
      %s79 = sphi 0, %s78
      %s93 = sphi 0, %s79
      %s97 = sphi 0, %s97
      %s99 = sphi 0, %s97
      %s100 = sphi 0, %s99
      %s114 = sphi 0, %s100
      %s118 = sphi 0, %s118
      %s120 = sphi 0, %s118
      %s121 = sphi 0, %s120
      %s135 = sphi 0, %s121
      %s139 = sphi 0, %s139
      %s141 = sphi 0, %s139
      %s142 = sphi 0, %s141
      %s156 = sphi 0, %s142
      %s160 = sphi 0, %s160
      %s162 = sphi 0, %s160
      %s163 = sphi 0, %s162
      %s177 = sphi 0, %s163
      %s183 = sphi 0, %s185
      %s186 = sphi 0, %s183
      %s187 = sphi 0, %s186
      %s203 = sphi 0, %s187
    $region4: #{tpu_custom_call.1} parent=1 // loop_header_branch
      %24 = sbr.rel (%p22) target = $region8
    $region5: #{tpu_custom_call.1} parent=1 // loop_body
      %s26 = ssub.s32 %s21, 1
      %s27 = ssub.s32 %s21, 2
      %s28 = sadd.s32 %s21, 1
      %s29 = ssub.s32 %s21, %s28
      %p30 = scmp.eq.s32.totalorder %s29, 0
      %s32 = sadd.s32 %s31, 1
      %s33 = scalar_select %p30, %s31, %s32
      %p36 = pneg %p30
      %p37 = scmp.eq.s32.totalorder %s21, 1
      %p38 = por %p36, %p37
      %p39 = scmp.ne.s32.totalorder %s31, %s34
      %p40 = scmp.eq.s32.totalorder %s21, 0
      %p41 = por %p39, %p40
      %p42 = scmp.ne.s32.totalorder %s31, %s34
      %p43 = scmp.eq.s32.totalorder %s26, 1
      %p44 = por %p42, %p43
      %p45 = scmp.ne.s32.totalorder %s34, %s35
      %p46 = scmp.eq.s32.totalorder %s26, 0
      %p47 = por %p45, %p46
      %p48 = scmp.ne.s32.totalorder %s34, %s35
      %p49 = scmp.eq.s32.totalorder %s27, 1
      %p50 = por %p48, %p49
      %p52 = scmp.ne.s32.totalorder %s35, %s51
      %p53 = scmp.eq.s32.totalorder %s27, 0
      %p54 = por %p52, %p53
      %s56 = sadd.s32 %s55, 1
      %p59 = scmp.eq.s32.totalorder %s21, 1
      %p60 = scmp.ne.s32.totalorder %s55, %s57
      %p61 = scmp.eq.s32.totalorder %s21, 0
      %p62 = por %p60, %p61
      %p63 = scmp.ne.s32.totalorder %s55, %s57
      %p64 = scmp.eq.s32.totalorder %s26, 1
      %p65 = por %p63, %p64
      %p66 = scmp.ne.s32.totalorder %s57, %s58
      %p67 = scmp.eq.s32.totalorder %s26, 0
      %p68 = por %p66, %p67
      %p69 = scmp.ne.s32.totalorder %s57, %s58
      %p70 = scmp.eq.s32.totalorder %s27, 1
      %p71 = por %p69, %p70
      %p73 = scmp.ne.s32.totalorder %s58, %s72
      %p74 = scmp.eq.s32.totalorder %s27, 0
      %p75 = por %p73, %p74
      %s77 = sadd.s32 %s76, 1
      %p80 = scmp.eq.s32.totalorder %s21, 1
      %p81 = scmp.ne.s32.totalorder %s76, %s78
      %p82 = scmp.eq.s32.totalorder %s21, 0
      %p83 = por %p81, %p82
      %p84 = scmp.ne.s32.totalorder %s76, %s78
      %p85 = scmp.eq.s32.totalorder %s26, 1
      %p86 = por %p84, %p85
      %p87 = scmp.ne.s32.totalorder %s78, %s79
      %p88 = scmp.eq.s32.totalorder %s26, 0
      %p89 = por %p87, %p88
      %p90 = scmp.ne.s32.totalorder %s78, %s79
      %p91 = scmp.eq.s32.totalorder %s27, 1
      %p92 = por %p90, %p91
      %p94 = scmp.ne.s32.totalorder %s79, %s93
      %p95 = scmp.eq.s32.totalorder %s27, 0
      %p96 = por %p94, %p95
      %s98 = sadd.s32 %s97, 1
      %p101 = scmp.eq.s32.totalorder %s21, 1
      %p102 = scmp.ne.s32.totalorder %s97, %s99
      %p103 = scmp.eq.s32.totalorder %s21, 0
      %p104 = por %p102, %p103
      %p105 = scmp.ne.s32.totalorder %s97, %s99
      %p106 = scmp.eq.s32.totalorder %s26, 1
      %p107 = por %p105, %p106
      %p108 = scmp.ne.s32.totalorder %s99, %s100
      %p109 = scmp.eq.s32.totalorder %s26, 0
      %p110 = por %p108, %p109
      %p111 = scmp.ne.s32.totalorder %s99, %s100
      %p112 = scmp.eq.s32.totalorder %s27, 1
      %p113 = por %p111, %p112
      %p115 = scmp.ne.s32.totalorder %s100, %s114
      %p116 = scmp.eq.s32.totalorder %s27, 0
      %p117 = por %p115, %p116
      %s119 = sadd.s32 %s118, 1
      %p122 = scmp.eq.s32.totalorder %s21, 1
      %p123 = scmp.ne.s32.totalorder %s118, %s120
      %p124 = scmp.eq.s32.totalorder %s21, 0
      %p125 = por %p123, %p124
      %p126 = scmp.ne.s32.totalorder %s118, %s120
      %p127 = scmp.eq.s32.totalorder %s26, 1
      %p128 = por %p126, %p127
      %p129 = scmp.ne.s32.totalorder %s120, %s121
      %p130 = scmp.eq.s32.totalorder %s26, 0
      %p131 = por %p129, %p130
      %p132 = scmp.ne.s32.totalorder %s120, %s121
      %p133 = scmp.eq.s32.totalorder %s27, 1
      %p134 = por %p132, %p133
      %p136 = scmp.ne.s32.totalorder %s121, %s135
      %p137 = scmp.eq.s32.totalorder %s27, 0
      %p138 = por %p136, %p137
      %s140 = sadd.s32 %s139, 1
      %p143 = scmp.eq.s32.totalorder %s21, 1
      %p144 = scmp.ne.s32.totalorder %s139, %s141
      %p145 = scmp.eq.s32.totalorder %s21, 0
      %p146 = por %p144, %p145
      %p147 = scmp.ne.s32.totalorder %s139, %s141
      %p148 = scmp.eq.s32.totalorder %s26, 1
      %p149 = por %p147, %p148
      %p150 = scmp.ne.s32.totalorder %s141, %s142
      %p151 = scmp.eq.s32.totalorder %s26, 0
      %p152 = por %p150, %p151
      %p153 = scmp.ne.s32.totalorder %s141, %s142
      %p154 = scmp.eq.s32.totalorder %s27, 1
      %p155 = por %p153, %p154
      %p157 = scmp.ne.s32.totalorder %s142, %s156
      %p158 = scmp.eq.s32.totalorder %s27, 0
      %p159 = por %p157, %p158
      %s161 = sadd.s32 %s160, 1
      %p164 = scmp.eq.s32.totalorder %s21, 1
      %p165 = scmp.ne.s32.totalorder %s160, %s162
      %p166 = scmp.eq.s32.totalorder %s21, 0
      %p167 = por %p165, %p166
      %p168 = scmp.ne.s32.totalorder %s160, %s162
      %p169 = scmp.eq.s32.totalorder %s26, 1
      %p170 = por %p168, %p169
      %p171 = scmp.ne.s32.totalorder %s162, %s163
      %p172 = scmp.eq.s32.totalorder %s26, 0
      %p173 = por %p171, %p172
      %p174 = scmp.ne.s32.totalorder %s162, %s163
      %p175 = scmp.eq.s32.totalorder %s27, 1
      %p176 = por %p174, %p175
      %p178 = scmp.ne.s32.totalorder %s163, %s177
      %p179 = scmp.eq.s32.totalorder %s27, 0
      %p180 = por %p178, %p179
      %s181 = ssub.s32 %s21, %s28
      %p182 = scmp.eq.s32.totalorder %s181, 0
      %s184 = sadd.s32 %s183, 1
      %s185 = scalar_select %p182, %s183, %s184
      %p188 = pneg %p182
      %p189 = scmp.eq.s32.totalorder %s21, 1
      %p190 = por %p188, %p189
      %p191 = scmp.ne.s32.totalorder %s183, %s186
      %p192 = scmp.eq.s32.totalorder %s21, 0
      %p193 = por %p191, %p192
      %p194 = scmp.ne.s32.totalorder %s183, %s186
      %p195 = scmp.eq.s32.totalorder %s26, 1
      %p196 = por %p194, %p195
      %p197 = scmp.ne.s32.totalorder %s186, %s187
      %p198 = scmp.eq.s32.totalorder %s26, 0
      %p199 = por %p197, %p198
      %p200 = scmp.ne.s32.totalorder %s186, %s187
      %p201 = scmp.eq.s32.totalorder %s27, 1
      %p202 = por %p200, %p201
      %p204 = scmp.ne.s32.totalorder %s187, %s203
      %p205 = scmp.eq.s32.totalorder %s27, 0
      %p206 = por %p204, %p205
      %p207 = scmp.le.s32.totalorder 1, %s21
      %p208 = scmp.lt.s32.totalorder %s21, 3
      %p209 = pnand %p207, %p208
      %p210 = pneg %p209
      // Predicated region
      $region9: #{tpu_custom_call.1} parent=5 // pred_check
        _
      $region10: #{tpu_custom_call.1} parent=5 // pred_check_branch
        %212 = sbr.rel (%p209) target = $region12
      $region11: #{tpu_custom_call.1} parent=5 // pred_region
        %s213 = ssub.s32 %s21, 1
        // Predicated region
        $region13: #{tpu_custom_call.1} parent=11 // pred_check
          %p214 = pneg %p68
        $region14: #{tpu_custom_call.1} parent=11 // pred_check_branch
          %216 = sbr.rel (%p214) target = $region16
        $region15: #{tpu_custom_call.1} parent=11 // pred_region
          _
        $region16: #{tpu_custom_call.1} parent=11 // pred_fallthru
          _
        // Predicated region
        $region17: #{tpu_custom_call.1} parent=11 // pred_check
          %p217 = pneg %p89
        $region18: #{tpu_custom_call.1} parent=11 // pred_check_branch
          %219 = sbr.rel (%p217) target = $region20
        $region19: #{tpu_custom_call.1} parent=11 // pred_region
          _
        $region20: #{tpu_custom_call.1} parent=11 // pred_fallthru
          _
        // Predicated region
        $region21: #{tpu_custom_call.1} parent=11 // pred_check
          %p220 = pneg %p110
        $region22: #{tpu_custom_call.1} parent=11 // pred_check_branch
          %222 = sbr.rel (%p220) target = $region24
        $region23: #{tpu_custom_call.1} parent=11 // pred_region
          _
        $region24: #{tpu_custom_call.1} parent=11 // pred_fallthru
          _
        // Predicated region
        $region25: #{tpu_custom_call.1} parent=11 // pred_check
          %p223 = pneg %p131
        $region26: #{tpu_custom_call.1} parent=11 // pred_check_branch
          %225 = sbr.rel (%p223) target = $region28
        $region27: #{tpu_custom_call.1} parent=11 // pred_region
          _
        $region28: #{tpu_custom_call.1} parent=11 // pred_fallthru
          _
        // Predicated region
        $region29: #{tpu_custom_call.1} parent=11 // pred_check
          %p226 = pneg %p152
        $region30: #{tpu_custom_call.1} parent=11 // pred_check_branch
          %228 = sbr.rel (%p226) target = $region32
        $region31: #{tpu_custom_call.1} parent=11 // pred_region
          %s230 = ssub.s32 28672, 28672
          %231 = vsyncadd [#allocation7], %s230
          %s232 = sshll.u32 [#allocation6], 4
          %s233 = int_to_ptr.vmem [resolvable:$true] %s232
          %238 = dma.hbm_to_vmem [thread:$0]  %s5, 28672, %s233, [#allocation7], 128, 128, 8
        $region32: #{tpu_custom_call.1} parent=11 // pred_fallthru
          _
        // Predicated region
        $region33: #{tpu_custom_call.1} parent=11 // pred_check
          %p239 = pneg %p173
        $region34: #{tpu_custom_call.1} parent=11 // pred_check_branch
          %241 = sbr.rel (%p239) target = $region36
        $region35: #{tpu_custom_call.1} parent=11 // pred_region
          _
        $region36: #{tpu_custom_call.1} parent=11 // pred_fallthru
          _
      $region12: #{tpu_custom_call.1} parent=5 // pred_fallthru
        _
      %p242 = scmp.lt.s32.totalorder %s21, 2
      // Predicated region
      $region37: #{tpu_custom_call.1} parent=5 // pred_check
        %p243 = pneg %p242
      $region38: #{tpu_custom_call.1} parent=5 // pred_check_branch
        %245 = sbr.rel (%p243) target = $region40
      $region39: #{tpu_custom_call.1} parent=5 // pred_region
        // Predicated region
        $region41: #{tpu_custom_call.1} parent=39 // pred_check
          %p246 = pneg %p41
        $region42: #{tpu_custom_call.1} parent=39 // pred_check_branch
          %248 = sbr.rel (%p246) target = $region44
        $region43: #{tpu_custom_call.1} parent=39 // pred_region
          %s249 = sand.u32 %s31, 1
          %s250 = scalar_lea.sflag [#allocation4], %s249
          %s251 = sand.u32 %s31, 1
          %s252 = smul.addr %s251, 512
          %s253 = scalar_lea.vmem [#allocation3], %s252
          %s255 = ssub.s32 8192, 8192
          %256 = vsyncadd %s250, %s255
          %s257 = smul.addr %s21, 64
          %s258 = smul.addr %s257, 128
          %s259 = scalar_lea.hbm %s0, %s258
          %s260 = sshll.u32 %s253, 4
          %s261 = int_to_ptr.vmem [resolvable:$true] %s260
          %266 = dma.hbm_to_vmem [thread:$0]  %s259, 8192, %s261, %s250, 128, 128, 8
        $region44: #{tpu_custom_call.1} parent=39 // pred_fallthru
          _
      $region40: #{tpu_custom_call.1} parent=5 // pred_fallthru
        _
      %p267 = scmp.le.s32.totalorder 1, %s21
      %p268 = scmp.lt.s32.totalorder %s21, 3
      %p269 = pnand %p267, %p268
      %p270 = pneg %p269
      // Predicated region
      $region45: #{tpu_custom_call.1} parent=5 // pred_check
        _
      $region46: #{tpu_custom_call.1} parent=5 // pred_check_branch
        %272 = sbr.rel (%p269) target = $region48
      $region47: #{tpu_custom_call.1} parent=5 // pred_region
        %s273 = ssub.s32 %s21, 1
        %s274 = sand.u32 %s34, 1
        %s275 = scalar_lea.sflag [#allocation4], %s274
        %s276 = sand.u32 %s34, 1
        %s277 = smul.addr %s276, 512
        %s278 = scalar_lea.vmem [#allocation3], %s277
        // Predicated region
        $region49: #{tpu_custom_call.1} parent=47 // pred_check
          %p279 = pneg %p47
        $region50: #{tpu_custom_call.1} parent=47 // pred_check_branch
          %281 = sbr.rel (%p279) target = $region52
        $region51: #{tpu_custom_call.1} parent=47 // pred_region
          %282 = dma.done %s275, 8192
        $region52: #{tpu_custom_call.1} parent=47 // pred_fallthru
          _
        // Predicated region
        $region53: #{tpu_custom_call.1} parent=47 // pred_check
          %p283 = pneg %p152
        $region54: #{tpu_custom_call.1} parent=47 // pred_check_branch
          %285 = sbr.rel (%p283) target = $region56
        $region55: #{tpu_custom_call.1} parent=47 // pred_region
          %286 = dma.done [#allocation7], 28672
        $region56: #{tpu_custom_call.1} parent=47 // pred_fallthru
          _
        %s287 = sand.u32 %s34, 1
        %s288 = scalar_lea.sflag [#allocation4], %s287
        %s289 = sand.u32 %s34, 1
        %s290 = smul.addr %s289, 512
        %s291 = scalar_lea.vmem [#allocation3], %s290
        %p292 = pneg %p47
        %p293 = pneg %p44
        %p294 = pneg %p68
        %p295 = pneg %p65
        %p296 = pneg %p89
        %p297 = pneg %p86
        %p298 = pneg %p110
        %p299 = pneg %p107
        %p300 = pneg %p131
        %p301 = pneg %p128
        %p302 = pneg %p152
        %p303 = pneg %p149
        %p304 = pneg %p173
        %p305 = pneg %p170
        %p306 = pneg %p199
        %p307 = pneg %p196
        %s308 = sand.u32 %s186, 1
        %s309 = scalar_lea.sflag [#allocation5], %s308
        %s310 = sand.u32 %s186, 1
        %s311 = smul.addr %s310, 512
        %s312 = scalar_lea.vmem [#allocation8], %s311
        %v313 = vld [vmem:[%s278] sm:$0xff]
        %v314 = vld [vmem:[%s278 + $0x8] sm:$0xff]
        %315 = vadd.xlane.f32.xlu0 %v313
        %v316 = vpop.xlane.xlu0 %315
        %317 = vadd.xlane.f32.xlu0 %v314
        %v318 = vpop.xlane.xlu0 %317
        %v319 = vadd.f32 %v316, %v318
        %v320 = vrot.slane %v319, 4
        %v321 = vadd.f32 %v319, %v320
        %v322 = vrot.slane %v321, 2
        %v323 = vadd.f32 %v321, %v322
        %v324 = vrot.slane %v323, 1
        %v325 = vadd.f32 %v323, %v324
        %s326 = scalar_lea.vmem %s278, 16 [#allocation3]
        %v327 = vld [vmem:[%s326] sm:$0xff]
        %v328 = vld [vmem:[%s326 + $0x8] sm:$0xff]
        %329 = vadd.xlane.f32.xlu0 %v327
        %v330 = vpop.xlane.xlu0 %329
        %331 = vadd.xlane.f32.xlu0 %v328
        %v332 = vpop.xlane.xlu0 %331
        %v333 = vadd.f32 %v330, %v332
        %v334 = vrot.slane %v333, 4
        %v335 = vadd.f32 %v333, %v334
        %v336 = vrot.slane %v335, 2
        %v337 = vadd.f32 %v335, %v336
        %v338 = vrot.slane %v337, 1
        %v339 = vadd.f32 %v337, %v338
        %s340 = scalar_lea.vmem %s278, 32 [#allocation3]
        %v341 = vld [vmem:[%s340] sm:$0xff]
        %v342 = vld [vmem:[%s340 + $0x8] sm:$0xff]
        %343 = vadd.xlane.f32.xlu0 %v341
        %v344 = vpop.xlane.xlu0 %343
        %345 = vadd.xlane.f32.xlu0 %v342
        %v346 = vpop.xlane.xlu0 %345
        %v347 = vadd.f32 %v344, %v346
        %v348 = vrot.slane %v347, 4
        %v349 = vadd.f32 %v347, %v348
        %v350 = vrot.slane %v349, 2
        %v351 = vadd.f32 %v349, %v350
        %v352 = vrot.slane %v351, 1
        %v353 = vadd.f32 %v351, %v352
        %s354 = scalar_lea.vmem %s278, 48 [#allocation3]
        %v355 = vld [vmem:[%s354] sm:$0xff]
        %v356 = vld [vmem:[%s354 + $0x8] sm:$0xff]
        %357 = vadd.xlane.f32.xlu0 %v355
        %v358 = vpop.xlane.xlu0 %357
        %359 = vadd.xlane.f32.xlu0 %v356
        %v360 = vpop.xlane.xlu0 %359
        %v361 = vadd.f32 %v358, %v360
        %v362 = vrot.slane %v361, 4
        %v363 = vadd.f32 %v361, %v362
        %v364 = vrot.slane %v363, 2
        %v365 = vadd.f32 %v363, %v364
        %v366 = vrot.slane %v365, 1
        %v367 = vadd.f32 %v365, %v366
        %s368 = scalar_lea.vmem %s278, 64 [#allocation3]
        %v369 = vld [vmem:[%s368] sm:$0xff]
        %v370 = vld [vmem:[%s368 + $0x8] sm:$0xff]
        %371 = vadd.xlane.f32.xlu0 %v369
        %v372 = vpop.xlane.xlu0 %371
        %373 = vadd.xlane.f32.xlu0 %v370
        %v374 = vpop.xlane.xlu0 %373
        %v375 = vadd.f32 %v372, %v374
        %v376 = vrot.slane %v375, 4
        %v377 = vadd.f32 %v375, %v376
        %v378 = vrot.slane %v377, 2
        %v379 = vadd.f32 %v377, %v378
        %v380 = vrot.slane %v379, 1
        %v381 = vadd.f32 %v379, %v380
        %s382 = scalar_lea.vmem %s278, 80 [#allocation3]
        %v383 = vld [vmem:[%s382] sm:$0xff]
        %v384 = vld [vmem:[%s382 + $0x8] sm:$0xff]
        %385 = vadd.xlane.f32.xlu0 %v383
        %v386 = vpop.xlane.xlu0 %385
        %387 = vadd.xlane.f32.xlu0 %v384
        %v388 = vpop.xlane.xlu0 %387
        %v389 = vadd.f32 %v386, %v388
        %v390 = vrot.slane %v389, 4
        %v391 = vadd.f32 %v389, %v390
        %v392 = vrot.slane %v391, 2
        %v393 = vadd.f32 %v391, %v392
        %v394 = vrot.slane %v393, 1
        %v395 = vadd.f32 %v393, %v394
        %s396 = scalar_lea.vmem %s278, 96 [#allocation3]
        %v397 = vld [vmem:[%s396] sm:$0xff]
        %v398 = vld [vmem:[%s396 + $0x8] sm:$0xff]
        %399 = vadd.xlane.f32.xlu0 %v397
        %v400 = vpop.xlane.xlu0 %399
        %401 = vadd.xlane.f32.xlu0 %v398
        %v402 = vpop.xlane.xlu0 %401
        %v403 = vadd.f32 %v400, %v402
        %v404 = vrot.slane %v403, 4
        %v405 = vadd.f32 %v403, %v404
        %v406 = vrot.slane %v405, 2
        %v407 = vadd.f32 %v405, %v406
        %v408 = vrot.slane %v407, 1
        %v409 = vadd.f32 %v407, %v408
        %s410 = scalar_lea.vmem %s278, 112 [#allocation3]
        %v411 = vld [vmem:[%s410] sm:$0xff]
        %v412 = vld [vmem:[%s410 + $0x8] sm:$0xff]
        %413 = vadd.xlane.f32.xlu0 %v411
        %v414 = vpop.xlane.xlu0 %413
        %415 = vadd.xlane.f32.xlu0 %v412
        %v416 = vpop.xlane.xlu0 %415
        %v417 = vadd.f32 %v414, %v416
        %v418 = vrot.slane %v417, 4
        %v419 = vadd.f32 %v417, %v418
        %v420 = vrot.slane %v419, 2
        %v421 = vadd.f32 %v419, %v420
        %v422 = vrot.slane %v421, 1
        %v423 = vadd.f32 %v421, %v422
        %s424 = scalar_lea.vmem %s278, 128 [#allocation3]
        %v425 = vld [vmem:[%s424] sm:$0xff]
        %v426 = vld [vmem:[%s424 + $0x8] sm:$0xff]
        %427 = vadd.xlane.f32.xlu0 %v425
        %v428 = vpop.xlane.xlu0 %427
        %429 = vadd.xlane.f32.xlu0 %v426
        %v430 = vpop.xlane.xlu0 %429
        %v431 = vadd.f32 %v428, %v430
        %v432 = vrot.slane %v431, 4
        %v433 = vadd.f32 %v431, %v432
        %v434 = vrot.slane %v433, 2
        %v435 = vadd.f32 %v433, %v434
        %v436 = vrot.slane %v435, 1
        %v437 = vadd.f32 %v435, %v436
        %s438 = scalar_lea.vmem %s278, 144 [#allocation3]
        %v439 = vld [vmem:[%s438] sm:$0xff]
        %v440 = vld [vmem:[%s438 + $0x8] sm:$0xff]
        %441 = vadd.xlane.f32.xlu0 %v439
        %v442 = vpop.xlane.xlu0 %441
        %443 = vadd.xlane.f32.xlu0 %v440
        %v444 = vpop.xlane.xlu0 %443
        %v445 = vadd.f32 %v442, %v444
        %v446 = vrot.slane %v445, 4
        %v447 = vadd.f32 %v445, %v446
        %v448 = vrot.slane %v447, 2
        %v449 = vadd.f32 %v447, %v448
        %v450 = vrot.slane %v449, 1
        %v451 = vadd.f32 %v449, %v450
        %s452 = scalar_lea.vmem %s278, 160 [#allocation3]
        %v453 = vld [vmem:[%s452] sm:$0xff]
        %v454 = vld [vmem:[%s452 + $0x8] sm:$0xff]
        %455 = vadd.xlane.f32.xlu0 %v453
        %v456 = vpop.xlane.xlu0 %455
        %457 = vadd.xlane.f32.xlu0 %v454
        %v458 = vpop.xlane.xlu0 %457
        %v459 = vadd.f32 %v456, %v458
        %v460 = vrot.slane %v459, 4
        %v461 = vadd.f32 %v459, %v460
        %v462 = vrot.slane %v461, 2
        %v463 = vadd.f32 %v461, %v462
        %v464 = vrot.slane %v463, 1
        %v465 = vadd.f32 %v463, %v464
        %s466 = scalar_lea.vmem %s278, 176 [#allocation3]
        %v467 = vld [vmem:[%s466] sm:$0xff]
        %v468 = vld [vmem:[%s466 + $0x8] sm:$0xff]
        %469 = vadd.xlane.f32.xlu0 %v467
        %v470 = vpop.xlane.xlu0 %469
        %471 = vadd.xlane.f32.xlu0 %v468
        %v472 = vpop.xlane.xlu0 %471
        %v473 = vadd.f32 %v470, %v472
        %v474 = vrot.slane %v473, 4
        %v475 = vadd.f32 %v473, %v474
        %v476 = vrot.slane %v475, 2
        %v477 = vadd.f32 %v475, %v476
        %v478 = vrot.slane %v477, 1
        %v479 = vadd.f32 %v477, %v478
        %s480 = scalar_lea.vmem %s278, 192 [#allocation3]
        %v481 = vld [vmem:[%s480] sm:$0xff]
        %v482 = vld [vmem:[%s480 + $0x8] sm:$0xff]
        %483 = vadd.xlane.f32.xlu0 %v481
        %v484 = vpop.xlane.xlu0 %483
        %485 = vadd.xlane.f32.xlu0 %v482
        %v486 = vpop.xlane.xlu0 %485
        %v487 = vadd.f32 %v484, %v486
        %v488 = vrot.slane %v487, 4
        %v489 = vadd.f32 %v487, %v488
        %v490 = vrot.slane %v489, 2
        %v491 = vadd.f32 %v489, %v490
        %v492 = vrot.slane %v491, 1
        %v493 = vadd.f32 %v491, %v492
        %s494 = scalar_lea.vmem %s278, 208 [#allocation3]
        %v495 = vld [vmem:[%s494] sm:$0xff]
        %v496 = vld [vmem:[%s494 + $0x8] sm:$0xff]
        %497 = vadd.xlane.f32.xlu0 %v495
        %v498 = vpop.xlane.xlu0 %497
        %499 = vadd.xlane.f32.xlu0 %v496
        %v500 = vpop.xlane.xlu0 %499
        %v501 = vadd.f32 %v498, %v500
        %v502 = vrot.slane %v501, 4
        %v503 = vadd.f32 %v501, %v502
        %v504 = vrot.slane %v503, 2
        %v505 = vadd.f32 %v503, %v504
        %v506 = vrot.slane %v505, 1
        %v507 = vadd.f32 %v505, %v506
        %s508 = scalar_lea.vmem %s278, 224 [#allocation3]
        %v509 = vld [vmem:[%s508] sm:$0xff]
        %v510 = vld [vmem:[%s508 + $0x8] sm:$0xff]
        %511 = vadd.xlane.f32.xlu0 %v509
        %v512 = vpop.xlane.xlu0 %511
        %513 = vadd.xlane.f32.xlu0 %v510
        %v514 = vpop.xlane.xlu0 %513
        %v515 = vadd.f32 %v512, %v514
        %v516 = vrot.slane %v515, 4
        %v517 = vadd.f32 %v515, %v516
        %v518 = vrot.slane %v517, 2
        %v519 = vadd.f32 %v517, %v518
        %v520 = vrot.slane %v519, 1
        %v521 = vadd.f32 %v519, %v520
        %s522 = scalar_lea.vmem %s278, 240 [#allocation3]
        %v523 = vld [vmem:[%s522] sm:$0xff]
        %v524 = vld [vmem:[%s522 + $0x8] sm:$0xff]
        %525 = vadd.xlane.f32.xlu0 %v523
        %v526 = vpop.xlane.xlu0 %525
        %527 = vadd.xlane.f32.xlu0 %v524
        %v528 = vpop.xlane.xlu0 %527
        %v529 = vadd.f32 %v526, %v528
        %v530 = vrot.slane %v529, 4
        %v531 = vadd.f32 %v529, %v530
        %v532 = vrot.slane %v531, 2
        %v533 = vadd.f32 %v531, %v532
        %v534 = vrot.slane %v533, 1
        %v535 = vadd.f32 %v533, %v534
        %s536 = scalar_lea.vmem %s278, 256 [#allocation3]
        %v537 = vld [vmem:[%s536] sm:$0xff]
        %v538 = vld [vmem:[%s536 + $0x8] sm:$0xff]
        %539 = vadd.xlane.f32.xlu0 %v537
        %v540 = vpop.xlane.xlu0 %539
        %541 = vadd.xlane.f32.xlu0 %v538
        %v542 = vpop.xlane.xlu0 %541
        %v543 = vadd.f32 %v540, %v542
        %v544 = vrot.slane %v543, 4
        %v545 = vadd.f32 %v543, %v544
        %v546 = vrot.slane %v545, 2
        %v547 = vadd.f32 %v545, %v546
        %v548 = vrot.slane %v547, 1
        %v549 = vadd.f32 %v547, %v548
        %s550 = scalar_lea.vmem %s278, 272 [#allocation3]
        %v551 = vld [vmem:[%s550] sm:$0xff]
        %v552 = vld [vmem:[%s550 + $0x8] sm:$0xff]
        %553 = vadd.xlane.f32.xlu0 %v551
        %v554 = vpop.xlane.xlu0 %553
        %555 = vadd.xlane.f32.xlu0 %v552
        %v556 = vpop.xlane.xlu0 %555
        %v557 = vadd.f32 %v554, %v556
        %v558 = vrot.slane %v557, 4
        %v559 = vadd.f32 %v557, %v558
        %v560 = vrot.slane %v559, 2
        %v561 = vadd.f32 %v559, %v560
        %v562 = vrot.slane %v561, 1
        %v563 = vadd.f32 %v561, %v562
        %s564 = scalar_lea.vmem %s278, 288 [#allocation3]
        %v565 = vld [vmem:[%s564] sm:$0xff]
        %v566 = vld [vmem:[%s564 + $0x8] sm:$0xff]
        %567 = vadd.xlane.f32.xlu0 %v565
        %v568 = vpop.xlane.xlu0 %567
        %569 = vadd.xlane.f32.xlu0 %v566
        %v570 = vpop.xlane.xlu0 %569
        %v571 = vadd.f32 %v568, %v570
        %v572 = vrot.slane %v571, 4
        %v573 = vadd.f32 %v571, %v572
        %v574 = vrot.slane %v573, 2
        %v575 = vadd.f32 %v573, %v574
        %v576 = vrot.slane %v575, 1
        %v577 = vadd.f32 %v575, %v576
        %s578 = scalar_lea.vmem %s278, 304 [#allocation3]
        %v579 = vld [vmem:[%s578] sm:$0xff]
        %v580 = vld [vmem:[%s578 + $0x8] sm:$0xff]
        %581 = vadd.xlane.f32.xlu0 %v579
        %v582 = vpop.xlane.xlu0 %581
        %583 = vadd.xlane.f32.xlu0 %v580
        %v584 = vpop.xlane.xlu0 %583
        %v585 = vadd.f32 %v582, %v584
        %v586 = vrot.slane %v585, 4
        %v587 = vadd.f32 %v585, %v586
        %v588 = vrot.slane %v587, 2
        %v589 = vadd.f32 %v587, %v588
        %v590 = vrot.slane %v589, 1
        %v591 = vadd.f32 %v589, %v590
        %s592 = scalar_lea.vmem %s278, 320 [#allocation3]
        %v593 = vld [vmem:[%s592] sm:$0xff]
        %v594 = vld [vmem:[%s592 + $0x8] sm:$0xff]
        %595 = vadd.xlane.f32.xlu0 %v593
        %v596 = vpop.xlane.xlu0 %595
        %597 = vadd.xlane.f32.xlu0 %v594
        %v598 = vpop.xlane.xlu0 %597
        %v599 = vadd.f32 %v596, %v598
        %v600 = vrot.slane %v599, 4
        %v601 = vadd.f32 %v599, %v600
        %v602 = vrot.slane %v601, 2
        %v603 = vadd.f32 %v601, %v602
        %v604 = vrot.slane %v603, 1
        %v605 = vadd.f32 %v603, %v604
        %s606 = scalar_lea.vmem %s278, 336 [#allocation3]
        %v607 = vld [vmem:[%s606] sm:$0xff]
        %v608 = vld [vmem:[%s606 + $0x8] sm:$0xff]
        %609 = vadd.xlane.f32.xlu0 %v607
        %v610 = vpop.xlane.xlu0 %609
        %611 = vadd.xlane.f32.xlu0 %v608
        %v612 = vpop.xlane.xlu0 %611
        %v613 = vadd.f32 %v610, %v612
        %v614 = vrot.slane %v613, 4
        %v615 = vadd.f32 %v613, %v614
        %v616 = vrot.slane %v615, 2
        %v617 = vadd.f32 %v615, %v616
        %v618 = vrot.slane %v617, 1
        %v619 = vadd.f32 %v617, %v618
        %s620 = scalar_lea.vmem %s278, 352 [#allocation3]
        %v621 = vld [vmem:[%s620] sm:$0xff]
        %v622 = vld [vmem:[%s620 + $0x8] sm:$0xff]
        %623 = vadd.xlane.f32.xlu0 %v621
        %v624 = vpop.xlane.xlu0 %623
        %625 = vadd.xlane.f32.xlu0 %v622
        %v626 = vpop.xlane.xlu0 %625
        %v627 = vadd.f32 %v624, %v626
        %v628 = vrot.slane %v627, 4
        %v629 = vadd.f32 %v627, %v628
        %v630 = vrot.slane %v629, 2
        %v631 = vadd.f32 %v629, %v630
        %v632 = vrot.slane %v631, 1
        %v633 = vadd.f32 %v631, %v632
        %s634 = scalar_lea.vmem %s278, 368 [#allocation3]
        %v635 = vld [vmem:[%s634] sm:$0xff]
        %v636 = vld [vmem:[%s634 + $0x8] sm:$0xff]
        %637 = vadd.xlane.f32.xlu0 %v635
        %v638 = vpop.xlane.xlu0 %637
        %639 = vadd.xlane.f32.xlu0 %v636
        %v640 = vpop.xlane.xlu0 %639
        %v641 = vadd.f32 %v638, %v640
        %v642 = vrot.slane %v641, 4
        %v643 = vadd.f32 %v641, %v642
        %v644 = vrot.slane %v643, 2
        %v645 = vadd.f32 %v643, %v644
        %v646 = vrot.slane %v645, 1
        %v647 = vadd.f32 %v645, %v646
        %s648 = scalar_lea.vmem %s278, 384 [#allocation3]
        %v649 = vld [vmem:[%s648] sm:$0xff]
        %v650 = vld [vmem:[%s648 + $0x8] sm:$0xff]
        %651 = vadd.xlane.f32.xlu0 %v649
        %v652 = vpop.xlane.xlu0 %651
        %653 = vadd.xlane.f32.xlu0 %v650
        %v654 = vpop.xlane.xlu0 %653
        %v655 = vadd.f32 %v652, %v654
        %v656 = vrot.slane %v655, 4
        %v657 = vadd.f32 %v655, %v656
        %v658 = vrot.slane %v657, 2
        %v659 = vadd.f32 %v657, %v658
        %v660 = vrot.slane %v659, 1
        %v661 = vadd.f32 %v659, %v660
        %s662 = scalar_lea.vmem %s278, 400 [#allocation3]
        %v663 = vld [vmem:[%s662] sm:$0xff]
        %v664 = vld [vmem:[%s662 + $0x8] sm:$0xff]
        %665 = vadd.xlane.f32.xlu0 %v663
        %v666 = vpop.xlane.xlu0 %665
        %667 = vadd.xlane.f32.xlu0 %v664
        %v668 = vpop.xlane.xlu0 %667
        %v669 = vadd.f32 %v666, %v668
        %v670 = vrot.slane %v669, 4
        %v671 = vadd.f32 %v669, %v670
        %v672 = vrot.slane %v671, 2
        %v673 = vadd.f32 %v671, %v672
        %v674 = vrot.slane %v673, 1
        %v675 = vadd.f32 %v673, %v674
        %s676 = scalar_lea.vmem %s278, 416 [#allocation3]
        %v677 = vld [vmem:[%s676] sm:$0xff]
        %v678 = vld [vmem:[%s676 + $0x8] sm:$0xff]
        %679 = vadd.xlane.f32.xlu0 %v677
        %v680 = vpop.xlane.xlu0 %679
        %681 = vadd.xlane.f32.xlu0 %v678
        %v682 = vpop.xlane.xlu0 %681
        %v683 = vadd.f32 %v680, %v682
        %v684 = vrot.slane %v683, 4
        %v685 = vadd.f32 %v683, %v684
        %v686 = vrot.slane %v685, 2
        %v687 = vadd.f32 %v685, %v686
        %v688 = vrot.slane %v687, 1
        %v689 = vadd.f32 %v687, %v688
        %s690 = scalar_lea.vmem %s278, 432 [#allocation3]
        %v691 = vld [vmem:[%s690] sm:$0xff]
        %v692 = vld [vmem:[%s690 + $0x8] sm:$0xff]
        %693 = vadd.xlane.f32.xlu0 %v691
        %v694 = vpop.xlane.xlu0 %693
        %695 = vadd.xlane.f32.xlu0 %v692
        %v696 = vpop.xlane.xlu0 %695
        %v697 = vadd.f32 %v694, %v696
        %v698 = vrot.slane %v697, 4
        %v699 = vadd.f32 %v697, %v698
        %v700 = vrot.slane %v699, 2
        %v701 = vadd.f32 %v699, %v700
        %v702 = vrot.slane %v701, 1
        %v703 = vadd.f32 %v701, %v702
        %s704 = scalar_lea.vmem %s278, 448 [#allocation3]
        %v705 = vld [vmem:[%s704] sm:$0xff]
        %v706 = vld [vmem:[%s704 + $0x8] sm:$0xff]
        %707 = vadd.xlane.f32.xlu0 %v705
        %v708 = vpop.xlane.xlu0 %707
        %709 = vadd.xlane.f32.xlu0 %v706
        %v710 = vpop.xlane.xlu0 %709
        %v711 = vadd.f32 %v708, %v710
        %v712 = vrot.slane %v711, 4
        %v713 = vadd.f32 %v711, %v712
        %v714 = vrot.slane %v713, 2
        %v715 = vadd.f32 %v713, %v714
        %v716 = vrot.slane %v715, 1
        %v717 = vadd.f32 %v715, %v716
        %s718 = scalar_lea.vmem %s278, 464 [#allocation3]
        %v719 = vld [vmem:[%s718] sm:$0xff]
        %v720 = vld [vmem:[%s718 + $0x8] sm:$0xff]
        %721 = vadd.xlane.f32.xlu0 %v719
        %v722 = vpop.xlane.xlu0 %721
        %723 = vadd.xlane.f32.xlu0 %v720
        %v724 = vpop.xlane.xlu0 %723
        %v725 = vadd.f32 %v722, %v724
        %v726 = vrot.slane %v725, 4
        %v727 = vadd.f32 %v725, %v726
        %v728 = vrot.slane %v727, 2
        %v729 = vadd.f32 %v727, %v728
        %v730 = vrot.slane %v729, 1
        %v731 = vadd.f32 %v729, %v730
        %s732 = scalar_lea.vmem %s278, 480 [#allocation3]
        %v733 = vld [vmem:[%s732] sm:$0xff]
        %v734 = vld [vmem:[%s732 + $0x8] sm:$0xff]
        %735 = vadd.xlane.f32.xlu0 %v733
        %v736 = vpop.xlane.xlu0 %735
        %737 = vadd.xlane.f32.xlu0 %v734
        %v738 = vpop.xlane.xlu0 %737
        %v739 = vadd.f32 %v736, %v738
        %v740 = vrot.slane %v739, 4
        %v741 = vadd.f32 %v739, %v740
        %v742 = vrot.slane %v741, 2
        %v743 = vadd.f32 %v741, %v742
        %v744 = vrot.slane %v743, 1
        %v745 = vadd.f32 %v743, %v744
        %s746 = scalar_lea.vmem %s278, 496 [#allocation3]
        %v747 = vld [vmem:[%s746] sm:$0xff]
        %v748 = vld [vmem:[%s746 + $0x8] sm:$0xff]
        %749 = vadd.xlane.f32.xlu0 %v747
        %v750 = vpop.xlane.xlu0 %749
        %751 = vadd.xlane.f32.xlu0 %v748
        %v752 = vpop.xlane.xlu0 %751
        %v753 = vadd.f32 %v750, %v752
        %v754 = vrot.slane %v753, 4
        %v755 = vadd.f32 %v753, %v754
        %v756 = vrot.slane %v755, 2
        %v757 = vadd.f32 %v755, %v756
        %v758 = vrot.slane %v757, 1
        %v759 = vadd.f32 %v757, %v758
        %vm760 = vcmask 7168
        %v761 = vsel %vm760, %v325, %v339
        %vm762 = vcmask 15360
        %v763 = vsel %vm762, %v761, %v353
        %vm764 = vcmask 23552
        %v765 = vsel %vm764, %v763, %v367
        %vm766 = vcmask 31744
        %v767 = vsel %vm766, %v765, %v381
        %vm768 = vcmask 39936
        %v769 = vsel %vm768, %v767, %v395
        %vm770 = vcmask 48128
        %v771 = vsel %vm770, %v769, %v409
        %vm772 = vcmask 56320
        %v773 = vsel %vm772, %v771, %v423
        %vm774 = vcmask 64512
        %v775 = vsel %vm774, %v773, %v437
        %vm776 = vcmask 72704
        %v777 = vsel %vm776, %v775, %v451
        %vm778 = vcmask 80896
        %v779 = vsel %vm778, %v777, %v465
        %vm780 = vcmask 89088
        %v781 = vsel %vm780, %v779, %v479
        %vm782 = vcmask 97280
        %v783 = vsel %vm782, %v781, %v493
        %vm784 = vcmask 105472
        %v785 = vsel %vm784, %v783, %v507
        %vm786 = vcmask 113664
        %v787 = vsel %vm786, %v785, %v521
        %vm788 = vcmask 121856
        %v789 = vsel %vm788, %v787, %v535
        %v790 = vsel %vm760, %v549, %v563
        %v791 = vsel %vm762, %v790, %v577
        %v792 = vsel %vm764, %v791, %v591
        %v793 = vsel %vm766, %v792, %v605
        %v794 = vsel %vm768, %v793, %v619
        %v795 = vsel %vm770, %v794, %v633
        %v796 = vsel %vm772, %v795, %v647
        %v797 = vsel %vm774, %v796, %v661
        %v798 = vsel %vm776, %v797, %v675
        %v799 = vsel %vm778, %v798, %v689
        %v800 = vsel %vm780, %v799, %v703
        %v801 = vsel %vm782, %v800, %v717
        %v802 = vsel %vm784, %v801, %v731
        %v803 = vsel %vm786, %v802, %v745
        %v804 = vsel %vm788, %v803, %v759
        %806 = vrot.lane.b32.xlu0 %v804, 16
        %v807 = vpop.permute.xlu0 %806
        %vm809 = vcmask 130048
        %v810 = vsel %vm809, %v789, %v807
        %v811 = vmul.f32 %v810, 0.00048828125
        %v812 = vld [vmem:[%s1] sm:$0xff]
        %v813 = vld [vmem:[%s1 + $0x8] sm:$0xff]
        %v814 = vld [vmem:[%s1 + $0x10] sm:$0xff]
        %v815 = vld [vmem:[%s1 + $0x18] sm:$0xff]
        %v816 = vld [vmem:[%s2] sm:$0x1]
        %vm817 = vcmask 261120
        %v819 = vsel %vm817, %v811, 0
        %821 = vmatprep.subr.mxu0 0.0
        %822 = vmatpush1.msra.mxu0 0.0
        %823 = vmatprep.subr.mxu0 0.0
        %824 = vmatpush1.msra.mxu0 0.0
        %825 = vmatprep.subr.mxu0 0.0
        %826 = vmatpush1.msra.mxu0 0.0
        %827 = vmatprep.subr.mxu0 0.0
        %828 = vmatpush1.msra.mxu0 0.0
        %829 = vmatprep.subr.mxu0 0.0
        %830 = vmatpush1.msra.mxu0 0.0
        %831 = vmatprep.subr.mxu0 0.0
        %832 = vmatpush1.msra.mxu0 0.0
        %833 = vmatprep.subr.mxu0 0.0
        %834 = vmatpush1.msra.mxu0 0.0
        %835 = vmatprep.subr.mxu0 0.0
        %836 = vmatpush1.msra.mxu0 0.0
        %837 = vmatprep.subr.mxu0 0.0
        %838 = vmatpush1.msra.mxu0 0.0
        %839 = vmatprep.subr.mxu0 0.0
        %840 = vmatpush1.msra.mxu0 0.0
        %841 = vmatprep.subr.mxu0 0.0
        %842 = vmatpush1.msra.mxu0 0.0
        %843 = vmatprep.subr.mxu0 0.0
        %844 = vmatpush1.msra.mxu0 0.0
        %845 = vmatprep.subr.mxu0 0.0
        %846 = vmatpush1.msra.mxu0 %v815
        %847 = vmatprep.subr.mxu0 0.0
        %848 = vmatpush1.msra.mxu0 %v814
        %849 = vmatprep.subr.mxu0 0.0
        %850 = vmatpush1.msra.mxu0 %v813
        %851 = vmatprep.subr.mxu0 0.0
        %852 = vmatpush1.msra.mxu0 %v812
        %853 = vmatprep.subr.mxu0 0.0
        %854 = vmatpush2.msra.mxu0 0.0
        %855 = vmatprep.subr.mxu0 0.0
        %856 = vmatpush2.msra.mxu0 0.0
        %857 = vmatprep.subr.mxu0 0.0
        %858 = vmatpush2.msra.mxu0 0.0
        %859 = vmatprep.subr.mxu0 0.0
        %860 = vmatpush2.msra.mxu0 0.0
        %861 = vmatprep.subr.mxu0 0.0
        %862 = vmatpush2.msra.mxu0 0.0
        %863 = vmatprep.subr.mxu0 0.0
        %864 = vmatpush2.msra.mxu0 0.0
        %865 = vmatprep.subr.mxu0 0.0
        %866 = vmatpush2.msra.mxu0 0.0
        %867 = vmatprep.subr.mxu0 0.0
        %868 = vmatpush2.msra.mxu0 0.0
        %869 = vmatprep.subr.mxu0 0.0
        %870 = vmatpush2.msra.mxu0 0.0
        %871 = vmatprep.subr.mxu0 0.0
        %872 = vmatpush2.msra.mxu0 0.0
        %873 = vmatprep.subr.mxu0 0.0
        %874 = vmatpush2.msra.mxu0 0.0
        %875 = vmatprep.subr.mxu0 0.0
        %876 = vmatpush2.msra.mxu0 0.0
        %877 = vmatprep.subr.mxu0 0.0
        %878 = vmatpush2.msra.mxu0 0.0
        %879 = vmatprep.subr.mxu0 0.0
        %880 = vmatpush2.msra.mxu0 0.0
        %881 = vmatprep.subr.mxu0 0.0
        %882 = vmatpush2.msra.mxu0 0.0
        %883 = vmatprep.subr.mxu0 0.0
        %884 = vmatpush2.msra.mxu0 0.0
        %885 = vmatprep.mubr.f32.mxu0 0.0
        %886 = vmatmul.mubr.f32.gmra.mxu0 %v819
        %v887 = vpop.f32.mrf.mxu0
        %v888 = vadd.f32 %v816, %v887
        %v889 = vpop.f32.mrf.mxu0
        %890 = vdwg.mxu0
        %v891 = vmax.f32 %v888, 0.0
        %v892 = vld [vmem:[%s3] sm:$0x3]
        %v893 = vld [vmem:[%s4] sm:$0x1]
        %v895 = vsel %vm762, %v891, 0
        %vm897 = vcmask 1041408
        %v899 = vsel %vm897, %v892, 0
        %901 = vmatprep.subr.mxu0 0.0
        %902 = vmatpush1.msra.mxu0 0.0
        %903 = vmatprep.subr.mxu0 0.0
        %904 = vmatpush1.msra.mxu0 0.0
        %905 = vmatprep.subr.mxu0 0.0
        %906 = vmatpush1.msra.mxu0 0.0
        %907 = vmatprep.subr.mxu0 0.0
        %908 = vmatpush1.msra.mxu0 0.0
        %909 = vmatprep.subr.mxu0 0.0
        %910 = vmatpush1.msra.mxu0 0.0
        %911 = vmatprep.subr.mxu0 0.0
        %912 = vmatpush1.msra.mxu0 0.0
        %913 = vmatprep.subr.mxu0 0.0
        %914 = vmatpush1.msra.mxu0 0.0
        %915 = vmatprep.subr.mxu0 0.0
        %916 = vmatpush1.msra.mxu0 0.0
        %917 = vmatprep.subr.mxu0 0.0
        %918 = vmatpush1.msra.mxu0 0.0
        %919 = vmatprep.subr.mxu0 0.0
        %920 = vmatpush1.msra.mxu0 0.0
        %921 = vmatprep.subr.mxu0 0.0
        %922 = vmatpush1.msra.mxu0 0.0
        %923 = vmatprep.subr.mxu0 0.0
        %924 = vmatpush1.msra.mxu0 0.0
        %925 = vmatprep.subr.mxu0 0.0
        %926 = vmatpush1.msra.mxu0 0.0
        %927 = vmatprep.subr.mxu0 0.0
        %928 = vmatpush1.msra.mxu0 0.0
        %929 = vmatprep.subr.mxu0 0.0
        %930 = vmatpush1.msra.mxu0 0.0
        %931 = vmatprep.subr.mxu0 0.0
        %932 = vmatpush1.msra.mxu0 %v899
        %933 = vmatprep.subr.mxu0 0.0
        %934 = vmatpush2.msra.mxu0 0.0
        %935 = vmatprep.subr.mxu0 0.0
        %936 = vmatpush2.msra.mxu0 0.0
        %937 = vmatprep.subr.mxu0 0.0
        %938 = vmatpush2.msra.mxu0 0.0
        %939 = vmatprep.subr.mxu0 0.0
        %940 = vmatpush2.msra.mxu0 0.0
        %941 = vmatprep.subr.mxu0 0.0
        %942 = vmatpush2.msra.mxu0 0.0
        %943 = vmatprep.subr.mxu0 0.0
        %944 = vmatpush2.msra.mxu0 0.0
        %945 = vmatprep.subr.mxu0 0.0
        %946 = vmatpush2.msra.mxu0 0.0
        %947 = vmatprep.subr.mxu0 0.0
        %948 = vmatpush2.msra.mxu0 0.0
        %949 = vmatprep.subr.mxu0 0.0
        %950 = vmatpush2.msra.mxu0 0.0
        %951 = vmatprep.subr.mxu0 0.0
        %952 = vmatpush2.msra.mxu0 0.0
        %953 = vmatprep.subr.mxu0 0.0
        %954 = vmatpush2.msra.mxu0 0.0
        %955 = vmatprep.subr.mxu0 0.0
        %956 = vmatpush2.msra.mxu0 0.0
        %957 = vmatprep.subr.mxu0 0.0
        %958 = vmatpush2.msra.mxu0 0.0
        %959 = vmatprep.subr.mxu0 0.0
        %960 = vmatpush2.msra.mxu0 0.0
        %961 = vmatprep.subr.mxu0 0.0
        %962 = vmatpush2.msra.mxu0 0.0
        %963 = vmatprep.subr.mxu0 0.0
        %964 = vmatpush2.msra.mxu0 0.0
        %965 = vmatprep.mubr.f32.mxu0 0.0
        %966 = vmatmul.mubr.f32.gmra.mxu0 %v895
        %v967 = vpop.f32.mrf.mxu0
        %v968 = vadd.f32 %v893, %v967
        %v969 = vpop.f32.mrf.mxu0
        %970 = vdwg.mxu0
        %v971 = vxor.u32 %v968, 2147483648
        %v972 = vmul.f32 %v971, 1.442695
        %v973 = vpow.pop %v972
        %v974 = vadd.f32 %v973, 1.0
        %v975 = vrcp.pop %v974
        %v976 = vmul.f32 1.0, %v975
        %s978 = vtos %v976
        %v979 = vstv %s978
        %v981 = vmul.f32 %v313, %v979
        %v982 = vmul.f32 %v314, %v979
        %v983 = vadd.f32 %v981, 0.0
        %v984 = vadd.f32 %v982, 0.0
        %985 = vrot.lane.b32.xlu0 %v976, 127
        %v986 = vpop.permute.xlu0 %985
        %s987 = vtos %v986
        %v988 = vstv %s987
        %v990 = vmul.f32 %v327, %v988
        %v991 = vmul.f32 %v328, %v988
        %v992 = vadd.f32 %v983, %v990
        %v993 = vadd.f32 %v984, %v991
        %v994 = vmax.f32 %v981, %v990
        %v995 = vmax.f32 %v982, %v991
        %996 = vrot.lane.b32.xlu0 %v976, 126
        %v997 = vpop.permute.xlu0 %996
        %s998 = vtos %v997
        %v999 = vstv %s998
        %v1001 = vmul.f32 %v341, %v999
        %v1002 = vmul.f32 %v342, %v999
        %v1003 = vadd.f32 %v992, %v1001
        %v1004 = vadd.f32 %v993, %v1002
        %v1005 = vmax.f32 %v994, %v1001
        %v1006 = vmax.f32 %v995, %v1002
        %1007 = vrot.lane.b32.xlu0 %v976, 125
        %v1008 = vpop.permute.xlu0 %1007
        %s1009 = vtos %v1008
        %v1010 = vstv %s1009
        %v1012 = vmul.f32 %v355, %v1010
        %v1013 = vmul.f32 %v356, %v1010
        %v1014 = vadd.f32 %v1003, %v1012
        %v1015 = vadd.f32 %v1004, %v1013
        %v1016 = vmax.f32 %v1005, %v1012
        %v1017 = vmax.f32 %v1006, %v1013
        %1018 = vrot.lane.b32.xlu0 %v976, 124
        %v1019 = vpop.permute.xlu0 %1018
        %s1020 = vtos %v1019
        %v1021 = vstv %s1020
        %v1023 = vmul.f32 %v369, %v1021
        %v1024 = vmul.f32 %v370, %v1021
        %v1025 = vadd.f32 %v1014, %v1023
        %v1026 = vadd.f32 %v1015, %v1024
        %v1027 = vmax.f32 %v1016, %v1023
        %v1028 = vmax.f32 %v1017, %v1024
        %1029 = vrot.lane.b32.xlu0 %v976, 123
        %v1030 = vpop.permute.xlu0 %1029
        %s1031 = vtos %v1030
        %v1032 = vstv %s1031
        %v1034 = vmul.f32 %v383, %v1032
        %v1035 = vmul.f32 %v384, %v1032
        %v1036 = vadd.f32 %v1025, %v1034
        %v1037 = vadd.f32 %v1026, %v1035
        %v1038 = vmax.f32 %v1027, %v1034
        %v1039 = vmax.f32 %v1028, %v1035
        %1040 = vrot.lane.b32.xlu0 %v976, 122
        %v1041 = vpop.permute.xlu0 %1040
        %s1042 = vtos %v1041
        %v1043 = vstv %s1042
        %v1045 = vmul.f32 %v397, %v1043
        %v1046 = vmul.f32 %v398, %v1043
        %v1047 = vadd.f32 %v1036, %v1045
        %v1048 = vadd.f32 %v1037, %v1046
        %v1049 = vmax.f32 %v1038, %v1045
        %v1050 = vmax.f32 %v1039, %v1046
        %1051 = vrot.lane.b32.xlu0 %v976, 121
        %v1052 = vpop.permute.xlu0 %1051
        %s1053 = vtos %v1052
        %v1054 = vstv %s1053
        %v1056 = vmul.f32 %v411, %v1054
        %v1057 = vmul.f32 %v412, %v1054
        %v1058 = vadd.f32 %v1047, %v1056
        %v1059 = vadd.f32 %v1048, %v1057
        %v1060 = vmax.f32 %v1049, %v1056
        %v1061 = vmax.f32 %v1050, %v1057
        %1062 = vrot.lane.b32.xlu0 %v976, 120
        %v1063 = vpop.permute.xlu0 %1062
        %s1064 = vtos %v1063
        %v1065 = vstv %s1064
        %v1067 = vmul.f32 %v425, %v1065
        %v1068 = vmul.f32 %v426, %v1065
        %v1069 = vadd.f32 %v1058, %v1067
        %v1070 = vadd.f32 %v1059, %v1068
        %v1071 = vmax.f32 %v1060, %v1067
        %v1072 = vmax.f32 %v1061, %v1068
        %1073 = vrot.lane.b32.xlu0 %v976, 119
        %v1074 = vpop.permute.xlu0 %1073
        %s1075 = vtos %v1074
        %v1076 = vstv %s1075
        %v1078 = vmul.f32 %v439, %v1076
        %v1079 = vmul.f32 %v440, %v1076
        %v1080 = vadd.f32 %v1069, %v1078
        %v1081 = vadd.f32 %v1070, %v1079
        %v1082 = vmax.f32 %v1071, %v1078
        %v1083 = vmax.f32 %v1072, %v1079
        %1084 = vrot.lane.b32.xlu0 %v976, 118
        %v1085 = vpop.permute.xlu0 %1084
        %s1086 = vtos %v1085
        %v1087 = vstv %s1086
        %v1089 = vmul.f32 %v453, %v1087
        %v1090 = vmul.f32 %v454, %v1087
        %v1091 = vadd.f32 %v1080, %v1089
        %v1092 = vadd.f32 %v1081, %v1090
        %v1093 = vmax.f32 %v1082, %v1089
        %v1094 = vmax.f32 %v1083, %v1090
        %1095 = vrot.lane.b32.xlu0 %v976, 117
        %v1096 = vpop.permute.xlu0 %1095
        %s1097 = vtos %v1096
        %v1098 = vstv %s1097
        %v1100 = vmul.f32 %v467, %v1098
        %v1101 = vmul.f32 %v468, %v1098
        %v1102 = vadd.f32 %v1091, %v1100
        %v1103 = vadd.f32 %v1092, %v1101
        %v1104 = vmax.f32 %v1093, %v1100
        %v1105 = vmax.f32 %v1094, %v1101
        %1106 = vrot.lane.b32.xlu0 %v976, 116
        %v1107 = vpop.permute.xlu0 %1106
        %s1108 = vtos %v1107
        %v1109 = vstv %s1108
        %v1111 = vmul.f32 %v481, %v1109
        %v1112 = vmul.f32 %v482, %v1109
        %v1113 = vadd.f32 %v1102, %v1111
        %v1114 = vadd.f32 %v1103, %v1112
        %v1115 = vmax.f32 %v1104, %v1111
        %v1116 = vmax.f32 %v1105, %v1112
        %1117 = vrot.lane.b32.xlu0 %v976, 115
        %v1118 = vpop.permute.xlu0 %1117
        %s1119 = vtos %v1118
        %v1120 = vstv %s1119
        %v1122 = vmul.f32 %v495, %v1120
        %v1123 = vmul.f32 %v496, %v1120
        %v1124 = vadd.f32 %v1113, %v1122
        %v1125 = vadd.f32 %v1114, %v1123
        %v1126 = vmax.f32 %v1115, %v1122
        %v1127 = vmax.f32 %v1116, %v1123
        %1128 = vrot.lane.b32.xlu0 %v976, 114
        %v1129 = vpop.permute.xlu0 %1128
        %s1130 = vtos %v1129
        %v1131 = vstv %s1130
        %v1133 = vmul.f32 %v509, %v1131
        %v1134 = vmul.f32 %v510, %v1131
        %v1135 = vadd.f32 %v1124, %v1133
        %v1136 = vadd.f32 %v1125, %v1134
        %v1137 = vmax.f32 %v1126, %v1133
        %v1138 = vmax.f32 %v1127, %v1134
        %1139 = vrot.lane.b32.xlu0 %v976, 113
        %v1140 = vpop.permute.xlu0 %1139
        %s1141 = vtos %v1140
        %v1142 = vstv %s1141
        %v1144 = vmul.f32 %v523, %v1142
        %v1145 = vmul.f32 %v524, %v1142
        %v1146 = vadd.f32 %v1135, %v1144
        %v1147 = vadd.f32 %v1136, %v1145
        %v1148 = vmax.f32 %v1137, %v1144
        %v1149 = vmax.f32 %v1138, %v1145
        %1150 = vrot.lane.b32.xlu0 %v976, 112
        %v1151 = vpop.permute.xlu0 %1150
        %s1152 = vtos %v1151
        %v1153 = vstv %s1152
        %v1155 = vmul.f32 %v537, %v1153
        %v1156 = vmul.f32 %v538, %v1153
        %v1157 = vadd.f32 %v1146, %v1155
        %v1158 = vadd.f32 %v1147, %v1156
        %v1159 = vmax.f32 %v1148, %v1155
        %v1160 = vmax.f32 %v1149, %v1156
        %1161 = vrot.lane.b32.xlu0 %v976, 111
        %v1162 = vpop.permute.xlu0 %1161
        %s1163 = vtos %v1162
        %v1164 = vstv %s1163
        %v1166 = vmul.f32 %v551, %v1164
        %v1167 = vmul.f32 %v552, %v1164
        %v1168 = vadd.f32 %v1157, %v1166
        %v1169 = vadd.f32 %v1158, %v1167
        %v1170 = vmax.f32 %v1159, %v1166
        %v1171 = vmax.f32 %v1160, %v1167
        %1172 = vrot.lane.b32.xlu0 %v976, 110
        %v1173 = vpop.permute.xlu0 %1172
        %s1174 = vtos %v1173
        %v1175 = vstv %s1174
        %v1177 = vmul.f32 %v565, %v1175
        %v1178 = vmul.f32 %v566, %v1175
        %v1179 = vadd.f32 %v1168, %v1177
        %v1180 = vadd.f32 %v1169, %v1178
        %v1181 = vmax.f32 %v1170, %v1177
        %v1182 = vmax.f32 %v1171, %v1178
        %1183 = vrot.lane.b32.xlu0 %v976, 109
        %v1184 = vpop.permute.xlu0 %1183
        %s1185 = vtos %v1184
        %v1186 = vstv %s1185
        %v1188 = vmul.f32 %v579, %v1186
        %v1189 = vmul.f32 %v580, %v1186
        %v1190 = vadd.f32 %v1179, %v1188
        %v1191 = vadd.f32 %v1180, %v1189
        %v1192 = vmax.f32 %v1181, %v1188
        %v1193 = vmax.f32 %v1182, %v1189
        %1194 = vrot.lane.b32.xlu0 %v976, 108
        %v1195 = vpop.permute.xlu0 %1194
        %s1196 = vtos %v1195
        %v1197 = vstv %s1196
        %v1199 = vmul.f32 %v593, %v1197
        %v1200 = vmul.f32 %v594, %v1197
        %v1201 = vadd.f32 %v1190, %v1199
        %v1202 = vadd.f32 %v1191, %v1200
        %v1203 = vmax.f32 %v1192, %v1199
        %v1204 = vmax.f32 %v1193, %v1200
        %1205 = vrot.lane.b32.xlu0 %v976, 107
        %v1206 = vpop.permute.xlu0 %1205
        %s1207 = vtos %v1206
        %v1208 = vstv %s1207
        %v1210 = vmul.f32 %v607, %v1208
        %v1211 = vmul.f32 %v608, %v1208
        %v1212 = vadd.f32 %v1201, %v1210
        %v1213 = vadd.f32 %v1202, %v1211
        %v1214 = vmax.f32 %v1203, %v1210
        %v1215 = vmax.f32 %v1204, %v1211
        %1216 = vrot.lane.b32.xlu0 %v976, 106
        %v1217 = vpop.permute.xlu0 %1216
        %s1218 = vtos %v1217
        %v1219 = vstv %s1218
        %v1221 = vmul.f32 %v621, %v1219
        %v1222 = vmul.f32 %v622, %v1219
        %v1223 = vadd.f32 %v1212, %v1221
        %v1224 = vadd.f32 %v1213, %v1222
        %v1225 = vmax.f32 %v1214, %v1221
        %v1226 = vmax.f32 %v1215, %v1222
        %1227 = vrot.lane.b32.xlu0 %v976, 105
        %v1228 = vpop.permute.xlu0 %1227
        %s1229 = vtos %v1228
        %v1230 = vstv %s1229
        %v1232 = vmul.f32 %v635, %v1230
        %v1233 = vmul.f32 %v636, %v1230
        %v1234 = vadd.f32 %v1223, %v1232
        %v1235 = vadd.f32 %v1224, %v1233
        %v1236 = vmax.f32 %v1225, %v1232
        %v1237 = vmax.f32 %v1226, %v1233
        %1238 = vrot.lane.b32.xlu0 %v976, 104
        %v1239 = vpop.permute.xlu0 %1238
        %s1240 = vtos %v1239
        %v1241 = vstv %s1240
        %v1243 = vmul.f32 %v649, %v1241
        %v1244 = vmul.f32 %v650, %v1241
        %v1245 = vadd.f32 %v1234, %v1243
        %v1246 = vadd.f32 %v1235, %v1244
        %v1247 = vmax.f32 %v1236, %v1243
        %v1248 = vmax.f32 %v1237, %v1244
        %1249 = vrot.lane.b32.xlu0 %v976, 103
        %v1250 = vpop.permute.xlu0 %1249
        %s1251 = vtos %v1250
        %v1252 = vstv %s1251
        %v1254 = vmul.f32 %v663, %v1252
        %v1255 = vmul.f32 %v664, %v1252
        %v1256 = vadd.f32 %v1245, %v1254
        %v1257 = vadd.f32 %v1246, %v1255
        %v1258 = vmax.f32 %v1247, %v1254
        %v1259 = vmax.f32 %v1248, %v1255
        %1260 = vrot.lane.b32.xlu0 %v976, 102
        %v1261 = vpop.permute.xlu0 %1260
        %s1262 = vtos %v1261
        %v1263 = vstv %s1262
        %v1265 = vmul.f32 %v677, %v1263
        %v1266 = vmul.f32 %v678, %v1263
        %v1267 = vadd.f32 %v1256, %v1265
        %v1268 = vadd.f32 %v1257, %v1266
        %v1269 = vmax.f32 %v1258, %v1265
        %v1270 = vmax.f32 %v1259, %v1266
        %1271 = vrot.lane.b32.xlu0 %v976, 101
        %v1272 = vpop.permute.xlu0 %1271
        %s1273 = vtos %v1272
        %v1274 = vstv %s1273
        %v1276 = vmul.f32 %v691, %v1274
        %v1277 = vmul.f32 %v692, %v1274
        %v1278 = vadd.f32 %v1267, %v1276
        %v1279 = vadd.f32 %v1268, %v1277
        %v1280 = vmax.f32 %v1269, %v1276
        %v1281 = vmax.f32 %v1270, %v1277
        %1282 = vrot.lane.b32.xlu0 %v976, 100
        %v1283 = vpop.permute.xlu0 %1282
        %s1284 = vtos %v1283
        %v1285 = vstv %s1284
        %v1287 = vmul.f32 %v705, %v1285
        %v1288 = vmul.f32 %v706, %v1285
        %v1289 = vadd.f32 %v1278, %v1287
        %v1290 = vadd.f32 %v1279, %v1288
        %v1291 = vmax.f32 %v1280, %v1287
        %v1292 = vmax.f32 %v1281, %v1288
        %1293 = vrot.lane.b32.xlu0 %v976, 99
        %v1294 = vpop.permute.xlu0 %1293
        %s1295 = vtos %v1294
        %v1296 = vstv %s1295
        %v1298 = vmul.f32 %v719, %v1296
        %v1299 = vmul.f32 %v720, %v1296
        %v1300 = vadd.f32 %v1289, %v1298
        %v1301 = vadd.f32 %v1290, %v1299
        %v1302 = vmax.f32 %v1291, %v1298
        %v1303 = vmax.f32 %v1292, %v1299
        %1304 = vrot.lane.b32.xlu0 %v976, 98
        %v1305 = vpop.permute.xlu0 %1304
        %s1306 = vtos %v1305
        %v1307 = vstv %s1306
        %v1309 = vmul.f32 %v733, %v1307
        %v1310 = vmul.f32 %v734, %v1307
        %v1311 = vadd.f32 %v1300, %v1309
        %v1312 = vadd.f32 %v1301, %v1310
        %v1313 = vmax.f32 %v1302, %v1309
        %v1314 = vmax.f32 %v1303, %v1310
        %1315 = vrot.lane.b32.xlu0 %v976, 97
        %v1316 = vpop.permute.xlu0 %1315
        %s1317 = vtos %v1316
        %v1318 = vstv %s1317
        %v1320 = vmul.f32 %v747, %v1318
        %v1321 = vmul.f32 %v748, %v1318
        %v1322 = vadd.f32 %v1311, %v1320
        %v1323 = vadd.f32 %v1312, %v1321
        %v1324 = vmax.f32 %v1313, %v1320
        %v1325 = vmax.f32 %v1314, %v1321
        %v1326 = vmul.f32 %v1322, 0.03125
        %v1327 = vmul.f32 %v1323, 0.03125
        %vm1330 = vcmask 1042432
        %v1331 = vrot.slane %v1326, 5
        %v1332 = vrot.slane %v1327, 5
        %v1333 = vsel %vm1330, %v1331, %v1332
        %v1337 = vsel %vm1330, 0.0, %v1331
        %v1338 = vsel %vm1330, %v1332, 0.0
        %v1341 = vrot.slane %v1324, 5
        %v1342 = vrot.slane %v1325, 5
        %v1343 = vsel %vm1330, %v1341, %v1342
        %v1347 = vsel %vm1330, 0.0, %v1341
        %v1348 = vsel %vm1330, %v1342, 0.0
        %v1349 = vld [vmem:[#allocation6] sm:$0xff]
        %v1350 = vld [vmem:[#allocation6 + $0x8] sm:$0xff]
        %v1351 = vld [vmem:[#allocation6 + $0x10] sm:$0xff]
        %v1352 = vld [vmem:[#allocation6 + $0x18] sm:$0xff]
        %v1353 = vld [vmem:[#allocation6 + $0x20] sm:$0xff]
        %v1354 = vld [vmem:[#allocation6 + $0x28] sm:$0xff]
        %v1355 = vld [vmem:[#allocation6 + $0x30] sm:$0xff]
        %v1356 = vld [vmem:[#allocation6 + $0x38] sm:$0xff]
        %v1357 = vld [vmem:[#allocation6 + $0x40] sm:$0xff]
        %v1358 = vld [vmem:[#allocation6 + $0x48] sm:$0xff]
        %v1359 = vld [vmem:[#allocation6 + $0x50] sm:$0xff]
        %v1360 = vld [vmem:[#allocation6 + $0x58] sm:$0xff]
        %v1361 = vld [vmem:[#allocation6 + $0x60] sm:$0xff]
        %v1362 = vld [vmem:[#allocation6 + $0x68] sm:$0xff]
        %v1363 = vld [vmem:[#allocation6 + $0x70] sm:$0xff]
        %v1364 = vld [vmem:[#allocation6 + $0x78] sm:$0xff]
        %s1365 = scalar_lea.vmem [#allocation6], 896
        %v1366 = vld [vmem:[%s1365] sm:$0xff]
        %v1367 = vld [vmem:[%s1365 + $0x8] sm:$0xff]
        %v1368 = vld [vmem:[%s1365 + $0x10] sm:$0xff]
        %v1369 = vld [vmem:[%s1365 + $0x18] sm:$0xff]
        %v1370 = vld [vmem:[%s1365 + $0x20] sm:$0xff]
        %v1371 = vld [vmem:[%s1365 + $0x28] sm:$0xff]
        %v1372 = vld [vmem:[%s1365 + $0x30] sm:$0xff]
        %v1373 = vld [vmem:[%s1365 + $0x38] sm:$0xff]
        %v1374 = vld [vmem:[%s1365 + $0x40] sm:$0xff]
        %v1375 = vld [vmem:[%s1365 + $0x48] sm:$0xff]
        %v1376 = vld [vmem:[%s1365 + $0x50] sm:$0xff]
        %v1377 = vld [vmem:[%s1365 + $0x58] sm:$0xff]
        %v1378 = vld [vmem:[%s1365 + $0x60] sm:$0xff]
        %v1379 = vld [vmem:[%s1365 + $0x68] sm:$0xff]
        %v1380 = vld [vmem:[%s1365 + $0x70] sm:$0xff]
        %v1381 = vld [vmem:[%s1365 + $0x78] sm:$0xff]
        %s1382 = scalar_lea.vmem [#allocation6], 128
        %v1383 = vld [vmem:[%s1382] sm:$0xff]
        %v1384 = vld [vmem:[%s1382 + $0x8] sm:$0xff]
        %v1385 = vld [vmem:[%s1382 + $0x10] sm:$0xff]
        %v1386 = vld [vmem:[%s1382 + $0x18] sm:$0xff]
        %v1387 = vld [vmem:[%s1382 + $0x20] sm:$0xff]
        %v1388 = vld [vmem:[%s1382 + $0x28] sm:$0xff]
        %v1389 = vld [vmem:[%s1382 + $0x30] sm:$0xff]
        %v1390 = vld [vmem:[%s1382 + $0x38] sm:$0xff]
        %v1391 = vld [vmem:[%s1382 + $0x40] sm:$0xff]
        %v1392 = vld [vmem:[%s1382 + $0x48] sm:$0xff]
        %v1393 = vld [vmem:[%s1382 + $0x50] sm:$0xff]
        %v1394 = vld [vmem:[%s1382 + $0x58] sm:$0xff]
        %v1395 = vld [vmem:[%s1382 + $0x60] sm:$0xff]
        %v1396 = vld [vmem:[%s1382 + $0x68] sm:$0xff]
        %v1397 = vld [vmem:[%s1382 + $0x70] sm:$0xff]
        %v1398 = vld [vmem:[%s1382 + $0x78] sm:$0xff]
        %vm1401 = vcmask 1046528
        %v1402 = vrot.slane %v1337, 1
        %v1403 = vrot.slane %v1333, 1
        %v1404 = vsel %vm1401, %v1402, %v1403
        %v1405 = vrot.slane %v1338, 1
        %v1406 = vsel %vm1401, %v1403, %v1405
        %1409 = vmatprep.subr.mxu0 0.0
        %1410 = vmatpush1.msra.mxu0 %v1398
        %1411 = vmatprep.subr.mxu0 0.0
        %1412 = vmatpush1.msra.mxu0 %v1397
        %1413 = vmatprep.subr.mxu0 0.0
        %1414 = vmatpush1.msra.mxu0 %v1396
        %1415 = vmatprep.subr.mxu0 0.0
        %1416 = vmatpush1.msra.mxu0 %v1395
        %1417 = vmatprep.subr.mxu0 0.0
        %1418 = vmatpush1.msra.mxu0 %v1394
        %1419 = vmatprep.subr.mxu0 0.0
        %1420 = vmatpush1.msra.mxu0 %v1393
        %1421 = vmatprep.subr.mxu0 0.0
        %1422 = vmatpush1.msra.mxu0 %v1392
        %1423 = vmatprep.subr.mxu0 0.0
        %1424 = vmatpush1.msra.mxu0 %v1391
        %1425 = vmatprep.subr.mxu0 0.0
        %1426 = vmatpush1.msra.mxu0 %v1390
        %1427 = vmatprep.subr.mxu0 0.0
        %1428 = vmatpush1.msra.mxu0 %v1389
        %1429 = vmatprep.subr.mxu0 0.0
        %1430 = vmatpush1.msra.mxu0 %v1388
        %1431 = vmatprep.subr.mxu0 0.0
        %1432 = vmatpush1.msra.mxu0 %v1387
        %1433 = vmatprep.subr.mxu0 0.0
        %1434 = vmatpush1.msra.mxu0 %v1386
        %1435 = vmatprep.subr.mxu0 0.0
        %1436 = vmatpush1.msra.mxu0 %v1385
        %1437 = vmatprep.subr.mxu0 0.0
        %1438 = vmatpush1.msra.mxu0 %v1384
        %1439 = vmatprep.subr.mxu0 0.0
        %1440 = vmatpush1.msra.mxu0 %v1383
        %1441 = vmatprep.subr.mxu0 0.0
        %1442 = vmatpush2.msra.mxu0 0.0
        %1443 = vmatprep.subr.mxu0 0.0
        %1444 = vmatpush2.msra.mxu0 0.0
        %1445 = vmatprep.subr.mxu0 0.0
        %1446 = vmatpush2.msra.mxu0 0.0
        %1447 = vmatprep.subr.mxu0 0.0
        %1448 = vmatpush2.msra.mxu0 0.0
        %1449 = vmatprep.subr.mxu0 0.0
        %1450 = vmatpush2.msra.mxu0 0.0
        %1451 = vmatprep.subr.mxu0 0.0
        %1452 = vmatpush2.msra.mxu0 0.0
        %1453 = vmatprep.subr.mxu0 0.0
        %1454 = vmatpush2.msra.mxu0 0.0
        %1455 = vmatprep.subr.mxu0 0.0
        %1456 = vmatpush2.msra.mxu0 0.0
        %1457 = vmatprep.subr.mxu0 0.0
        %1458 = vmatpush2.msra.mxu0 0.0
        %1459 = vmatprep.subr.mxu0 0.0
        %1460 = vmatpush2.msra.mxu0 0.0
        %1461 = vmatprep.subr.mxu0 0.0
        %1462 = vmatpush2.msra.mxu0 0.0
        %1463 = vmatprep.subr.mxu0 0.0
        %1464 = vmatpush2.msra.mxu0 0.0
        %1465 = vmatprep.subr.mxu0 0.0
        %1466 = vmatpush2.msra.mxu0 0.0
        %1467 = vmatprep.subr.mxu0 0.0
        %1468 = vmatpush2.msra.mxu0 0.0
        %1469 = vmatprep.subr.mxu0 0.0
        %1470 = vmatpush2.msra.mxu0 0.0
        %1471 = vmatprep.subr.mxu0 0.0
        %1472 = vmatpush2.msra.mxu0 0.0
        %1473 = vmatprep.mubr.f32.mxu0 0.0
        %1474 = vmatmul.mubr.f32.gmra.mxu0 %v1404
        %v1475 = vpop.f32.mrf.mxu0
        %v1476 = vadd.f32 0.0, %v1475
        %v1477 = vpop.f32.mrf.mxu0
        %1478 = vmatprep.mubr.f32.mxu0 0.0
        %1479 = vmatmul.mubr.f32.gmra.mxu0 %v1406
        %v1480 = vpop.f32.mrf.mxu0
        %v1481 = vadd.f32 0.0, %v1480
        %v1482 = vpop.f32.mrf.mxu0
        %1483 = vdwg.mxu0
        %1484 = vmatprep.subr.mxu0 0.0
        %1485 = vmatpush1.msra.mxu0 %v1364
        %1486 = vmatprep.subr.mxu0 0.0
        %1487 = vmatpush1.msra.mxu0 %v1363
        %1488 = vmatprep.subr.mxu0 0.0
        %1489 = vmatpush1.msra.mxu0 %v1362
        %1490 = vmatprep.subr.mxu0 0.0
        %1491 = vmatpush1.msra.mxu0 %v1361
        %1492 = vmatprep.subr.mxu0 0.0
        %1493 = vmatpush1.msra.mxu0 %v1360
        %1494 = vmatprep.subr.mxu0 0.0
        %1495 = vmatpush1.msra.mxu0 %v1359
        %1496 = vmatprep.subr.mxu0 0.0
        %1497 = vmatpush1.msra.mxu0 %v1358
        %1498 = vmatprep.subr.mxu0 0.0
        %1499 = vmatpush1.msra.mxu0 %v1357
        %1500 = vmatprep.subr.mxu0 0.0
        %1501 = vmatpush1.msra.mxu0 %v1356
        %1502 = vmatprep.subr.mxu0 0.0
        %1503 = vmatpush1.msra.mxu0 %v1355
        %1504 = vmatprep.subr.mxu0 0.0
        %1505 = vmatpush1.msra.mxu0 %v1354
        %1506 = vmatprep.subr.mxu0 0.0
        %1507 = vmatpush1.msra.mxu0 %v1353
        %1508 = vmatprep.subr.mxu0 0.0
        %1509 = vmatpush1.msra.mxu0 %v1352
        %1510 = vmatprep.subr.mxu0 0.0
        %1511 = vmatpush1.msra.mxu0 %v1351
        %1512 = vmatprep.subr.mxu0 0.0
        %1513 = vmatpush1.msra.mxu0 %v1350
        %1514 = vmatprep.subr.mxu0 0.0
        %1515 = vmatpush1.msra.mxu0 %v1349
        %1516 = vmatprep.subr.mxu0 0.0
        %1517 = vmatpush2.msra.mxu0 0.0
        %1518 = vmatprep.subr.mxu0 0.0
        %1519 = vmatpush2.msra.mxu0 0.0
        %1520 = vmatprep.subr.mxu0 0.0
        %1521 = vmatpush2.msra.mxu0 0.0
        %1522 = vmatprep.subr.mxu0 0.0
        %1523 = vmatpush2.msra.mxu0 0.0
        %1524 = vmatprep.subr.mxu0 0.0
        %1525 = vmatpush2.msra.mxu0 0.0
        %1526 = vmatprep.subr.mxu0 0.0
        %1527 = vmatpush2.msra.mxu0 0.0
        %1528 = vmatprep.subr.mxu0 0.0
        %1529 = vmatpush2.msra.mxu0 0.0
        %1530 = vmatprep.subr.mxu0 0.0
        %1531 = vmatpush2.msra.mxu0 0.0
        %1532 = vmatprep.subr.mxu0 0.0
        %1533 = vmatpush2.msra.mxu0 0.0
        %1534 = vmatprep.subr.mxu0 0.0
        %1535 = vmatpush2.msra.mxu0 0.0
        %1536 = vmatprep.subr.mxu0 0.0
        %1537 = vmatpush2.msra.mxu0 0.0
        %1538 = vmatprep.subr.mxu0 0.0
        %1539 = vmatpush2.msra.mxu0 0.0
        %1540 = vmatprep.subr.mxu0 0.0
        %1541 = vmatpush2.msra.mxu0 0.0
        %1542 = vmatprep.subr.mxu0 0.0
        %1543 = vmatpush2.msra.mxu0 0.0
        %1544 = vmatprep.subr.mxu0 0.0
        %1545 = vmatpush2.msra.mxu0 0.0
        %1546 = vmatprep.subr.mxu0 0.0
        %1547 = vmatpush2.msra.mxu0 0.0
        %1548 = vmatprep.mubr.f32.mxu0 0.0
        %1549 = vmatmul.mubr.f32.gmra.mxu0 %v1337
        %v1550 = vpop.f32.mrf.mxu0
        %v1551 = vadd.f32 %v1476, %v1550
        %v1552 = vpop.f32.mrf.mxu0
        %1553 = vmatprep.mubr.f32.mxu0 0.0
        %1554 = vmatmul.mubr.f32.gmra.mxu0 %v1333
        %v1555 = vpop.f32.mrf.mxu0
        %v1556 = vadd.f32 %v1481, %v1555
        %v1557 = vpop.f32.mrf.mxu0
        %1558 = vdwg.mxu0
        %s1559 = scalar_lea.vmem [#allocation6], 1024
        %v1560 = vld [vmem:[%s1559] sm:$0xff]
        %v1561 = vld [vmem:[%s1559 + $0x8] sm:$0xff]
        %v1562 = vld [vmem:[%s1559 + $0x10] sm:$0xff]
        %v1563 = vld [vmem:[%s1559 + $0x18] sm:$0xff]
        %v1564 = vld [vmem:[%s1559 + $0x20] sm:$0xff]
        %v1565 = vld [vmem:[%s1559 + $0x28] sm:$0xff]
        %v1566 = vld [vmem:[%s1559 + $0x30] sm:$0xff]
        %v1567 = vld [vmem:[%s1559 + $0x38] sm:$0xff]
        %v1568 = vld [vmem:[%s1559 + $0x40] sm:$0xff]
        %v1569 = vld [vmem:[%s1559 + $0x48] sm:$0xff]
        %v1570 = vld [vmem:[%s1559 + $0x50] sm:$0xff]
        %v1571 = vld [vmem:[%s1559 + $0x58] sm:$0xff]
        %v1572 = vld [vmem:[%s1559 + $0x60] sm:$0xff]
        %v1573 = vld [vmem:[%s1559 + $0x68] sm:$0xff]
        %v1574 = vld [vmem:[%s1559 + $0x70] sm:$0xff]
        %v1575 = vld [vmem:[%s1559 + $0x78] sm:$0xff]
        %v1578 = vrot.slane %v1347, 1
        %v1579 = vrot.slane %v1343, 1
        %v1580 = vsel %vm1401, %v1578, %v1579
        %v1581 = vrot.slane %v1348, 1
        %v1582 = vsel %vm1401, %v1579, %v1581
        %1585 = vmatprep.subr.mxu0 0.0
        %1586 = vmatpush1.msra.mxu0 %v1575
        %1587 = vmatprep.subr.mxu0 0.0
        %1588 = vmatpush1.msra.mxu0 %v1574
        %1589 = vmatprep.subr.mxu0 0.0
        %1590 = vmatpush1.msra.mxu0 %v1573
        %1591 = vmatprep.subr.mxu0 0.0
        %1592 = vmatpush1.msra.mxu0 %v1572
        %1593 = vmatprep.subr.mxu0 0.0
        %1594 = vmatpush1.msra.mxu0 %v1571
        %1595 = vmatprep.subr.mxu0 0.0
        %1596 = vmatpush1.msra.mxu0 %v1570
        %1597 = vmatprep.subr.mxu0 0.0
        %1598 = vmatpush1.msra.mxu0 %v1569
        %1599 = vmatprep.subr.mxu0 0.0
        %1600 = vmatpush1.msra.mxu0 %v1568
        %1601 = vmatprep.subr.mxu0 0.0
        %1602 = vmatpush1.msra.mxu0 %v1567
        %1603 = vmatprep.subr.mxu0 0.0
        %1604 = vmatpush1.msra.mxu0 %v1566
        %1605 = vmatprep.subr.mxu0 0.0
        %1606 = vmatpush1.msra.mxu0 %v1565
        %1607 = vmatprep.subr.mxu0 0.0
        %1608 = vmatpush1.msra.mxu0 %v1564
        %1609 = vmatprep.subr.mxu0 0.0
        %1610 = vmatpush1.msra.mxu0 %v1563
        %1611 = vmatprep.subr.mxu0 0.0
        %1612 = vmatpush1.msra.mxu0 %v1562
        %1613 = vmatprep.subr.mxu0 0.0
        %1614 = vmatpush1.msra.mxu0 %v1561
        %1615 = vmatprep.subr.mxu0 0.0
        %1616 = vmatpush1.msra.mxu0 %v1560
        %1617 = vmatprep.subr.mxu0 0.0
        %1618 = vmatpush2.msra.mxu0 0.0
        %1619 = vmatprep.subr.mxu0 0.0
        %1620 = vmatpush2.msra.mxu0 0.0
        %1621 = vmatprep.subr.mxu0 0.0
        %1622 = vmatpush2.msra.mxu0 0.0
        %1623 = vmatprep.subr.mxu0 0.0
        %1624 = vmatpush2.msra.mxu0 0.0
        %1625 = vmatprep.subr.mxu0 0.0
        %1626 = vmatpush2.msra.mxu0 0.0
        %1627 = vmatprep.subr.mxu0 0.0
        %1628 = vmatpush2.msra.mxu0 0.0
        %1629 = vmatprep.subr.mxu0 0.0
        %1630 = vmatpush2.msra.mxu0 0.0
        %1631 = vmatprep.subr.mxu0 0.0
        %1632 = vmatpush2.msra.mxu0 0.0
        %1633 = vmatprep.subr.mxu0 0.0
        %1634 = vmatpush2.msra.mxu0 0.0
        %1635 = vmatprep.subr.mxu0 0.0
        %1636 = vmatpush2.msra.mxu0 0.0
        %1637 = vmatprep.subr.mxu0 0.0
        %1638 = vmatpush2.msra.mxu0 0.0
        %1639 = vmatprep.subr.mxu0 0.0
        %1640 = vmatpush2.msra.mxu0 0.0
        %1641 = vmatprep.subr.mxu0 0.0
        %1642 = vmatpush2.msra.mxu0 0.0
        %1643 = vmatprep.subr.mxu0 0.0
        %1644 = vmatpush2.msra.mxu0 0.0
        %1645 = vmatprep.subr.mxu0 0.0
        %1646 = vmatpush2.msra.mxu0 0.0
        %1647 = vmatprep.subr.mxu0 0.0
        %1648 = vmatpush2.msra.mxu0 0.0
        %1649 = vmatprep.mubr.f32.mxu0 0.0
        %1650 = vmatmul.mubr.f32.gmra.mxu0 %v1580
        %v1651 = vpop.f32.mrf.mxu0
        %v1652 = vadd.f32 0.0, %v1651
        %v1653 = vpop.f32.mrf.mxu0
        %1654 = vmatprep.mubr.f32.mxu0 0.0
        %1655 = vmatmul.mubr.f32.gmra.mxu0 %v1582
        %v1656 = vpop.f32.mrf.mxu0
        %v1657 = vadd.f32 0.0, %v1656
        %v1658 = vpop.f32.mrf.mxu0
        %1659 = vdwg.mxu0
        %1660 = vmatprep.subr.mxu0 0.0
        %1661 = vmatpush1.msra.mxu0 %v1381
        %1662 = vmatprep.subr.mxu0 0.0
        %1663 = vmatpush1.msra.mxu0 %v1380
        %1664 = vmatprep.subr.mxu0 0.0
        %1665 = vmatpush1.msra.mxu0 %v1379
        %1666 = vmatprep.subr.mxu0 0.0
        %1667 = vmatpush1.msra.mxu0 %v1378
        %1668 = vmatprep.subr.mxu0 0.0
        %1669 = vmatpush1.msra.mxu0 %v1377
        %1670 = vmatprep.subr.mxu0 0.0
        %1671 = vmatpush1.msra.mxu0 %v1376
        %1672 = vmatprep.subr.mxu0 0.0
        %1673 = vmatpush1.msra.mxu0 %v1375
        %1674 = vmatprep.subr.mxu0 0.0
        %1675 = vmatpush1.msra.mxu0 %v1374
        %1676 = vmatprep.subr.mxu0 0.0
        %1677 = vmatpush1.msra.mxu0 %v1373
        %1678 = vmatprep.subr.mxu0 0.0
        %1679 = vmatpush1.msra.mxu0 %v1372
        %1680 = vmatprep.subr.mxu0 0.0
        %1681 = vmatpush1.msra.mxu0 %v1371
        %1682 = vmatprep.subr.mxu0 0.0
        %1683 = vmatpush1.msra.mxu0 %v1370
        %1684 = vmatprep.subr.mxu0 0.0
        %1685 = vmatpush1.msra.mxu0 %v1369
        %1686 = vmatprep.subr.mxu0 0.0
        %1687 = vmatpush1.msra.mxu0 %v1368
        %1688 = vmatprep.subr.mxu0 0.0
        %1689 = vmatpush1.msra.mxu0 %v1367
        %1690 = vmatprep.subr.mxu0 0.0
        %1691 = vmatpush1.msra.mxu0 %v1366
        %1692 = vmatprep.subr.mxu0 0.0
        %1693 = vmatpush2.msra.mxu0 0.0
        %1694 = vmatprep.subr.mxu0 0.0
        %1695 = vmatpush2.msra.mxu0 0.0
        %1696 = vmatprep.subr.mxu0 0.0
        %1697 = vmatpush2.msra.mxu0 0.0
        %1698 = vmatprep.subr.mxu0 0.0
        %1699 = vmatpush2.msra.mxu0 0.0
        %1700 = vmatprep.subr.mxu0 0.0
        %1701 = vmatpush2.msra.mxu0 0.0
        %1702 = vmatprep.subr.mxu0 0.0
        %1703 = vmatpush2.msra.mxu0 0.0
        %1704 = vmatprep.subr.mxu0 0.0
        %1705 = vmatpush2.msra.mxu0 0.0
        %1706 = vmatprep.subr.mxu0 0.0
        %1707 = vmatpush2.msra.mxu0 0.0
        %1708 = vmatprep.subr.mxu0 0.0
        %1709 = vmatpush2.msra.mxu0 0.0
        %1710 = vmatprep.subr.mxu0 0.0
        %1711 = vmatpush2.msra.mxu0 0.0
        %1712 = vmatprep.subr.mxu0 0.0
        %1713 = vmatpush2.msra.mxu0 0.0
        %1714 = vmatprep.subr.mxu0 0.0
        %1715 = vmatpush2.msra.mxu0 0.0
        %1716 = vmatprep.subr.mxu0 0.0
        %1717 = vmatpush2.msra.mxu0 0.0
        %1718 = vmatprep.subr.mxu0 0.0
        %1719 = vmatpush2.msra.mxu0 0.0
        %1720 = vmatprep.subr.mxu0 0.0
        %1721 = vmatpush2.msra.mxu0 0.0
        %1722 = vmatprep.subr.mxu0 0.0
        %1723 = vmatpush2.msra.mxu0 0.0
        %1724 = vmatprep.mubr.f32.mxu0 0.0
        %1725 = vmatmul.mubr.f32.gmra.mxu0 %v1347
        %v1726 = vpop.f32.mrf.mxu0
        %v1727 = vadd.f32 %v1652, %v1726
        %v1728 = vpop.f32.mrf.mxu0
        %1729 = vmatprep.mubr.f32.mxu0 0.0
        %1730 = vmatmul.mubr.f32.gmra.mxu0 %v1343
        %v1731 = vpop.f32.mrf.mxu0
        %v1732 = vadd.f32 %v1657, %v1731
        %v1733 = vpop.f32.mrf.mxu0
        %1734 = vdwg.mxu0
        %s1735 = scalar_lea.vmem [#allocation6], 256
        %v1736 = vld [vmem:[%s1735] sm:$0xff]
        %v1737 = vld [vmem:[%s1735 + $0x8] sm:$0xff]
        %v1738 = vld [vmem:[%s1735 + $0x10] sm:$0xff]
        %v1739 = vld [vmem:[%s1735 + $0x18] sm:$0xff]
        %v1740 = vld [vmem:[%s1735 + $0x20] sm:$0xff]
        %v1741 = vld [vmem:[%s1735 + $0x28] sm:$0xff]
        %v1742 = vld [vmem:[%s1735 + $0x30] sm:$0xff]
        %v1743 = vld [vmem:[%s1735 + $0x38] sm:$0xff]
        %v1744 = vld [vmem:[%s1735 + $0x40] sm:$0xff]
        %v1745 = vld [vmem:[%s1735 + $0x48] sm:$0xff]
        %v1746 = vld [vmem:[%s1735 + $0x50] sm:$0xff]
        %v1747 = vld [vmem:[%s1735 + $0x58] sm:$0xff]
        %v1748 = vld [vmem:[%s1735 + $0x60] sm:$0xff]
        %v1749 = vld [vmem:[%s1735 + $0x68] sm:$0xff]
        %v1750 = vld [vmem:[%s1735 + $0x70] sm:$0xff]
        %v1751 = vld [vmem:[%s1735 + $0x78] sm:$0xff]
        %vm1752 = vcmask 1045504
        %v1753 = vrot.slane %v1337, 2
        %v1754 = vrot.slane %v1333, 2
        %v1755 = vsel %vm1752, %v1753, %v1754
        %v1756 = vrot.slane %v1338, 2
        %v1757 = vsel %vm1752, %v1754, %v1756
        %1760 = vmatprep.subr.mxu0 0.0
        %1761 = vmatpush1.msra.mxu0 %v1751
        %1762 = vmatprep.subr.mxu0 0.0
        %1763 = vmatpush1.msra.mxu0 %v1750
        %1764 = vmatprep.subr.mxu0 0.0
        %1765 = vmatpush1.msra.mxu0 %v1749
        %1766 = vmatprep.subr.mxu0 0.0
        %1767 = vmatpush1.msra.mxu0 %v1748
        %1768 = vmatprep.subr.mxu0 0.0
        %1769 = vmatpush1.msra.mxu0 %v1747
        %1770 = vmatprep.subr.mxu0 0.0
        %1771 = vmatpush1.msra.mxu0 %v1746
        %1772 = vmatprep.subr.mxu0 0.0
        %1773 = vmatpush1.msra.mxu0 %v1745
        %1774 = vmatprep.subr.mxu0 0.0
        %1775 = vmatpush1.msra.mxu0 %v1744
        %1776 = vmatprep.subr.mxu0 0.0
        %1777 = vmatpush1.msra.mxu0 %v1743
        %1778 = vmatprep.subr.mxu0 0.0
        %1779 = vmatpush1.msra.mxu0 %v1742
        %1780 = vmatprep.subr.mxu0 0.0
        %1781 = vmatpush1.msra.mxu0 %v1741
        %1782 = vmatprep.subr.mxu0 0.0
        %1783 = vmatpush1.msra.mxu0 %v1740
        %1784 = vmatprep.subr.mxu0 0.0
        %1785 = vmatpush1.msra.mxu0 %v1739
        %1786 = vmatprep.subr.mxu0 0.0
        %1787 = vmatpush1.msra.mxu0 %v1738
        %1788 = vmatprep.subr.mxu0 0.0
        %1789 = vmatpush1.msra.mxu0 %v1737
        %1790 = vmatprep.subr.mxu0 0.0
        %1791 = vmatpush1.msra.mxu0 %v1736
        %1792 = vmatprep.subr.mxu0 0.0
        %1793 = vmatpush2.msra.mxu0 0.0
        %1794 = vmatprep.subr.mxu0 0.0
        %1795 = vmatpush2.msra.mxu0 0.0
        %1796 = vmatprep.subr.mxu0 0.0
        %1797 = vmatpush2.msra.mxu0 0.0
        %1798 = vmatprep.subr.mxu0 0.0
        %1799 = vmatpush2.msra.mxu0 0.0
        %1800 = vmatprep.subr.mxu0 0.0
        %1801 = vmatpush2.msra.mxu0 0.0
        %1802 = vmatprep.subr.mxu0 0.0
        %1803 = vmatpush2.msra.mxu0 0.0
        %1804 = vmatprep.subr.mxu0 0.0
        %1805 = vmatpush2.msra.mxu0 0.0
        %1806 = vmatprep.subr.mxu0 0.0
        %1807 = vmatpush2.msra.mxu0 0.0
        %1808 = vmatprep.subr.mxu0 0.0
        %1809 = vmatpush2.msra.mxu0 0.0
        %1810 = vmatprep.subr.mxu0 0.0
        %1811 = vmatpush2.msra.mxu0 0.0
        %1812 = vmatprep.subr.mxu0 0.0
        %1813 = vmatpush2.msra.mxu0 0.0
        %1814 = vmatprep.subr.mxu0 0.0
        %1815 = vmatpush2.msra.mxu0 0.0
        %1816 = vmatprep.subr.mxu0 0.0
        %1817 = vmatpush2.msra.mxu0 0.0
        %1818 = vmatprep.subr.mxu0 0.0
        %1819 = vmatpush2.msra.mxu0 0.0
        %1820 = vmatprep.subr.mxu0 0.0
        %1821 = vmatpush2.msra.mxu0 0.0
        %1822 = vmatprep.subr.mxu0 0.0
        %1823 = vmatpush2.msra.mxu0 0.0
        %1824 = vmatprep.mubr.f32.mxu0 0.0
        %1825 = vmatmul.mubr.f32.gmra.mxu0 %v1755
        %v1826 = vpop.f32.mrf.mxu0
        %v1827 = vadd.f32 0.0, %v1826
        %v1828 = vpop.f32.mrf.mxu0
        %1829 = vmatprep.mubr.f32.mxu0 0.0
        %1830 = vmatmul.mubr.f32.gmra.mxu0 %v1757
        %v1831 = vpop.f32.mrf.mxu0
        %v1832 = vadd.f32 0.0, %v1831
        %v1833 = vpop.f32.mrf.mxu0
        %1834 = vdwg.mxu0
        %v1835 = vadd.f32 %v1551, %v1827
        %v1836 = vadd.f32 %v1556, %v1832
        %s1837 = scalar_lea.vmem [#allocation6], 1152
        %v1838 = vld [vmem:[%s1837] sm:$0xff]
        %v1839 = vld [vmem:[%s1837 + $0x8] sm:$0xff]
        %v1840 = vld [vmem:[%s1837 + $0x10] sm:$0xff]
        %v1841 = vld [vmem:[%s1837 + $0x18] sm:$0xff]
        %v1842 = vld [vmem:[%s1837 + $0x20] sm:$0xff]
        %v1843 = vld [vmem:[%s1837 + $0x28] sm:$0xff]
        %v1844 = vld [vmem:[%s1837 + $0x30] sm:$0xff]
        %v1845 = vld [vmem:[%s1837 + $0x38] sm:$0xff]
        %v1846 = vld [vmem:[%s1837 + $0x40] sm:$0xff]
        %v1847 = vld [vmem:[%s1837 + $0x48] sm:$0xff]
        %v1848 = vld [vmem:[%s1837 + $0x50] sm:$0xff]
        %v1849 = vld [vmem:[%s1837 + $0x58] sm:$0xff]
        %v1850 = vld [vmem:[%s1837 + $0x60] sm:$0xff]
        %v1851 = vld [vmem:[%s1837 + $0x68] sm:$0xff]
        %v1852 = vld [vmem:[%s1837 + $0x70] sm:$0xff]
        %v1853 = vld [vmem:[%s1837 + $0x78] sm:$0xff]
        %v1854 = vrot.slane %v1347, 2
        %v1855 = vrot.slane %v1343, 2
        %v1856 = vsel %vm1752, %v1854, %v1855
        %v1857 = vrot.slane %v1348, 2
        %v1858 = vsel %vm1752, %v1855, %v1857
        %1861 = vmatprep.subr.mxu0 0.0
        %1862 = vmatpush1.msra.mxu0 %v1853
        %1863 = vmatprep.subr.mxu0 0.0
        %1864 = vmatpush1.msra.mxu0 %v1852
        %1865 = vmatprep.subr.mxu0 0.0
        %1866 = vmatpush1.msra.mxu0 %v1851
        %1867 = vmatprep.subr.mxu0 0.0
        %1868 = vmatpush1.msra.mxu0 %v1850
        %1869 = vmatprep.subr.mxu0 0.0
        %1870 = vmatpush1.msra.mxu0 %v1849
        %1871 = vmatprep.subr.mxu0 0.0
        %1872 = vmatpush1.msra.mxu0 %v1848
        %1873 = vmatprep.subr.mxu0 0.0
        %1874 = vmatpush1.msra.mxu0 %v1847
        %1875 = vmatprep.subr.mxu0 0.0
        %1876 = vmatpush1.msra.mxu0 %v1846
        %1877 = vmatprep.subr.mxu0 0.0
        %1878 = vmatpush1.msra.mxu0 %v1845
        %1879 = vmatprep.subr.mxu0 0.0
        %1880 = vmatpush1.msra.mxu0 %v1844
        %1881 = vmatprep.subr.mxu0 0.0
        %1882 = vmatpush1.msra.mxu0 %v1843
        %1883 = vmatprep.subr.mxu0 0.0
        %1884 = vmatpush1.msra.mxu0 %v1842
        %1885 = vmatprep.subr.mxu0 0.0
        %1886 = vmatpush1.msra.mxu0 %v1841
        %1887 = vmatprep.subr.mxu0 0.0
        %1888 = vmatpush1.msra.mxu0 %v1840
        %1889 = vmatprep.subr.mxu0 0.0
        %1890 = vmatpush1.msra.mxu0 %v1839
        %1891 = vmatprep.subr.mxu0 0.0
        %1892 = vmatpush1.msra.mxu0 %v1838
        %1893 = vmatprep.subr.mxu0 0.0
        %1894 = vmatpush2.msra.mxu0 0.0
        %1895 = vmatprep.subr.mxu0 0.0
        %1896 = vmatpush2.msra.mxu0 0.0
        %1897 = vmatprep.subr.mxu0 0.0
        %1898 = vmatpush2.msra.mxu0 0.0
        %1899 = vmatprep.subr.mxu0 0.0
        %1900 = vmatpush2.msra.mxu0 0.0
        %1901 = vmatprep.subr.mxu0 0.0
        %1902 = vmatpush2.msra.mxu0 0.0
        %1903 = vmatprep.subr.mxu0 0.0
        %1904 = vmatpush2.msra.mxu0 0.0
        %1905 = vmatprep.subr.mxu0 0.0
        %1906 = vmatpush2.msra.mxu0 0.0
        %1907 = vmatprep.subr.mxu0 0.0
        %1908 = vmatpush2.msra.mxu0 0.0
        %1909 = vmatprep.subr.mxu0 0.0
        %1910 = vmatpush2.msra.mxu0 0.0
        %1911 = vmatprep.subr.mxu0 0.0
        %1912 = vmatpush2.msra.mxu0 0.0
        %1913 = vmatprep.subr.mxu0 0.0
        %1914 = vmatpush2.msra.mxu0 0.0
        %1915 = vmatprep.subr.mxu0 0.0
        %1916 = vmatpush2.msra.mxu0 0.0
        %1917 = vmatprep.subr.mxu0 0.0
        %1918 = vmatpush2.msra.mxu0 0.0
        %1919 = vmatprep.subr.mxu0 0.0
        %1920 = vmatpush2.msra.mxu0 0.0
        %1921 = vmatprep.subr.mxu0 0.0
        %1922 = vmatpush2.msra.mxu0 0.0
        %1923 = vmatprep.subr.mxu0 0.0
        %1924 = vmatpush2.msra.mxu0 0.0
        %1925 = vmatprep.mubr.f32.mxu0 0.0
        %1926 = vmatmul.mubr.f32.gmra.mxu0 %v1856
        %v1927 = vpop.f32.mrf.mxu0
        %v1928 = vadd.f32 0.0, %v1927
        %v1929 = vpop.f32.mrf.mxu0
        %1930 = vmatprep.mubr.f32.mxu0 0.0
        %1931 = vmatmul.mubr.f32.gmra.mxu0 %v1858
        %v1932 = vpop.f32.mrf.mxu0
        %v1933 = vadd.f32 0.0, %v1932
        %v1934 = vpop.f32.mrf.mxu0
        %1935 = vdwg.mxu0
        %v1936 = vadd.f32 %v1727, %v1928
        %v1937 = vadd.f32 %v1732, %v1933
        %s1938 = scalar_lea.vmem [#allocation6], 384
        %v1939 = vld [vmem:[%s1938] sm:$0xff]
        %v1940 = vld [vmem:[%s1938 + $0x8] sm:$0xff]
        %v1941 = vld [vmem:[%s1938 + $0x10] sm:$0xff]
        %v1942 = vld [vmem:[%s1938 + $0x18] sm:$0xff]
        %v1943 = vld [vmem:[%s1938 + $0x20] sm:$0xff]
        %v1944 = vld [vmem:[%s1938 + $0x28] sm:$0xff]
        %v1945 = vld [vmem:[%s1938 + $0x30] sm:$0xff]
        %v1946 = vld [vmem:[%s1938 + $0x38] sm:$0xff]
        %v1947 = vld [vmem:[%s1938 + $0x40] sm:$0xff]
        %v1948 = vld [vmem:[%s1938 + $0x48] sm:$0xff]
        %v1949 = vld [vmem:[%s1938 + $0x50] sm:$0xff]
        %v1950 = vld [vmem:[%s1938 + $0x58] sm:$0xff]
        %v1951 = vld [vmem:[%s1938 + $0x60] sm:$0xff]
        %v1952 = vld [vmem:[%s1938 + $0x68] sm:$0xff]
        %v1953 = vld [vmem:[%s1938 + $0x70] sm:$0xff]
        %v1954 = vld [vmem:[%s1938 + $0x78] sm:$0xff]
        %vm1955 = vcmask 1044480
        %v1956 = vrot.slane %v1337, 3
        %v1957 = vrot.slane %v1333, 3
        %v1958 = vsel %vm1955, %v1956, %v1957
        %v1959 = vrot.slane %v1338, 3
        %v1960 = vsel %vm1955, %v1957, %v1959
        %1963 = vmatprep.subr.mxu0 0.0
        %1964 = vmatpush1.msra.mxu0 %v1954
        %1965 = vmatprep.subr.mxu0 0.0
        %1966 = vmatpush1.msra.mxu0 %v1953
        %1967 = vmatprep.subr.mxu0 0.0
        %1968 = vmatpush1.msra.mxu0 %v1952
        %1969 = vmatprep.subr.mxu0 0.0
        %1970 = vmatpush1.msra.mxu0 %v1951
        %1971 = vmatprep.subr.mxu0 0.0
        %1972 = vmatpush1.msra.mxu0 %v1950
        %1973 = vmatprep.subr.mxu0 0.0
        %1974 = vmatpush1.msra.mxu0 %v1949
        %1975 = vmatprep.subr.mxu0 0.0
        %1976 = vmatpush1.msra.mxu0 %v1948
        %1977 = vmatprep.subr.mxu0 0.0
        %1978 = vmatpush1.msra.mxu0 %v1947
        %1979 = vmatprep.subr.mxu0 0.0
        %1980 = vmatpush1.msra.mxu0 %v1946
        %1981 = vmatprep.subr.mxu0 0.0
        %1982 = vmatpush1.msra.mxu0 %v1945
        %1983 = vmatprep.subr.mxu0 0.0
        %1984 = vmatpush1.msra.mxu0 %v1944
        %1985 = vmatprep.subr.mxu0 0.0
        %1986 = vmatpush1.msra.mxu0 %v1943
        %1987 = vmatprep.subr.mxu0 0.0
        %1988 = vmatpush1.msra.mxu0 %v1942
        %1989 = vmatprep.subr.mxu0 0.0
        %1990 = vmatpush1.msra.mxu0 %v1941
        %1991 = vmatprep.subr.mxu0 0.0
        %1992 = vmatpush1.msra.mxu0 %v1940
        %1993 = vmatprep.subr.mxu0 0.0
        %1994 = vmatpush1.msra.mxu0 %v1939
        %1995 = vmatprep.subr.mxu0 0.0
        %1996 = vmatpush2.msra.mxu0 0.0
        %1997 = vmatprep.subr.mxu0 0.0
        %1998 = vmatpush2.msra.mxu0 0.0
        %1999 = vmatprep.subr.mxu0 0.0
        %2000 = vmatpush2.msra.mxu0 0.0
        %2001 = vmatprep.subr.mxu0 0.0
        %2002 = vmatpush2.msra.mxu0 0.0
        %2003 = vmatprep.subr.mxu0 0.0
        %2004 = vmatpush2.msra.mxu0 0.0
        %2005 = vmatprep.subr.mxu0 0.0
        %2006 = vmatpush2.msra.mxu0 0.0
        %2007 = vmatprep.subr.mxu0 0.0
        %2008 = vmatpush2.msra.mxu0 0.0
        %2009 = vmatprep.subr.mxu0 0.0
        %2010 = vmatpush2.msra.mxu0 0.0
        %2011 = vmatprep.subr.mxu0 0.0
        %2012 = vmatpush2.msra.mxu0 0.0
        %2013 = vmatprep.subr.mxu0 0.0
        %2014 = vmatpush2.msra.mxu0 0.0
        %2015 = vmatprep.subr.mxu0 0.0
        %2016 = vmatpush2.msra.mxu0 0.0
        %2017 = vmatprep.subr.mxu0 0.0
        %2018 = vmatpush2.msra.mxu0 0.0
        %2019 = vmatprep.subr.mxu0 0.0
        %2020 = vmatpush2.msra.mxu0 0.0
        %2021 = vmatprep.subr.mxu0 0.0
        %2022 = vmatpush2.msra.mxu0 0.0
        %2023 = vmatprep.subr.mxu0 0.0
        %2024 = vmatpush2.msra.mxu0 0.0
        %2025 = vmatprep.subr.mxu0 0.0
        %2026 = vmatpush2.msra.mxu0 0.0
        %2027 = vmatprep.mubr.f32.mxu0 0.0
        %2028 = vmatmul.mubr.f32.gmra.mxu0 %v1958
        %v2029 = vpop.f32.mrf.mxu0
        %v2030 = vadd.f32 0.0, %v2029
        %v2031 = vpop.f32.mrf.mxu0
        %2032 = vmatprep.mubr.f32.mxu0 0.0
        %2033 = vmatmul.mubr.f32.gmra.mxu0 %v1960
        %v2034 = vpop.f32.mrf.mxu0
        %v2035 = vadd.f32 0.0, %v2034
        %v2036 = vpop.f32.mrf.mxu0
        %2037 = vdwg.mxu0
        %v2038 = vadd.f32 %v1835, %v2030
        %v2039 = vadd.f32 %v1836, %v2035
        %s2040 = scalar_lea.vmem [#allocation6], 1280
        %v2041 = vld [vmem:[%s2040] sm:$0xff]
        %v2042 = vld [vmem:[%s2040 + $0x8] sm:$0xff]
        %v2043 = vld [vmem:[%s2040 + $0x10] sm:$0xff]
        %v2044 = vld [vmem:[%s2040 + $0x18] sm:$0xff]
        %v2045 = vld [vmem:[%s2040 + $0x20] sm:$0xff]
        %v2046 = vld [vmem:[%s2040 + $0x28] sm:$0xff]
        %v2047 = vld [vmem:[%s2040 + $0x30] sm:$0xff]
        %v2048 = vld [vmem:[%s2040 + $0x38] sm:$0xff]
        %v2049 = vld [vmem:[%s2040 + $0x40] sm:$0xff]
        %v2050 = vld [vmem:[%s2040 + $0x48] sm:$0xff]
        %v2051 = vld [vmem:[%s2040 + $0x50] sm:$0xff]
        %v2052 = vld [vmem:[%s2040 + $0x58] sm:$0xff]
        %v2053 = vld [vmem:[%s2040 + $0x60] sm:$0xff]
        %v2054 = vld [vmem:[%s2040 + $0x68] sm:$0xff]
        %v2055 = vld [vmem:[%s2040 + $0x70] sm:$0xff]
        %v2056 = vld [vmem:[%s2040 + $0x78] sm:$0xff]
        %v2057 = vrot.slane %v1347, 3
        %v2058 = vrot.slane %v1343, 3
        %v2059 = vsel %vm1955, %v2057, %v2058
        %v2060 = vrot.slane %v1348, 3
        %v2061 = vsel %vm1955, %v2058, %v2060
        %2064 = vmatprep.subr.mxu0 0.0
        %2065 = vmatpush1.msra.mxu0 %v2056
        %2066 = vmatprep.subr.mxu0 0.0
        %2067 = vmatpush1.msra.mxu0 %v2055
        %2068 = vmatprep.subr.mxu0 0.0
        %2069 = vmatpush1.msra.mxu0 %v2054
        %2070 = vmatprep.subr.mxu0 0.0
        %2071 = vmatpush1.msra.mxu0 %v2053
        %2072 = vmatprep.subr.mxu0 0.0
        %2073 = vmatpush1.msra.mxu0 %v2052
        %2074 = vmatprep.subr.mxu0 0.0
        %2075 = vmatpush1.msra.mxu0 %v2051
        %2076 = vmatprep.subr.mxu0 0.0
        %2077 = vmatpush1.msra.mxu0 %v2050
        %2078 = vmatprep.subr.mxu0 0.0
        %2079 = vmatpush1.msra.mxu0 %v2049
        %2080 = vmatprep.subr.mxu0 0.0
        %2081 = vmatpush1.msra.mxu0 %v2048
        %2082 = vmatprep.subr.mxu0 0.0
        %2083 = vmatpush1.msra.mxu0 %v2047
        %2084 = vmatprep.subr.mxu0 0.0
        %2085 = vmatpush1.msra.mxu0 %v2046
        %2086 = vmatprep.subr.mxu0 0.0
        %2087 = vmatpush1.msra.mxu0 %v2045
        %2088 = vmatprep.subr.mxu0 0.0
        %2089 = vmatpush1.msra.mxu0 %v2044
        %2090 = vmatprep.subr.mxu0 0.0
        %2091 = vmatpush1.msra.mxu0 %v2043
        %2092 = vmatprep.subr.mxu0 0.0
        %2093 = vmatpush1.msra.mxu0 %v2042
        %2094 = vmatprep.subr.mxu0 0.0
        %2095 = vmatpush1.msra.mxu0 %v2041
        %2096 = vmatprep.subr.mxu0 0.0
        %2097 = vmatpush2.msra.mxu0 0.0
        %2098 = vmatprep.subr.mxu0 0.0
        %2099 = vmatpush2.msra.mxu0 0.0
        %2100 = vmatprep.subr.mxu0 0.0
        %2101 = vmatpush2.msra.mxu0 0.0
        %2102 = vmatprep.subr.mxu0 0.0
        %2103 = vmatpush2.msra.mxu0 0.0
        %2104 = vmatprep.subr.mxu0 0.0
        %2105 = vmatpush2.msra.mxu0 0.0
        %2106 = vmatprep.subr.mxu0 0.0
        %2107 = vmatpush2.msra.mxu0 0.0
        %2108 = vmatprep.subr.mxu0 0.0
        %2109 = vmatpush2.msra.mxu0 0.0
        %2110 = vmatprep.subr.mxu0 0.0
        %2111 = vmatpush2.msra.mxu0 0.0
        %2112 = vmatprep.subr.mxu0 0.0
        %2113 = vmatpush2.msra.mxu0 0.0
        %2114 = vmatprep.subr.mxu0 0.0
        %2115 = vmatpush2.msra.mxu0 0.0
        %2116 = vmatprep.subr.mxu0 0.0
        %2117 = vmatpush2.msra.mxu0 0.0
        %2118 = vmatprep.subr.mxu0 0.0
        %2119 = vmatpush2.msra.mxu0 0.0
        %2120 = vmatprep.subr.mxu0 0.0
        %2121 = vmatpush2.msra.mxu0 0.0
        %2122 = vmatprep.subr.mxu0 0.0
        %2123 = vmatpush2.msra.mxu0 0.0
        %2124 = vmatprep.subr.mxu0 0.0
        %2125 = vmatpush2.msra.mxu0 0.0
        %2126 = vmatprep.subr.mxu0 0.0
        %2127 = vmatpush2.msra.mxu0 0.0
        %2128 = vmatprep.mubr.f32.mxu0 0.0
        %2129 = vmatmul.mubr.f32.gmra.mxu0 %v2059
        %v2130 = vpop.f32.mrf.mxu0
        %v2131 = vadd.f32 0.0, %v2130
        %v2132 = vpop.f32.mrf.mxu0
        %2133 = vmatprep.mubr.f32.mxu0 0.0
        %2134 = vmatmul.mubr.f32.gmra.mxu0 %v2061
        %v2135 = vpop.f32.mrf.mxu0
        %v2136 = vadd.f32 0.0, %v2135
        %v2137 = vpop.f32.mrf.mxu0
        %2138 = vdwg.mxu0
        %v2139 = vadd.f32 %v1936, %v2131
        %v2140 = vadd.f32 %v1937, %v2136
        %s2141 = scalar_lea.vmem [#allocation6], 512
        %v2142 = vld [vmem:[%s2141] sm:$0xff]
        %v2143 = vld [vmem:[%s2141 + $0x8] sm:$0xff]
        %v2144 = vld [vmem:[%s2141 + $0x10] sm:$0xff]
        %v2145 = vld [vmem:[%s2141 + $0x18] sm:$0xff]
        %v2146 = vld [vmem:[%s2141 + $0x20] sm:$0xff]
        %v2147 = vld [vmem:[%s2141 + $0x28] sm:$0xff]
        %v2148 = vld [vmem:[%s2141 + $0x30] sm:$0xff]
        %v2149 = vld [vmem:[%s2141 + $0x38] sm:$0xff]
        %v2150 = vld [vmem:[%s2141 + $0x40] sm:$0xff]
        %v2151 = vld [vmem:[%s2141 + $0x48] sm:$0xff]
        %v2152 = vld [vmem:[%s2141 + $0x50] sm:$0xff]
        %v2153 = vld [vmem:[%s2141 + $0x58] sm:$0xff]
        %v2154 = vld [vmem:[%s2141 + $0x60] sm:$0xff]
        %v2155 = vld [vmem:[%s2141 + $0x68] sm:$0xff]
        %v2156 = vld [vmem:[%s2141 + $0x70] sm:$0xff]
        %v2157 = vld [vmem:[%s2141 + $0x78] sm:$0xff]
        %vm2158 = vcmask 1043456
        %v2159 = vrot.slane %v1337, 4
        %v2160 = vrot.slane %v1333, 4
        %v2161 = vsel %vm2158, %v2159, %v2160
        %v2162 = vrot.slane %v1338, 4
        %v2163 = vsel %vm2158, %v2160, %v2162
        %2166 = vmatprep.subr.mxu0 0.0
        %2167 = vmatpush1.msra.mxu0 %v2157
        %2168 = vmatprep.subr.mxu0 0.0
        %2169 = vmatpush1.msra.mxu0 %v2156
        %2170 = vmatprep.subr.mxu0 0.0
        %2171 = vmatpush1.msra.mxu0 %v2155
        %2172 = vmatprep.subr.mxu0 0.0
        %2173 = vmatpush1.msra.mxu0 %v2154
        %2174 = vmatprep.subr.mxu0 0.0
        %2175 = vmatpush1.msra.mxu0 %v2153
        %2176 = vmatprep.subr.mxu0 0.0
        %2177 = vmatpush1.msra.mxu0 %v2152
        %2178 = vmatprep.subr.mxu0 0.0
        %2179 = vmatpush1.msra.mxu0 %v2151
        %2180 = vmatprep.subr.mxu0 0.0
        %2181 = vmatpush1.msra.mxu0 %v2150
        %2182 = vmatprep.subr.mxu0 0.0
        %2183 = vmatpush1.msra.mxu0 %v2149
        %2184 = vmatprep.subr.mxu0 0.0
        %2185 = vmatpush1.msra.mxu0 %v2148
        %2186 = vmatprep.subr.mxu0 0.0
        %2187 = vmatpush1.msra.mxu0 %v2147
        %2188 = vmatprep.subr.mxu0 0.0
        %2189 = vmatpush1.msra.mxu0 %v2146
        %2190 = vmatprep.subr.mxu0 0.0
        %2191 = vmatpush1.msra.mxu0 %v2145
        %2192 = vmatprep.subr.mxu0 0.0
        %2193 = vmatpush1.msra.mxu0 %v2144
        %2194 = vmatprep.subr.mxu0 0.0
        %2195 = vmatpush1.msra.mxu0 %v2143
        %2196 = vmatprep.subr.mxu0 0.0
        %2197 = vmatpush1.msra.mxu0 %v2142
        %2198 = vmatprep.subr.mxu0 0.0
        %2199 = vmatpush2.msra.mxu0 0.0
        %2200 = vmatprep.subr.mxu0 0.0
        %2201 = vmatpush2.msra.mxu0 0.0
        %2202 = vmatprep.subr.mxu0 0.0
        %2203 = vmatpush2.msra.mxu0 0.0
        %2204 = vmatprep.subr.mxu0 0.0
        %2205 = vmatpush2.msra.mxu0 0.0
        %2206 = vmatprep.subr.mxu0 0.0
        %2207 = vmatpush2.msra.mxu0 0.0
        %2208 = vmatprep.subr.mxu0 0.0
        %2209 = vmatpush2.msra.mxu0 0.0
        %2210 = vmatprep.subr.mxu0 0.0
        %2211 = vmatpush2.msra.mxu0 0.0
        %2212 = vmatprep.subr.mxu0 0.0
        %2213 = vmatpush2.msra.mxu0 0.0
        %2214 = vmatprep.subr.mxu0 0.0
        %2215 = vmatpush2.msra.mxu0 0.0
        %2216 = vmatprep.subr.mxu0 0.0
        %2217 = vmatpush2.msra.mxu0 0.0
        %2218 = vmatprep.subr.mxu0 0.0
        %2219 = vmatpush2.msra.mxu0 0.0
        %2220 = vmatprep.subr.mxu0 0.0
        %2221 = vmatpush2.msra.mxu0 0.0
        %2222 = vmatprep.subr.mxu0 0.0
        %2223 = vmatpush2.msra.mxu0 0.0
        %2224 = vmatprep.subr.mxu0 0.0
        %2225 = vmatpush2.msra.mxu0 0.0
        %2226 = vmatprep.subr.mxu0 0.0
        %2227 = vmatpush2.msra.mxu0 0.0
        %2228 = vmatprep.subr.mxu0 0.0
        %2229 = vmatpush2.msra.mxu0 0.0
        %2230 = vmatprep.mubr.f32.mxu0 0.0
        %2231 = vmatmul.mubr.f32.gmra.mxu0 %v2161
        %v2232 = vpop.f32.mrf.mxu0
        %v2233 = vadd.f32 0.0, %v2232
        %v2234 = vpop.f32.mrf.mxu0
        %2235 = vmatprep.mubr.f32.mxu0 0.0
        %2236 = vmatmul.mubr.f32.gmra.mxu0 %v2163
        %v2237 = vpop.f32.mrf.mxu0
        %v2238 = vadd.f32 0.0, %v2237
        %v2239 = vpop.f32.mrf.mxu0
        %2240 = vdwg.mxu0
        %v2241 = vadd.f32 %v2038, %v2233
        %v2242 = vadd.f32 %v2039, %v2238
        %s2243 = scalar_lea.vmem [#allocation6], 1408
        %v2244 = vld [vmem:[%s2243] sm:$0xff]
        %v2245 = vld [vmem:[%s2243 + $0x8] sm:$0xff]
        %v2246 = vld [vmem:[%s2243 + $0x10] sm:$0xff]
        %v2247 = vld [vmem:[%s2243 + $0x18] sm:$0xff]
        %v2248 = vld [vmem:[%s2243 + $0x20] sm:$0xff]
        %v2249 = vld [vmem:[%s2243 + $0x28] sm:$0xff]
        %v2250 = vld [vmem:[%s2243 + $0x30] sm:$0xff]
        %v2251 = vld [vmem:[%s2243 + $0x38] sm:$0xff]
        %v2252 = vld [vmem:[%s2243 + $0x40] sm:$0xff]
        %v2253 = vld [vmem:[%s2243 + $0x48] sm:$0xff]
        %v2254 = vld [vmem:[%s2243 + $0x50] sm:$0xff]
        %v2255 = vld [vmem:[%s2243 + $0x58] sm:$0xff]
        %v2256 = vld [vmem:[%s2243 + $0x60] sm:$0xff]
        %v2257 = vld [vmem:[%s2243 + $0x68] sm:$0xff]
        %v2258 = vld [vmem:[%s2243 + $0x70] sm:$0xff]
        %v2259 = vld [vmem:[%s2243 + $0x78] sm:$0xff]
        %v2260 = vrot.slane %v1347, 4
        %v2261 = vrot.slane %v1343, 4
        %v2262 = vsel %vm2158, %v2260, %v2261
        %v2263 = vrot.slane %v1348, 4
        %v2264 = vsel %vm2158, %v2261, %v2263
        %2267 = vmatprep.subr.mxu0 0.0
        %2268 = vmatpush1.msra.mxu0 %v2259
        %2269 = vmatprep.subr.mxu0 0.0
        %2270 = vmatpush1.msra.mxu0 %v2258
        %2271 = vmatprep.subr.mxu0 0.0
        %2272 = vmatpush1.msra.mxu0 %v2257
        %2273 = vmatprep.subr.mxu0 0.0
        %2274 = vmatpush1.msra.mxu0 %v2256
        %2275 = vmatprep.subr.mxu0 0.0
        %2276 = vmatpush1.msra.mxu0 %v2255
        %2277 = vmatprep.subr.mxu0 0.0
        %2278 = vmatpush1.msra.mxu0 %v2254
        %2279 = vmatprep.subr.mxu0 0.0
        %2280 = vmatpush1.msra.mxu0 %v2253
        %2281 = vmatprep.subr.mxu0 0.0
        %2282 = vmatpush1.msra.mxu0 %v2252
        %2283 = vmatprep.subr.mxu0 0.0
        %2284 = vmatpush1.msra.mxu0 %v2251
        %2285 = vmatprep.subr.mxu0 0.0
        %2286 = vmatpush1.msra.mxu0 %v2250
        %2287 = vmatprep.subr.mxu0 0.0
        %2288 = vmatpush1.msra.mxu0 %v2249
        %2289 = vmatprep.subr.mxu0 0.0
        %2290 = vmatpush1.msra.mxu0 %v2248
        %2291 = vmatprep.subr.mxu0 0.0
        %2292 = vmatpush1.msra.mxu0 %v2247
        %2293 = vmatprep.subr.mxu0 0.0
        %2294 = vmatpush1.msra.mxu0 %v2246
        %2295 = vmatprep.subr.mxu0 0.0
        %2296 = vmatpush1.msra.mxu0 %v2245
        %2297 = vmatprep.subr.mxu0 0.0
        %2298 = vmatpush1.msra.mxu0 %v2244
        %2299 = vmatprep.subr.mxu0 0.0
        %2300 = vmatpush2.msra.mxu0 0.0
        %2301 = vmatprep.subr.mxu0 0.0
        %2302 = vmatpush2.msra.mxu0 0.0
        %2303 = vmatprep.subr.mxu0 0.0
        %2304 = vmatpush2.msra.mxu0 0.0
        %2305 = vmatprep.subr.mxu0 0.0
        %2306 = vmatpush2.msra.mxu0 0.0
        %2307 = vmatprep.subr.mxu0 0.0
        %2308 = vmatpush2.msra.mxu0 0.0
        %2309 = vmatprep.subr.mxu0 0.0
        %2310 = vmatpush2.msra.mxu0 0.0
        %2311 = vmatprep.subr.mxu0 0.0
        %2312 = vmatpush2.msra.mxu0 0.0
        %2313 = vmatprep.subr.mxu0 0.0
        %2314 = vmatpush2.msra.mxu0 0.0
        %2315 = vmatprep.subr.mxu0 0.0
        %2316 = vmatpush2.msra.mxu0 0.0
        %2317 = vmatprep.subr.mxu0 0.0
        %2318 = vmatpush2.msra.mxu0 0.0
        %2319 = vmatprep.subr.mxu0 0.0
        %2320 = vmatpush2.msra.mxu0 0.0
        %2321 = vmatprep.subr.mxu0 0.0
        %2322 = vmatpush2.msra.mxu0 0.0
        %2323 = vmatprep.subr.mxu0 0.0
        %2324 = vmatpush2.msra.mxu0 0.0
        %2325 = vmatprep.subr.mxu0 0.0
        %2326 = vmatpush2.msra.mxu0 0.0
        %2327 = vmatprep.subr.mxu0 0.0
        %2328 = vmatpush2.msra.mxu0 0.0
        %2329 = vmatprep.subr.mxu0 0.0
        %2330 = vmatpush2.msra.mxu0 0.0
        %2331 = vmatprep.mubr.f32.mxu0 0.0
        %2332 = vmatmul.mubr.f32.gmra.mxu0 %v2262
        %v2333 = vpop.f32.mrf.mxu0
        %v2334 = vadd.f32 0.0, %v2333
        %v2335 = vpop.f32.mrf.mxu0
        %2336 = vmatprep.mubr.f32.mxu0 0.0
        %2337 = vmatmul.mubr.f32.gmra.mxu0 %v2264
        %v2338 = vpop.f32.mrf.mxu0
        %v2339 = vadd.f32 0.0, %v2338
        %v2340 = vpop.f32.mrf.mxu0
        %2341 = vdwg.mxu0
        %v2342 = vadd.f32 %v2139, %v2334
        %v2343 = vadd.f32 %v2140, %v2339
        %s2344 = scalar_lea.vmem [#allocation6], 640
        %v2345 = vld [vmem:[%s2344] sm:$0xff]
        %v2346 = vld [vmem:[%s2344 + $0x8] sm:$0xff]
        %v2347 = vld [vmem:[%s2344 + $0x10] sm:$0xff]
        %v2348 = vld [vmem:[%s2344 + $0x18] sm:$0xff]
        %v2349 = vld [vmem:[%s2344 + $0x20] sm:$0xff]
        %v2350 = vld [vmem:[%s2344 + $0x28] sm:$0xff]
        %v2351 = vld [vmem:[%s2344 + $0x30] sm:$0xff]
        %v2352 = vld [vmem:[%s2344 + $0x38] sm:$0xff]
        %v2353 = vld [vmem:[%s2344 + $0x40] sm:$0xff]
        %v2354 = vld [vmem:[%s2344 + $0x48] sm:$0xff]
        %v2355 = vld [vmem:[%s2344 + $0x50] sm:$0xff]
        %v2356 = vld [vmem:[%s2344 + $0x58] sm:$0xff]
        %v2357 = vld [vmem:[%s2344 + $0x60] sm:$0xff]
        %v2358 = vld [vmem:[%s2344 + $0x68] sm:$0xff]
        %v2359 = vld [vmem:[%s2344 + $0x70] sm:$0xff]
        %v2360 = vld [vmem:[%s2344 + $0x78] sm:$0xff]
        %v2361 = vrot.slane %v1337, 5
        %v2362 = vrot.slane %v1333, 5
        %v2363 = vsel %vm1330, %v2361, %v2362
        %v2364 = vrot.slane %v1338, 5
        %v2365 = vsel %vm1330, %v2362, %v2364
        %2368 = vmatprep.subr.mxu0 0.0
        %2369 = vmatpush1.msra.mxu0 %v2360
        %2370 = vmatprep.subr.mxu0 0.0
        %2371 = vmatpush1.msra.mxu0 %v2359
        %2372 = vmatprep.subr.mxu0 0.0
        %2373 = vmatpush1.msra.mxu0 %v2358
        %2374 = vmatprep.subr.mxu0 0.0
        %2375 = vmatpush1.msra.mxu0 %v2357
        %2376 = vmatprep.subr.mxu0 0.0
        %2377 = vmatpush1.msra.mxu0 %v2356
        %2378 = vmatprep.subr.mxu0 0.0
        %2379 = vmatpush1.msra.mxu0 %v2355
        %2380 = vmatprep.subr.mxu0 0.0
        %2381 = vmatpush1.msra.mxu0 %v2354
        %2382 = vmatprep.subr.mxu0 0.0
        %2383 = vmatpush1.msra.mxu0 %v2353
        %2384 = vmatprep.subr.mxu0 0.0
        %2385 = vmatpush1.msra.mxu0 %v2352
        %2386 = vmatprep.subr.mxu0 0.0
        %2387 = vmatpush1.msra.mxu0 %v2351
        %2388 = vmatprep.subr.mxu0 0.0
        %2389 = vmatpush1.msra.mxu0 %v2350
        %2390 = vmatprep.subr.mxu0 0.0
        %2391 = vmatpush1.msra.mxu0 %v2349
        %2392 = vmatprep.subr.mxu0 0.0
        %2393 = vmatpush1.msra.mxu0 %v2348
        %2394 = vmatprep.subr.mxu0 0.0
        %2395 = vmatpush1.msra.mxu0 %v2347
        %2396 = vmatprep.subr.mxu0 0.0
        %2397 = vmatpush1.msra.mxu0 %v2346
        %2398 = vmatprep.subr.mxu0 0.0
        %2399 = vmatpush1.msra.mxu0 %v2345
        %2400 = vmatprep.subr.mxu0 0.0
        %2401 = vmatpush2.msra.mxu0 0.0
        %2402 = vmatprep.subr.mxu0 0.0
        %2403 = vmatpush2.msra.mxu0 0.0
        %2404 = vmatprep.subr.mxu0 0.0
        %2405 = vmatpush2.msra.mxu0 0.0
        %2406 = vmatprep.subr.mxu0 0.0
        %2407 = vmatpush2.msra.mxu0 0.0
        %2408 = vmatprep.subr.mxu0 0.0
        %2409 = vmatpush2.msra.mxu0 0.0
        %2410 = vmatprep.subr.mxu0 0.0
        %2411 = vmatpush2.msra.mxu0 0.0
        %2412 = vmatprep.subr.mxu0 0.0
        %2413 = vmatpush2.msra.mxu0 0.0
        %2414 = vmatprep.subr.mxu0 0.0
        %2415 = vmatpush2.msra.mxu0 0.0
        %2416 = vmatprep.subr.mxu0 0.0
        %2417 = vmatpush2.msra.mxu0 0.0
        %2418 = vmatprep.subr.mxu0 0.0
        %2419 = vmatpush2.msra.mxu0 0.0
        %2420 = vmatprep.subr.mxu0 0.0
        %2421 = vmatpush2.msra.mxu0 0.0
        %2422 = vmatprep.subr.mxu0 0.0
        %2423 = vmatpush2.msra.mxu0 0.0
        %2424 = vmatprep.subr.mxu0 0.0
        %2425 = vmatpush2.msra.mxu0 0.0
        %2426 = vmatprep.subr.mxu0 0.0
        %2427 = vmatpush2.msra.mxu0 0.0
        %2428 = vmatprep.subr.mxu0 0.0
        %2429 = vmatpush2.msra.mxu0 0.0
        %2430 = vmatprep.subr.mxu0 0.0
        %2431 = vmatpush2.msra.mxu0 0.0
        %2432 = vmatprep.mubr.f32.mxu0 0.0
        %2433 = vmatmul.mubr.f32.gmra.mxu0 %v2363
        %v2434 = vpop.f32.mrf.mxu0
        %v2435 = vadd.f32 0.0, %v2434
        %v2436 = vpop.f32.mrf.mxu0
        %2437 = vmatprep.mubr.f32.mxu0 0.0
        %2438 = vmatmul.mubr.f32.gmra.mxu0 %v2365
        %v2439 = vpop.f32.mrf.mxu0
        %v2440 = vadd.f32 0.0, %v2439
        %v2441 = vpop.f32.mrf.mxu0
        %2442 = vdwg.mxu0
        %v2443 = vadd.f32 %v2241, %v2435
        %v2444 = vadd.f32 %v2242, %v2440
        %s2445 = scalar_lea.vmem [#allocation6], 1536
        %v2446 = vld [vmem:[%s2445] sm:$0xff]
        %v2447 = vld [vmem:[%s2445 + $0x8] sm:$0xff]
        %v2448 = vld [vmem:[%s2445 + $0x10] sm:$0xff]
        %v2449 = vld [vmem:[%s2445 + $0x18] sm:$0xff]
        %v2450 = vld [vmem:[%s2445 + $0x20] sm:$0xff]
        %v2451 = vld [vmem:[%s2445 + $0x28] sm:$0xff]
        %v2452 = vld [vmem:[%s2445 + $0x30] sm:$0xff]
        %v2453 = vld [vmem:[%s2445 + $0x38] sm:$0xff]
        %v2454 = vld [vmem:[%s2445 + $0x40] sm:$0xff]
        %v2455 = vld [vmem:[%s2445 + $0x48] sm:$0xff]
        %v2456 = vld [vmem:[%s2445 + $0x50] sm:$0xff]
        %v2457 = vld [vmem:[%s2445 + $0x58] sm:$0xff]
        %v2458 = vld [vmem:[%s2445 + $0x60] sm:$0xff]
        %v2459 = vld [vmem:[%s2445 + $0x68] sm:$0xff]
        %v2460 = vld [vmem:[%s2445 + $0x70] sm:$0xff]
        %v2461 = vld [vmem:[%s2445 + $0x78] sm:$0xff]
        %v2462 = vrot.slane %v1347, 5
        %v2463 = vrot.slane %v1343, 5
        %v2464 = vsel %vm1330, %v2462, %v2463
        %v2465 = vrot.slane %v1348, 5
        %v2466 = vsel %vm1330, %v2463, %v2465
        %2469 = vmatprep.subr.mxu0 0.0
        %2470 = vmatpush1.msra.mxu0 %v2461
        %2471 = vmatprep.subr.mxu0 0.0
        %2472 = vmatpush1.msra.mxu0 %v2460
        %2473 = vmatprep.subr.mxu0 0.0
        %2474 = vmatpush1.msra.mxu0 %v2459
        %2475 = vmatprep.subr.mxu0 0.0
        %2476 = vmatpush1.msra.mxu0 %v2458
        %2477 = vmatprep.subr.mxu0 0.0
        %2478 = vmatpush1.msra.mxu0 %v2457
        %2479 = vmatprep.subr.mxu0 0.0
        %2480 = vmatpush1.msra.mxu0 %v2456
        %2481 = vmatprep.subr.mxu0 0.0
        %2482 = vmatpush1.msra.mxu0 %v2455
        %2483 = vmatprep.subr.mxu0 0.0
        %2484 = vmatpush1.msra.mxu0 %v2454
        %2485 = vmatprep.subr.mxu0 0.0
        %2486 = vmatpush1.msra.mxu0 %v2453
        %2487 = vmatprep.subr.mxu0 0.0
        %2488 = vmatpush1.msra.mxu0 %v2452
        %2489 = vmatprep.subr.mxu0 0.0
        %2490 = vmatpush1.msra.mxu0 %v2451
        %2491 = vmatprep.subr.mxu0 0.0
        %2492 = vmatpush1.msra.mxu0 %v2450
        %2493 = vmatprep.subr.mxu0 0.0
        %2494 = vmatpush1.msra.mxu0 %v2449
        %2495 = vmatprep.subr.mxu0 0.0
        %2496 = vmatpush1.msra.mxu0 %v2448
        %2497 = vmatprep.subr.mxu0 0.0
        %2498 = vmatpush1.msra.mxu0 %v2447
        %2499 = vmatprep.subr.mxu0 0.0
        %2500 = vmatpush1.msra.mxu0 %v2446
        %2501 = vmatprep.subr.mxu0 0.0
        %2502 = vmatpush2.msra.mxu0 0.0
        %2503 = vmatprep.subr.mxu0 0.0
        %2504 = vmatpush2.msra.mxu0 0.0
        %2505 = vmatprep.subr.mxu0 0.0
        %2506 = vmatpush2.msra.mxu0 0.0
        %2507 = vmatprep.subr.mxu0 0.0
        %2508 = vmatpush2.msra.mxu0 0.0
        %2509 = vmatprep.subr.mxu0 0.0
        %2510 = vmatpush2.msra.mxu0 0.0
        %2511 = vmatprep.subr.mxu0 0.0
        %2512 = vmatpush2.msra.mxu0 0.0
        %2513 = vmatprep.subr.mxu0 0.0
        %2514 = vmatpush2.msra.mxu0 0.0
        %2515 = vmatprep.subr.mxu0 0.0
        %2516 = vmatpush2.msra.mxu0 0.0
        %2517 = vmatprep.subr.mxu0 0.0
        %2518 = vmatpush2.msra.mxu0 0.0
        %2519 = vmatprep.subr.mxu0 0.0
        %2520 = vmatpush2.msra.mxu0 0.0
        %2521 = vmatprep.subr.mxu0 0.0
        %2522 = vmatpush2.msra.mxu0 0.0
        %2523 = vmatprep.subr.mxu0 0.0
        %2524 = vmatpush2.msra.mxu0 0.0
        %2525 = vmatprep.subr.mxu0 0.0
        %2526 = vmatpush2.msra.mxu0 0.0
        %2527 = vmatprep.subr.mxu0 0.0
        %2528 = vmatpush2.msra.mxu0 0.0
        %2529 = vmatprep.subr.mxu0 0.0
        %2530 = vmatpush2.msra.mxu0 0.0
        %2531 = vmatprep.subr.mxu0 0.0
        %2532 = vmatpush2.msra.mxu0 0.0
        %2533 = vmatprep.mubr.f32.mxu0 0.0
        %2534 = vmatmul.mubr.f32.gmra.mxu0 %v2464
        %v2535 = vpop.f32.mrf.mxu0
        %v2536 = vadd.f32 0.0, %v2535
        %v2537 = vpop.f32.mrf.mxu0
        %2538 = vmatprep.mubr.f32.mxu0 0.0
        %2539 = vmatmul.mubr.f32.gmra.mxu0 %v2466
        %v2540 = vpop.f32.mrf.mxu0
        %v2541 = vadd.f32 0.0, %v2540
        %v2542 = vpop.f32.mrf.mxu0
        %2543 = vdwg.mxu0
        %v2544 = vadd.f32 %v2342, %v2536
        %v2545 = vadd.f32 %v2343, %v2541
        %s2546 = scalar_lea.vmem [#allocation6], 768
        %v2547 = vld [vmem:[%s2546] sm:$0xff]
        %v2548 = vld [vmem:[%s2546 + $0x8] sm:$0xff]
        %v2549 = vld [vmem:[%s2546 + $0x10] sm:$0xff]
        %v2550 = vld [vmem:[%s2546 + $0x18] sm:$0xff]
        %v2551 = vld [vmem:[%s2546 + $0x20] sm:$0xff]
        %v2552 = vld [vmem:[%s2546 + $0x28] sm:$0xff]
        %v2553 = vld [vmem:[%s2546 + $0x30] sm:$0xff]
        %v2554 = vld [vmem:[%s2546 + $0x38] sm:$0xff]
        %v2555 = vld [vmem:[%s2546 + $0x40] sm:$0xff]
        %v2556 = vld [vmem:[%s2546 + $0x48] sm:$0xff]
        %v2557 = vld [vmem:[%s2546 + $0x50] sm:$0xff]
        %v2558 = vld [vmem:[%s2546 + $0x58] sm:$0xff]
        %v2559 = vld [vmem:[%s2546 + $0x60] sm:$0xff]
        %v2560 = vld [vmem:[%s2546 + $0x68] sm:$0xff]
        %v2561 = vld [vmem:[%s2546 + $0x70] sm:$0xff]
        %v2562 = vld [vmem:[%s2546 + $0x78] sm:$0xff]
        %v2563 = vrot.slane %v1337, 6
        %v2564 = vrot.slane %v1333, 6
        %v2565 = vsel %vm897, %v2563, %v2564
        %v2566 = vrot.slane %v1338, 6
        %v2567 = vsel %vm897, %v2564, %v2566
        %2570 = vmatprep.subr.mxu0 0.0
        %2571 = vmatpush1.msra.mxu0 %v2562
        %2572 = vmatprep.subr.mxu0 0.0
        %2573 = vmatpush1.msra.mxu0 %v2561
        %2574 = vmatprep.subr.mxu0 0.0
        %2575 = vmatpush1.msra.mxu0 %v2560
        %2576 = vmatprep.subr.mxu0 0.0
        %2577 = vmatpush1.msra.mxu0 %v2559
        %2578 = vmatprep.subr.mxu0 0.0
        %2579 = vmatpush1.msra.mxu0 %v2558
        %2580 = vmatprep.subr.mxu0 0.0
        %2581 = vmatpush1.msra.mxu0 %v2557
        %2582 = vmatprep.subr.mxu0 0.0
        %2583 = vmatpush1.msra.mxu0 %v2556
        %2584 = vmatprep.subr.mxu0 0.0
        %2585 = vmatpush1.msra.mxu0 %v2555
        %2586 = vmatprep.subr.mxu0 0.0
        %2587 = vmatpush1.msra.mxu0 %v2554
        %2588 = vmatprep.subr.mxu0 0.0
        %2589 = vmatpush1.msra.mxu0 %v2553
        %2590 = vmatprep.subr.mxu0 0.0
        %2591 = vmatpush1.msra.mxu0 %v2552
        %2592 = vmatprep.subr.mxu0 0.0
        %2593 = vmatpush1.msra.mxu0 %v2551
        %2594 = vmatprep.subr.mxu0 0.0
        %2595 = vmatpush1.msra.mxu0 %v2550
        %2596 = vmatprep.subr.mxu0 0.0
        %2597 = vmatpush1.msra.mxu0 %v2549
        %2598 = vmatprep.subr.mxu0 0.0
        %2599 = vmatpush1.msra.mxu0 %v2548
        %2600 = vmatprep.subr.mxu0 0.0
        %2601 = vmatpush1.msra.mxu0 %v2547
        %2602 = vmatprep.subr.mxu0 0.0
        %2603 = vmatpush2.msra.mxu0 0.0
        %2604 = vmatprep.subr.mxu0 0.0
        %2605 = vmatpush2.msra.mxu0 0.0
        %2606 = vmatprep.subr.mxu0 0.0
        %2607 = vmatpush2.msra.mxu0 0.0
        %2608 = vmatprep.subr.mxu0 0.0
        %2609 = vmatpush2.msra.mxu0 0.0
        %2610 = vmatprep.subr.mxu0 0.0
        %2611 = vmatpush2.msra.mxu0 0.0
        %2612 = vmatprep.subr.mxu0 0.0
        %2613 = vmatpush2.msra.mxu0 0.0
        %2614 = vmatprep.subr.mxu0 0.0
        %2615 = vmatpush2.msra.mxu0 0.0
        %2616 = vmatprep.subr.mxu0 0.0
        %2617 = vmatpush2.msra.mxu0 0.0
        %2618 = vmatprep.subr.mxu0 0.0
        %2619 = vmatpush2.msra.mxu0 0.0
        %2620 = vmatprep.subr.mxu0 0.0
        %2621 = vmatpush2.msra.mxu0 0.0
        %2622 = vmatprep.subr.mxu0 0.0
        %2623 = vmatpush2.msra.mxu0 0.0
        %2624 = vmatprep.subr.mxu0 0.0
        %2625 = vmatpush2.msra.mxu0 0.0
        %2626 = vmatprep.subr.mxu0 0.0
        %2627 = vmatpush2.msra.mxu0 0.0
        %2628 = vmatprep.subr.mxu0 0.0
        %2629 = vmatpush2.msra.mxu0 0.0
        %2630 = vmatprep.subr.mxu0 0.0
        %2631 = vmatpush2.msra.mxu0 0.0
        %2632 = vmatprep.subr.mxu0 0.0
        %2633 = vmatpush2.msra.mxu0 0.0
        %2634 = vmatprep.mubr.f32.mxu0 0.0
        %2635 = vmatmul.mubr.f32.gmra.mxu0 %v2565
        %v2636 = vpop.f32.mrf.mxu0
        %v2637 = vadd.f32 0.0, %v2636
        %v2638 = vpop.f32.mrf.mxu0
        %2639 = vmatprep.mubr.f32.mxu0 0.0
        %2640 = vmatmul.mubr.f32.gmra.mxu0 %v2567
        %v2641 = vpop.f32.mrf.mxu0
        %v2642 = vadd.f32 0.0, %v2641
        %v2643 = vpop.f32.mrf.mxu0
        %2644 = vdwg.mxu0
        %v2645 = vadd.f32 %v2443, %v2637
        %v2646 = vadd.f32 %v2444, %v2642
        %s2647 = scalar_lea.vmem [#allocation6], 1664
        %v2648 = vld [vmem:[%s2647] sm:$0xff]
        %v2649 = vld [vmem:[%s2647 + $0x8] sm:$0xff]
        %v2650 = vld [vmem:[%s2647 + $0x10] sm:$0xff]
        %v2651 = vld [vmem:[%s2647 + $0x18] sm:$0xff]
        %v2652 = vld [vmem:[%s2647 + $0x20] sm:$0xff]
        %v2653 = vld [vmem:[%s2647 + $0x28] sm:$0xff]
        %v2654 = vld [vmem:[%s2647 + $0x30] sm:$0xff]
        %v2655 = vld [vmem:[%s2647 + $0x38] sm:$0xff]
        %v2656 = vld [vmem:[%s2647 + $0x40] sm:$0xff]
        %v2657 = vld [vmem:[%s2647 + $0x48] sm:$0xff]
        %v2658 = vld [vmem:[%s2647 + $0x50] sm:$0xff]
        %v2659 = vld [vmem:[%s2647 + $0x58] sm:$0xff]
        %v2660 = vld [vmem:[%s2647 + $0x60] sm:$0xff]
        %v2661 = vld [vmem:[%s2647 + $0x68] sm:$0xff]
        %v2662 = vld [vmem:[%s2647 + $0x70] sm:$0xff]
        %v2663 = vld [vmem:[%s2647 + $0x78] sm:$0xff]
        %v2664 = vrot.slane %v1347, 6
        %v2665 = vrot.slane %v1343, 6
        %v2666 = vsel %vm897, %v2664, %v2665
        %v2667 = vrot.slane %v1348, 6
        %v2668 = vsel %vm897, %v2665, %v2667
        %2671 = vmatprep.subr.mxu0 0.0
        %2672 = vmatpush1.msra.mxu0 %v2663
        %2673 = vmatprep.subr.mxu0 0.0
        %2674 = vmatpush1.msra.mxu0 %v2662
        %2675 = vmatprep.subr.mxu0 0.0
        %2676 = vmatpush1.msra.mxu0 %v2661
        %2677 = vmatprep.subr.mxu0 0.0
        %2678 = vmatpush1.msra.mxu0 %v2660
        %2679 = vmatprep.subr.mxu0 0.0
        %2680 = vmatpush1.msra.mxu0 %v2659
        %2681 = vmatprep.subr.mxu0 0.0
        %2682 = vmatpush1.msra.mxu0 %v2658
        %2683 = vmatprep.subr.mxu0 0.0
        %2684 = vmatpush1.msra.mxu0 %v2657
        %2685 = vmatprep.subr.mxu0 0.0
        %2686 = vmatpush1.msra.mxu0 %v2656
        %2687 = vmatprep.subr.mxu0 0.0
        %2688 = vmatpush1.msra.mxu0 %v2655
        %2689 = vmatprep.subr.mxu0 0.0
        %2690 = vmatpush1.msra.mxu0 %v2654
        %2691 = vmatprep.subr.mxu0 0.0
        %2692 = vmatpush1.msra.mxu0 %v2653
        %2693 = vmatprep.subr.mxu0 0.0
        %2694 = vmatpush1.msra.mxu0 %v2652
        %2695 = vmatprep.subr.mxu0 0.0
        %2696 = vmatpush1.msra.mxu0 %v2651
        %2697 = vmatprep.subr.mxu0 0.0
        %2698 = vmatpush1.msra.mxu0 %v2650
        %2699 = vmatprep.subr.mxu0 0.0
        %2700 = vmatpush1.msra.mxu0 %v2649
        %2701 = vmatprep.subr.mxu0 0.0
        %2702 = vmatpush1.msra.mxu0 %v2648
        %2703 = vmatprep.subr.mxu0 0.0
        %2704 = vmatpush2.msra.mxu0 0.0
        %2705 = vmatprep.subr.mxu0 0.0
        %2706 = vmatpush2.msra.mxu0 0.0
        %2707 = vmatprep.subr.mxu0 0.0
        %2708 = vmatpush2.msra.mxu0 0.0
        %2709 = vmatprep.subr.mxu0 0.0
        %2710 = vmatpush2.msra.mxu0 0.0
        %2711 = vmatprep.subr.mxu0 0.0
        %2712 = vmatpush2.msra.mxu0 0.0
        %2713 = vmatprep.subr.mxu0 0.0
        %2714 = vmatpush2.msra.mxu0 0.0
        %2715 = vmatprep.subr.mxu0 0.0
        %2716 = vmatpush2.msra.mxu0 0.0
        %2717 = vmatprep.subr.mxu0 0.0
        %2718 = vmatpush2.msra.mxu0 0.0
        %2719 = vmatprep.subr.mxu0 0.0
        %2720 = vmatpush2.msra.mxu0 0.0
        %2721 = vmatprep.subr.mxu0 0.0
        %2722 = vmatpush2.msra.mxu0 0.0
        %2723 = vmatprep.subr.mxu0 0.0
        %2724 = vmatpush2.msra.mxu0 0.0
        %2725 = vmatprep.subr.mxu0 0.0
        %2726 = vmatpush2.msra.mxu0 0.0
        %2727 = vmatprep.subr.mxu0 0.0
        %2728 = vmatpush2.msra.mxu0 0.0
        %2729 = vmatprep.subr.mxu0 0.0
        %2730 = vmatpush2.msra.mxu0 0.0
        %2731 = vmatprep.subr.mxu0 0.0
        %2732 = vmatpush2.msra.mxu0 0.0
        %2733 = vmatprep.subr.mxu0 0.0
        %2734 = vmatpush2.msra.mxu0 0.0
        %2735 = vmatprep.mubr.f32.mxu0 0.0
        %2736 = vmatmul.mubr.f32.gmra.mxu0 %v2666
        %v2737 = vpop.f32.mrf.mxu0
        %v2738 = vadd.f32 0.0, %v2737
        %v2739 = vpop.f32.mrf.mxu0
        %2740 = vmatprep.mubr.f32.mxu0 0.0
        %2741 = vmatmul.mubr.f32.gmra.mxu0 %v2668
        %v2742 = vpop.f32.mrf.mxu0
        %v2743 = vadd.f32 0.0, %v2742
        %v2744 = vpop.f32.mrf.mxu0
        %2745 = vdwg.mxu0
        %v2746 = vadd.f32 %v2544, %v2738
        %v2747 = vadd.f32 %v2545, %v2743
        %v2748 = vadd.f32 %v2645, %v2746
        %v2749 = vadd.f32 %v2646, %v2747
        %s2750 = sld [smem:[#allocation2]]
        %v2751 = vstv %s2750
        %v2752 = vadd.f32 %v2748, %v2751
        %v2753 = vadd.f32 %v2749, %v2751
        %v2754 = vxor.u32 %v2752, 2147483648
        %v2755 = vxor.u32 %v2753, 2147483648
        %v2756 = vmul.f32 %v2754, 1.442695
        %v2757 = vpow.pop %v2756
        %v2758 = vmul.f32 %v2755, 1.442695
        %v2759 = vpow.pop %v2758
        %v2760 = vadd.f32 %v2757, 1.0
        %v2761 = vadd.f32 %v2759, 1.0
        %v2762 = vrcp.pop %v2760
        %v2763 = vmul.f32 1.0, %v2762
        %v2764 = vrcp.pop %v2761
        %v2765 = vmul.f32 1.0, %v2764
        %v2766 = vmul.f32 %v979, %v2763
        %v2767 = vmul.f32 %v979, %v2765
        %v2768 = vmul.f32 %v313, %v2766
        %v2769 = vmul.f32 %v314, %v2767
        %2770 = vst [vmem:[%s312] sm:$0xff] %v2768
        %2771 = vst [vmem:[%s312 + $0x8] sm:$0xff] %v2769
        %v2772 = vld [vmem:[%s326] sm:$0xff]
        %v2773 = vld [vmem:[%s326 + $0x8] sm:$0xff]
        %v2774 = vmul.f32 %v988, %v2763
        %v2775 = vmul.f32 %v988, %v2765
        %v2776 = vmul.f32 %v2772, %v2774
        %v2777 = vmul.f32 %v2773, %v2775
        %s2778 = scalar_lea.vmem %s312, 16 [#allocation8]
        %2779 = vst [vmem:[%s2778] sm:$0xff] %v2776
        %2780 = vst [vmem:[%s2778 + $0x8] sm:$0xff] %v2777
        %v2781 = vld [vmem:[%s340] sm:$0xff]
        %v2782 = vld [vmem:[%s340 + $0x8] sm:$0xff]
        %v2783 = vmul.f32 %v999, %v2763
        %v2784 = vmul.f32 %v999, %v2765
        %v2785 = vmul.f32 %v2781, %v2783
        %v2786 = vmul.f32 %v2782, %v2784
        %s2787 = scalar_lea.vmem %s312, 32 [#allocation8]
        %2788 = vst [vmem:[%s2787] sm:$0xff] %v2785
        %2789 = vst [vmem:[%s2787 + $0x8] sm:$0xff] %v2786
        %v2790 = vld [vmem:[%s354] sm:$0xff]
        %v2791 = vld [vmem:[%s354 + $0x8] sm:$0xff]
        %v2792 = vmul.f32 %v1010, %v2763
        %v2793 = vmul.f32 %v1010, %v2765
        %v2794 = vmul.f32 %v2790, %v2792
        %v2795 = vmul.f32 %v2791, %v2793
        %s2796 = scalar_lea.vmem %s312, 48 [#allocation8]
        %2797 = vst [vmem:[%s2796] sm:$0xff] %v2794
        %2798 = vst [vmem:[%s2796 + $0x8] sm:$0xff] %v2795
        %v2799 = vld [vmem:[%s368] sm:$0xff]
        %v2800 = vld [vmem:[%s368 + $0x8] sm:$0xff]
        %v2801 = vmul.f32 %v1021, %v2763
        %v2802 = vmul.f32 %v1021, %v2765
        %v2803 = vmul.f32 %v2799, %v2801
        %v2804 = vmul.f32 %v2800, %v2802
        %s2805 = scalar_lea.vmem %s312, 64 [#allocation8]
        %2806 = vst [vmem:[%s2805] sm:$0xff] %v2803
        %2807 = vst [vmem:[%s2805 + $0x8] sm:$0xff] %v2804
        %v2808 = vld [vmem:[%s382] sm:$0xff]
        %v2809 = vld [vmem:[%s382 + $0x8] sm:$0xff]
        %v2810 = vmul.f32 %v1032, %v2763
        %v2811 = vmul.f32 %v1032, %v2765
        %v2812 = vmul.f32 %v2808, %v2810
        %v2813 = vmul.f32 %v2809, %v2811
        %s2814 = scalar_lea.vmem %s312, 80 [#allocation8]
        %2815 = vst [vmem:[%s2814] sm:$0xff] %v2812
        %2816 = vst [vmem:[%s2814 + $0x8] sm:$0xff] %v2813
        %v2817 = vld [vmem:[%s396] sm:$0xff]
        %v2818 = vld [vmem:[%s396 + $0x8] sm:$0xff]
        %v2819 = vmul.f32 %v1043, %v2763
        %v2820 = vmul.f32 %v1043, %v2765
        %v2821 = vmul.f32 %v2817, %v2819
        %v2822 = vmul.f32 %v2818, %v2820
        %s2823 = scalar_lea.vmem %s312, 96 [#allocation8]
        %2824 = vst [vmem:[%s2823] sm:$0xff] %v2821
        %2825 = vst [vmem:[%s2823 + $0x8] sm:$0xff] %v2822
        %v2826 = vld [vmem:[%s410] sm:$0xff]
        %v2827 = vld [vmem:[%s410 + $0x8] sm:$0xff]
        %v2828 = vmul.f32 %v1054, %v2763
        %v2829 = vmul.f32 %v1054, %v2765
        %v2830 = vmul.f32 %v2826, %v2828
        %v2831 = vmul.f32 %v2827, %v2829
        %s2832 = scalar_lea.vmem %s312, 112 [#allocation8]
        %2833 = vst [vmem:[%s2832] sm:$0xff] %v2830
        %2834 = vst [vmem:[%s2832 + $0x8] sm:$0xff] %v2831
        %v2835 = vld [vmem:[%s424] sm:$0xff]
        %v2836 = vld [vmem:[%s424 + $0x8] sm:$0xff]
        %v2837 = vmul.f32 %v1065, %v2763
        %v2838 = vmul.f32 %v1065, %v2765
        %v2839 = vmul.f32 %v2835, %v2837
        %v2840 = vmul.f32 %v2836, %v2838
        %s2841 = scalar_lea.vmem %s312, 128 [#allocation8]
        %2842 = vst [vmem:[%s2841] sm:$0xff] %v2839
        %2843 = vst [vmem:[%s2841 + $0x8] sm:$0xff] %v2840
        %v2844 = vld [vmem:[%s438] sm:$0xff]
        %v2845 = vld [vmem:[%s438 + $0x8] sm:$0xff]
        %v2846 = vmul.f32 %v1076, %v2763
        %v2847 = vmul.f32 %v1076, %v2765
        %v2848 = vmul.f32 %v2844, %v2846
        %v2849 = vmul.f32 %v2845, %v2847
        %s2850 = scalar_lea.vmem %s312, 144 [#allocation8]
        %2851 = vst [vmem:[%s2850] sm:$0xff] %v2848
        %2852 = vst [vmem:[%s2850 + $0x8] sm:$0xff] %v2849
        %v2853 = vld [vmem:[%s452] sm:$0xff]
        %v2854 = vld [vmem:[%s452 + $0x8] sm:$0xff]
        %v2855 = vmul.f32 %v1087, %v2763
        %v2856 = vmul.f32 %v1087, %v2765
        %v2857 = vmul.f32 %v2853, %v2855
        %v2858 = vmul.f32 %v2854, %v2856
        %s2859 = scalar_lea.vmem %s312, 160 [#allocation8]
        %2860 = vst [vmem:[%s2859] sm:$0xff] %v2857
        %2861 = vst [vmem:[%s2859 + $0x8] sm:$0xff] %v2858
        %v2862 = vld [vmem:[%s466] sm:$0xff]
        %v2863 = vld [vmem:[%s466 + $0x8] sm:$0xff]
        %v2864 = vmul.f32 %v1098, %v2763
        %v2865 = vmul.f32 %v1098, %v2765
        %v2866 = vmul.f32 %v2862, %v2864
        %v2867 = vmul.f32 %v2863, %v2865
        %s2868 = scalar_lea.vmem %s312, 176 [#allocation8]
        %2869 = vst [vmem:[%s2868] sm:$0xff] %v2866
        %2870 = vst [vmem:[%s2868 + $0x8] sm:$0xff] %v2867
        %v2871 = vld [vmem:[%s480] sm:$0xff]
        %v2872 = vld [vmem:[%s480 + $0x8] sm:$0xff]
        %v2873 = vmul.f32 %v1109, %v2763
        %v2874 = vmul.f32 %v1109, %v2765
        %v2875 = vmul.f32 %v2871, %v2873
        %v2876 = vmul.f32 %v2872, %v2874
        %s2877 = scalar_lea.vmem %s312, 192 [#allocation8]
        %2878 = vst [vmem:[%s2877] sm:$0xff] %v2875
        %2879 = vst [vmem:[%s2877 + $0x8] sm:$0xff] %v2876
        %v2880 = vld [vmem:[%s494] sm:$0xff]
        %v2881 = vld [vmem:[%s494 + $0x8] sm:$0xff]
        %v2882 = vmul.f32 %v1120, %v2763
        %v2883 = vmul.f32 %v1120, %v2765
        %v2884 = vmul.f32 %v2880, %v2882
        %v2885 = vmul.f32 %v2881, %v2883
        %s2886 = scalar_lea.vmem %s312, 208 [#allocation8]
        %2887 = vst [vmem:[%s2886] sm:$0xff] %v2884
        %2888 = vst [vmem:[%s2886 + $0x8] sm:$0xff] %v2885
        %v2889 = vld [vmem:[%s508] sm:$0xff]
        %v2890 = vld [vmem:[%s508 + $0x8] sm:$0xff]
        %v2891 = vmul.f32 %v1131, %v2763
        %v2892 = vmul.f32 %v1131, %v2765
        %v2893 = vmul.f32 %v2889, %v2891
        %v2894 = vmul.f32 %v2890, %v2892
        %s2895 = scalar_lea.vmem %s312, 224 [#allocation8]
        %2896 = vst [vmem:[%s2895] sm:$0xff] %v2893
        %2897 = vst [vmem:[%s2895 + $0x8] sm:$0xff] %v2894
        %v2898 = vld [vmem:[%s522] sm:$0xff]
        %v2899 = vld [vmem:[%s522 + $0x8] sm:$0xff]
        %v2900 = vmul.f32 %v1142, %v2763
        %v2901 = vmul.f32 %v1142, %v2765
        %v2902 = vmul.f32 %v2898, %v2900
        %v2903 = vmul.f32 %v2899, %v2901
        %s2904 = scalar_lea.vmem %s312, 240 [#allocation8]
        %2905 = vst [vmem:[%s2904] sm:$0xff] %v2902
        %2906 = vst [vmem:[%s2904 + $0x8] sm:$0xff] %v2903
        %v2907 = vld [vmem:[%s536] sm:$0xff]
        %v2908 = vld [vmem:[%s536 + $0x8] sm:$0xff]
        %v2909 = vmul.f32 %v1153, %v2763
        %v2910 = vmul.f32 %v1153, %v2765
        %v2911 = vmul.f32 %v2907, %v2909
        %v2912 = vmul.f32 %v2908, %v2910
        %s2913 = scalar_lea.vmem %s312, 256 [#allocation8]
        %2914 = vst [vmem:[%s2913] sm:$0xff] %v2911
        %2915 = vst [vmem:[%s2913 + $0x8] sm:$0xff] %v2912
        %v2916 = vld [vmem:[%s550] sm:$0xff]
        %v2917 = vld [vmem:[%s550 + $0x8] sm:$0xff]
        %v2918 = vmul.f32 %v1164, %v2763
        %v2919 = vmul.f32 %v1164, %v2765
        %v2920 = vmul.f32 %v2916, %v2918
        %v2921 = vmul.f32 %v2917, %v2919
        %s2922 = scalar_lea.vmem %s312, 272 [#allocation8]
        %2923 = vst [vmem:[%s2922] sm:$0xff] %v2920
        %2924 = vst [vmem:[%s2922 + $0x8] sm:$0xff] %v2921
        %v2925 = vld [vmem:[%s564] sm:$0xff]
        %v2926 = vld [vmem:[%s564 + $0x8] sm:$0xff]
        %v2927 = vmul.f32 %v1175, %v2763
        %v2928 = vmul.f32 %v1175, %v2765
        %v2929 = vmul.f32 %v2925, %v2927
        %v2930 = vmul.f32 %v2926, %v2928
        %s2931 = scalar_lea.vmem %s312, 288 [#allocation8]
        %2932 = vst [vmem:[%s2931] sm:$0xff] %v2929
        %2933 = vst [vmem:[%s2931 + $0x8] sm:$0xff] %v2930
        %v2934 = vld [vmem:[%s578] sm:$0xff]
        %v2935 = vld [vmem:[%s578 + $0x8] sm:$0xff]
        %v2936 = vmul.f32 %v1186, %v2763
        %v2937 = vmul.f32 %v1186, %v2765
        %v2938 = vmul.f32 %v2934, %v2936
        %v2939 = vmul.f32 %v2935, %v2937
        %s2940 = scalar_lea.vmem %s312, 304 [#allocation8]
        %2941 = vst [vmem:[%s2940] sm:$0xff] %v2938
        %2942 = vst [vmem:[%s2940 + $0x8] sm:$0xff] %v2939
        %v2943 = vld [vmem:[%s592] sm:$0xff]
        %v2944 = vld [vmem:[%s592 + $0x8] sm:$0xff]
        %v2945 = vmul.f32 %v1197, %v2763
        %v2946 = vmul.f32 %v1197, %v2765
        %v2947 = vmul.f32 %v2943, %v2945
        %v2948 = vmul.f32 %v2944, %v2946
        %s2949 = scalar_lea.vmem %s312, 320 [#allocation8]
        %2950 = vst [vmem:[%s2949] sm:$0xff] %v2947
        %2951 = vst [vmem:[%s2949 + $0x8] sm:$0xff] %v2948
        %v2952 = vld [vmem:[%s606] sm:$0xff]
        %v2953 = vld [vmem:[%s606 + $0x8] sm:$0xff]
        %v2954 = vmul.f32 %v1208, %v2763
        %v2955 = vmul.f32 %v1208, %v2765
        %v2956 = vmul.f32 %v2952, %v2954
        %v2957 = vmul.f32 %v2953, %v2955
        %s2958 = scalar_lea.vmem %s312, 336 [#allocation8]
        %2959 = vst [vmem:[%s2958] sm:$0xff] %v2956
        %2960 = vst [vmem:[%s2958 + $0x8] sm:$0xff] %v2957
        %v2961 = vld [vmem:[%s620] sm:$0xff]
        %v2962 = vld [vmem:[%s620 + $0x8] sm:$0xff]
        %v2963 = vmul.f32 %v1219, %v2763
        %v2964 = vmul.f32 %v1219, %v2765
        %v2965 = vmul.f32 %v2961, %v2963
        %v2966 = vmul.f32 %v2962, %v2964
        %s2967 = scalar_lea.vmem %s312, 352 [#allocation8]
        %2968 = vst [vmem:[%s2967] sm:$0xff] %v2965
        %2969 = vst [vmem:[%s2967 + $0x8] sm:$0xff] %v2966
        %v2970 = vld [vmem:[%s634] sm:$0xff]
        %v2971 = vld [vmem:[%s634 + $0x8] sm:$0xff]
        %v2972 = vmul.f32 %v1230, %v2763
        %v2973 = vmul.f32 %v1230, %v2765
        %v2974 = vmul.f32 %v2970, %v2972
        %v2975 = vmul.f32 %v2971, %v2973
        %s2976 = scalar_lea.vmem %s312, 368 [#allocation8]
        %2977 = vst [vmem:[%s2976] sm:$0xff] %v2974
        %2978 = vst [vmem:[%s2976 + $0x8] sm:$0xff] %v2975
        %v2979 = vld [vmem:[%s648] sm:$0xff]
        %v2980 = vld [vmem:[%s648 + $0x8] sm:$0xff]
        %v2981 = vmul.f32 %v1241, %v2763
        %v2982 = vmul.f32 %v1241, %v2765
        %v2983 = vmul.f32 %v2979, %v2981
        %v2984 = vmul.f32 %v2980, %v2982
        %s2985 = scalar_lea.vmem %s312, 384 [#allocation8]
        %2986 = vst [vmem:[%s2985] sm:$0xff] %v2983
        %2987 = vst [vmem:[%s2985 + $0x8] sm:$0xff] %v2984
        %v2988 = vld [vmem:[%s662] sm:$0xff]
        %v2989 = vld [vmem:[%s662 + $0x8] sm:$0xff]
        %v2990 = vmul.f32 %v1252, %v2763
        %v2991 = vmul.f32 %v1252, %v2765
        %v2992 = vmul.f32 %v2988, %v2990
        %v2993 = vmul.f32 %v2989, %v2991
        %s2994 = scalar_lea.vmem %s312, 400 [#allocation8]
        %2995 = vst [vmem:[%s2994] sm:$0xff] %v2992
        %2996 = vst [vmem:[%s2994 + $0x8] sm:$0xff] %v2993
        %v2997 = vld [vmem:[%s676] sm:$0xff]
        %v2998 = vld [vmem:[%s676 + $0x8] sm:$0xff]
        %v2999 = vmul.f32 %v1263, %v2763
        %v3000 = vmul.f32 %v1263, %v2765
        %v3001 = vmul.f32 %v2997, %v2999
        %v3002 = vmul.f32 %v2998, %v3000
        %s3003 = scalar_lea.vmem %s312, 416 [#allocation8]
        %3004 = vst [vmem:[%s3003] sm:$0xff] %v3001
        %3005 = vst [vmem:[%s3003 + $0x8] sm:$0xff] %v3002
        %v3006 = vld [vmem:[%s690] sm:$0xff]
        %v3007 = vld [vmem:[%s690 + $0x8] sm:$0xff]
        %v3008 = vmul.f32 %v1274, %v2763
        %v3009 = vmul.f32 %v1274, %v2765
        %v3010 = vmul.f32 %v3006, %v3008
        %v3011 = vmul.f32 %v3007, %v3009
        %s3012 = scalar_lea.vmem %s312, 432 [#allocation8]
        %3013 = vst [vmem:[%s3012] sm:$0xff] %v3010
        %3014 = vst [vmem:[%s3012 + $0x8] sm:$0xff] %v3011
        %v3015 = vld [vmem:[%s704] sm:$0xff]
        %v3016 = vld [vmem:[%s704 + $0x8] sm:$0xff]
        %v3017 = vmul.f32 %v1285, %v2763
        %v3018 = vmul.f32 %v1285, %v2765
        %v3019 = vmul.f32 %v3015, %v3017
        %v3020 = vmul.f32 %v3016, %v3018
        %s3021 = scalar_lea.vmem %s312, 448 [#allocation8]
        %3022 = vst [vmem:[%s3021] sm:$0xff] %v3019
        %3023 = vst [vmem:[%s3021 + $0x8] sm:$0xff] %v3020
        %v3024 = vld [vmem:[%s718] sm:$0xff]
        %v3025 = vld [vmem:[%s718 + $0x8] sm:$0xff]
        %v3026 = vmul.f32 %v1296, %v2763
        %v3027 = vmul.f32 %v1296, %v2765
        %v3028 = vmul.f32 %v3024, %v3026
        %v3029 = vmul.f32 %v3025, %v3027
        %s3030 = scalar_lea.vmem %s312, 464 [#allocation8]
        %3031 = vst [vmem:[%s3030] sm:$0xff] %v3028
        %3032 = vst [vmem:[%s3030 + $0x8] sm:$0xff] %v3029
        %v3033 = vld [vmem:[%s732] sm:$0xff]
        %v3034 = vld [vmem:[%s732 + $0x8] sm:$0xff]
        %v3035 = vmul.f32 %v1307, %v2763
        %v3036 = vmul.f32 %v1307, %v2765
        %v3037 = vmul.f32 %v3033, %v3035
        %v3038 = vmul.f32 %v3034, %v3036
        %s3039 = scalar_lea.vmem %s312, 480 [#allocation8]
        %3040 = vst [vmem:[%s3039] sm:$0xff] %v3037
        %3041 = vst [vmem:[%s3039 + $0x8] sm:$0xff] %v3038
        %v3042 = vld [vmem:[%s746] sm:$0xff]
        %v3043 = vld [vmem:[%s746 + $0x8] sm:$0xff]
        %v3044 = vmul.f32 %v1318, %v2763
        %v3045 = vmul.f32 %v1318, %v2765
        %v3046 = vmul.f32 %v3042, %v3044
        %v3047 = vmul.f32 %v3043, %v3045
        %s3048 = scalar_lea.vmem %s312, 496 [#allocation8]
        %3049 = vst [vmem:[%s3048] sm:$0xff] %v3046
        %3050 = vst [vmem:[%s3048 + $0x8] sm:$0xff] %v3047
        %s3051 = sand.u32 %s186, 1
        %s3052 = scalar_lea.sflag [#allocation5], %s3051
        %s3053 = sand.u32 %s186, 1
        %s3054 = smul.addr %s3053, 512
        %s3055 = scalar_lea.vmem [#allocation8], %s3054
        // Predicated region
        $region57: #{tpu_custom_call.1} parent=47 // pred_check
          %p3056 = pneg %p196
        $region58: #{tpu_custom_call.1} parent=47 // pred_check_branch
          %3058 = sbr.rel (%p3056) target = $region60
        $region59: #{tpu_custom_call.1} parent=47 // pred_region
          %s3060 = ssub.s32 8192, 8192
          %3061 = vsyncadd %s3052, %s3060
          %s3062 = smul.addr %s26, 64
          %s3063 = smul.addr %s3062, 128
          %s3064 = scalar_lea.hbm %s7, %s3063
          %s3065 = sshll.u32 %s3055, 4
          %s3066 = int_to_ptr.vmem [resolvable:$true] %s3065
          %3071 = dma.vmem_to_hbm [thread:$0]  %s3066, 8192, %s3064, %s3052, 128, 128, 8
        $region60: #{tpu_custom_call.1} parent=47 // pred_fallthru
          _
      $region48: #{tpu_custom_call.1} parent=5 // pred_fallthru
        _
      %p3072 = scmp.le.s32.totalorder 2, %s21
      // Predicated region
      $region61: #{tpu_custom_call.1} parent=5 // pred_check
        %p3073 = pneg %p3072
      $region62: #{tpu_custom_call.1} parent=5 // pred_check_branch
        %3075 = sbr.rel (%p3073) target = $region64
      $region63: #{tpu_custom_call.1} parent=5 // pred_region
        %s3076 = ssub.s32 %s21, 2
        // Predicated region
        $region65: #{tpu_custom_call.1} parent=63 // pred_check
          %p3077 = pneg %p202
        $region66: #{tpu_custom_call.1} parent=63 // pred_check_branch
          %3079 = sbr.rel (%p3077) target = $region68
        $region67: #{tpu_custom_call.1} parent=63 // pred_region
          %s3080 = sand.u32 %s187, 1
          %s3081 = scalar_lea.sflag [#allocation5], %s3080
          %s3082 = sand.u32 %s187, 1
          %s3083 = smul.addr %s3082, 512
          %s3084 = scalar_lea.vmem [#allocation8], %s3083
          %3085 = dma.done %s3081, 8192
        $region68: #{tpu_custom_call.1} parent=63 // pred_fallthru
          _
      $region64: #{tpu_custom_call.1} parent=5 // pred_fallthru
        _
    $region6: #{tpu_custom_call.1} parent=1 // loop_footer
      %s25 = sadd.s32 1, %s21
    $region7: #{tpu_custom_call.1} parent=1 // loop_footer_branch
      %20 = sbr.rel target = $region3
    $region8: #{tpu_custom_call.1} parent=1 // loop_exit
      _
    %3086 = vsyncpa [#allocation4], 1
    %s3087 = scalar_lea.sflag [#allocation4], 1
    %3088 = vsyncpa %s3087, 1
    %3089 = vsyncpa [#allocation7], 1
    %3090 = vsyncpa [#allocation5], 1
    %s3091 = scalar_lea.sflag [#allocation5], 1
    %3092 = vsyncpa %s3091, 1

</llo_original>
